<compile_context>
chip_gen: v7x
topology: tpu7x:2x2x1
jax: 0.10.0
libtpu: 0.0.40
codegen_flags: <defaults>
</compile_context>

<pallas_src>
import functools

import jax
import jax.numpy as jnp
from jax import lax
from jax.experimental import pallas as pl
from jax.experimental.pallas import tpu as pltpu


def _slab_layout(H, O, N, C, NO):
  """Row/column offsets of every constant inside the packed const slab."""
  H3, O3 = 3 * H, 3 * O
  c_w5u = H3                      # fc_eq5_u weight
  c_epi = c_w5u + H               # fused epilogue weight
  c_adj = c_epi + O3              # stacked [Ain; Aout]
  c_mask = c_adj + N              # relation/object mask
  width = c_mask + NO
  bias_row = H3                   # all bias rows live on this sublane row
  # no-overlap checks (weights above use rows < bias_row in their columns)
  assert 2 * N <= bias_row and 2 * H <= bias_row and C <= bias_row
  return dict(c_w5u=c_w5u, c_epi=c_epi, c_adj=c_adj, c_mask=c_mask,
              bias_row=bias_row,
              rows=((bias_row + 1 + 7) // 8) * 8,
              cols=((width + 127) // 128) * 128)


def ggnn_kernel(x_ref, cs_ref, out_ref, *, time_step, num_classes, num_objects,
                nodes_per_graph, graphs_per_block, hidden, out_ch):
  f32 = jnp.float32
  C, NO, N = num_classes, num_objects, nodes_per_graph
  H, O, G = hidden, out_ch, graphs_per_block
  M, H3, O3 = G * N, 3 * hidden, 3 * out_ch
  L = _slab_layout(H, O, N, C, NO)
  br = L['bias_row']

  x = x_ref[...]                                              # (M, H)

  # ---- static slices of the packed constant slab (layout: prepare_consts) ---
  w_big = cs_ref[0:H3, 0:H3]                                  # (3H,3H) gates
  w5u   = cs_ref[0:H, L['c_w5u']:L['c_w5u'] + H]              # (H, H)
  w_epi = cs_ref[0:2 * H, L['c_epi']:L['c_epi'] + O3]         # (2H, 3O)
  a_stk = cs_ref[0:2 * N, L['c_adj']:L['c_adj'] + N]          # (2N, N)
  mask  = cs_ref[0:C, L['c_mask']:L['c_mask'] + NO]           # (C, NO)
  bg    = cs_ref[br:br + 1, 0:H3]                             # (1, 3H)
  b_epi = cs_ref[br:br + 1, L['c_epi']:L['c_epi'] + O3]       # (1, 3O)
  wr2   = cs_ref[br:br + 1, L['c_adj']:L['c_adj'] + O]        # (1, O)
  br2   = cs_ref[br:br + 1, L['c_adj'] + O:L['c_adj'] + O + 1]  # (1, 1)

  dot = lambda a_, b_: jnp.dot(a_, b_, preferred_element_type=f32)

  # Hoist broadcasts out of the unrolled loop (broadcast_in_dim is not CSE'd).
  bg_b = jnp.broadcast_to(bg, (M, H3))
  a_b = jnp.broadcast_to(a_stk, (G, 2 * N, N))

  # ---- GRU-style message passing (time_step static -> unrolled) -------------
  h = x
  for _ in range(time_step):
    h3 = h.reshape(G, N, H)
    hh = jnp.einsum('gij,gjh->gih', a_b, h3,
                    preferred_element_type=f32)               # (G, 2N, H)
    cat = jnp.concatenate(
        [hh[:, 0:N].reshape(M, H), hh[:, N:2 * N].reshape(M, H), h], axis=1)
    gates = dot(cat, w_big) + bg_b                            # (M, 3H), 1 push
    z = jax.nn.sigmoid(gates[:, 0:H])
    # NOTE: faithful to the PyTorch code, rv reuses fc_eq3_u (not fc_eq4_u).
    r = jax.nn.sigmoid(gates[:, H:2 * H])
    hv = jnp.tanh(gates[:, 2 * H:H3] + dot(r * h, w5u))
    h = (1.0 - z) * h + z * hv

  # ---- epilogue: one fused matmul for fc_output / reason_fc_x / reason_fc_y -
  epi = jnp.tanh(dot(jnp.concatenate([h, x], axis=1), w_epi)
                 + jnp.broadcast_to(b_epi, (M, O3)))          # (M, 3O)
  act3 = epi.reshape(G, N, O3)
  o3  = act3[:, :, 0:O]                                       # (G, N, O)
  fcx = act3[:, 0:C, O:2 * O]                                 # (G, C, O)  relations
  fcy = act3[:, C:N, 2 * O:O3]                                # (G, NO, O) objects

  # reason_fc2 over (fcx * fcy): score[g,c,j] = sum_o fcx*wr2*fcy + br2
  score = lax.dot_general(fcx * wr2, fcy, (((2,), (2,)), ((0,), (0,))),
                          preferred_element_type=f32) + br2   # (G, C, NO)
  rfc2 = jax.nn.sigmoid(score) * mask[None]                   # (G, C, NO)

  routput = o3[:, 0:C]                                        # (G, C, O)
  oout = o3[:, C:N]                                           # (G, NO, O)
  weighted = oout[:, None, :, :] * rfc2[:, :, :, None]        # (G, C, NO, O)
  # Lane-dense output row per (graph, class): [routput | w_0 | ... | w_{NO-1}]
  parts = [routput] + [weighted[:, :, j, :] for j in range(NO)]
  out_ref[...] = jnp.concatenate(parts, axis=2)               # (G, C, (NO+1)*O)


def prepare_consts(P, Ain, Aout, mask):
  """One-time host-side packing of weights/biases/adjacency/mask into one slab."""
  f32 = jnp.float32
  H = P['W3u'].shape[0]
  O = P['Wout'].shape[0]
  N = Ain.shape[0]
  C, NO = mask.shape
  H3, O3 = 3 * H, 3 * O
  L = _slab_layout(H, O, N, C, NO)
  z = lambda *s: jnp.zeros(s, f32)

  W3wT, W4wT, W5wT, WoutT = P['W3w'].T, P['W4w'].T, P['W5w'].T, P['Wout'].T
  # Fused gate weight: rows stack [av_in | av_out | h], cols stack [z | r | hcand].
  w_in3  = jnp.concatenate([W3wT[:H], W4wT[:H], W5wT[:H]], axis=1)
  w_out3 = jnp.concatenate([W3wT[H:], W4wT[H:], W5wT[H:]], axis=1)
  w_h3   = jnp.concatenate([P['W3u'].T, P['W3u'].T, z(H, H)], axis=1)  # rv quirk
  w_big  = jnp.concatenate([w_in3, w_out3, w_h3], axis=0)              # (3H, 3H)

  # Fused epilogue weight: rows [h | x], cols [fc_output | reason_fc_x | reason_fc_y].
  w_epi = jnp.concatenate(
      [jnp.concatenate([WoutT[:H], P['Wrx'].T, P['Wry'].T], axis=1),
       jnp.concatenate([WoutT[H:], z(H, 2 * O)], axis=1)], axis=0)     # (2H, 3O)

  bg = jnp.concatenate([P['b3w'] + P['b3u'],
                        P['b4w'] + P['b3u'],        # rv reuses fc_eq3_u bias
                        P['b5w'] + P['b5u']])                           # (3H,)
  b_epi = jnp.concatenate([P['bout'], P['brx'], P['bry']])              # (3O,)
  a_stk = jnp.concatenate([Ain, Aout], axis=0)                          # (2N, N)

  slab = jnp.zeros((L['rows'], L['cols']), f32)
  slab = slab.at[0:H3, 0:H3].set(w_big.astype(f32))
  slab = slab.at[0:H, L['c_w5u']:L['c_w5u'] + H].set(P['W5u'].T.astype(f32))
  slab = slab.at[0:2 * H, L['c_epi']:L['c_epi'] + O3].set(w_epi.astype(f32))
  slab = slab.at[0:2 * N, L['c_adj']:L['c_adj'] + N].set(a_stk.astype(f32))
  slab = slab.at[0:C, L['c_mask']:L['c_mask'] + NO].set(mask.astype(f32))
  br = L['bias_row']
  slab = slab.at[br, 0:H3].set(bg.astype(f32))
  slab = slab.at[br, L['c_epi']:L['c_epi'] + O3].set(b_epi.astype(f32))
  slab = slab.at[br, L['c_adj']:L['c_adj'] + O].set(P['Wr2'].reshape(-1).astype(f32))
  slab = slab.at[br, L['c_adj'] + O].set(P['br2'].reshape(-1)[0].astype(f32))
  return dict(slab=slab, H=int(H), O=int(O), N=int(N), C=int(C), NO=int(NO))


def ggnn_forward(x, consts, *, time_step, max_rows_per_block=512):
  B = x.shape[0]
  H, O, N, C, NO = consts['H'], consts['O'], consts['N'], consts['C'], consts['NO']
  assert N % 8 == 0, "nodes-per-graph must be a multiple of 8 for sublane tiling"

  # Fold as many graphs as possible into one grid step (grid=1 at small B — the
  # grid is a serial loop on single-TC parts); cap folded rows so the unrolled
  # GRU loop's live (M, 3H) f32 values stay inside the vreg budget.
  divisors = [d for d in range(1, B + 1)
              if B % d == 0 and d * N <= max_rows_per_block]
  G = max(divisors) if divisors else 1
  num_blocks = B // G
  M = G * N
  out_w = (NO + 1) * O

  x_flat = x.reshape(B * N, H).astype(jnp.float32)
  slab = consts['slab']

  kernel = functools.partial(
      ggnn_kernel, time_step=time_step, num_classes=C, num_objects=NO,
      nodes_per_graph=N, graphs_per_block=G, hidden=H, out_ch=O)

  flops = 2 * (time_step * (B * 2 * N * N * H        # adjacency aggregation
                            + B * N * 9 * H * H      # fused gate matmul
                            + B * N * H * H)         # (r*h) @ W5u
               + B * N * 2 * H * 3 * O               # fused epilogue matmul
               + B * C * NO * O)                     # relation scores
  transcendentals = time_step * 3 * B * N * H + 3 * B * N * O + B * C * NO
  bytes_accessed = 4 * (x_flat.size + slab.size + B * C * out_w)

  out_dense = pl.pallas_call(
      kernel,
      out_shape=jax.ShapeDtypeStruct((B, C, out_w), jnp.float32),
      grid_spec=pltpu.PrefetchScalarGridSpec(
          num_scalar_prefetch=0,
          grid=(num_blocks,),
          in_specs=[pl.BlockSpec((M, H), lambda g: (g, 0)),
                    pl.BlockSpec(slab.shape, lambda g: (0, 0))],
          out_specs=pl.BlockSpec((G, C, out_w), lambda g: (g, 0, 0))),
      compiler_params=pltpu.CompilerParams(
          dimension_semantics=("parallel",)),
      cost_estimate=pl.CostEstimate(flops=flops,
                                    transcendentals=transcendentals,
                                    bytes_accessed=bytes_accessed),
  )(x_flat, slab)
  return out_dense.reshape(B, C, NO + 1, O)


def ggnn_reference(x, P, Ain, Aout, mask, *, num_classes, time_step):
  """Pure-JAX replica of the PyTorch forward (for correctness check)."""
  B = x.shape[0]
  N = Ain.shape[0]
  H = P['W3u'].shape[0]
  O = P['Wout'].shape[0]
  C = num_classes
  NO = N - C
  inp = x.reshape(-1, H)
  nodes = inp.reshape(B, N, H)
  fan = inp
  for _ in range(time_step):
    av = jnp.concatenate(
        [jnp.einsum('ij,bjh->bih', Ain, nodes),
         jnp.einsum('ij,bjh->bih', Aout, nodes)], axis=2).reshape(B * N, 2 * H)
    fan = nodes.reshape(B * N, H)
    zv = jax.nn.sigmoid(av @ P['W3w'].T + P['b3w'] + fan @ P['W3u'].T + P['b3u'])
    rv = jax.nn.sigmoid(av @ P['W4w'].T + P['b4w'] + fan @ P['W3u'].T + P['b3u'])
    hv = jnp.tanh(av @ P['W5w'].T + P['b5w'] + (rv * fan) @ P['W5u'].T + P['b5u'])
    fan = (1 - zv) * fan + zv * hv
    nodes = fan.reshape(B, N, H)
  out = jnp.tanh(jnp.concatenate([fan, inp], axis=1) @ P['Wout'].T + P['bout'])
  fan3 = fan.reshape(B, N, H)
  rnode = fan3[:, :C].reshape(-1, H)
  rfcx = jnp.tanh(rnode @ P['Wrx'].T + P['brx'])
  rnode_en = jnp.tile(rfcx.reshape(B * C, 1, O), (1, NO, 1))
  onode = fan3[:, C:].reshape(-1, H)
  rfcy = jnp.tanh(onode @ P['Wry'].T + P['bry'])
  onode_en = jnp.tile(rfcy.reshape(B, 1, NO, O), (1, C, 1, 1))
  rocat = rnode_en.reshape(-1, O) * onode_en.reshape(-1, O)
  rfc2 = jax.nn.sigmoid(rocat @ P['Wr2'].T + P['br2'])
  mask_en = jnp.tile(mask[None], (B, 1, 1)).reshape(-1, 1)
  rfc2 = rfc2 * mask_en
  out3 = out.reshape(B, N, O)
  rout = out3[:, :C]
  oout = out3[:, C:]
  oout_en = jnp.tile(oout.reshape(B, 1, NO * O), (1, C, 1)).reshape(-1, O)
  w_oout = (oout_en * rfc2).reshape(B, C, NO, O)
  return jnp.concatenate([rout.reshape(B, C, 1, O), w_oout], axis=2)


def init_params(key, H, O):
  """Deterministic synthetic weights in torch nn.Linear layout (out, in)."""
  ks = jax.random.split(key, 16)
  n = lambda k, shape, s=0.1: jax.random.normal(k, shape, jnp.float32) * s
  return dict(
      W3w=n(ks[0], (H, 2 * H)), b3w=n(ks[1], (H,), 0.05),
      W3u=n(ks[2], (H, H)),     b3u=n(ks[3], (H,), 0.05),
      W4w=n(ks[4], (H, 2 * H)), b4w=n(ks[5], (H,), 0.05),
      W5w=n(ks[6], (H, 2 * H)), b5w=n(ks[7], (H,), 0.05),
      W5u=n(ks[8], (H, H)),     b5u=n(ks[9], (H,), 0.05),
      Wout=n(ks[10], (O, 2 * H)), bout=n(ks[11], (O,), 0.05),
      Wrx=n(ks[12], (O, H), 0.01), brx=jnp.zeros((O,), jnp.float32),
      Wry=n(ks[13], (O, H), 0.01), bry=jnp.zeros((O,), jnp.float32),
      Wr2=n(ks[14], (1, O), 0.1),  br2=jnp.zeros((1,), jnp.float32),
  )


if __name__ == "__main__":
  # Small shapes consistent with the module's semantics:
  #   hidden=16, output=8, num_classes=3, num_objects=13 -> node_num=16
  B, H, O, C, NO, T = 2, 16, 8, 3, 13, 5
  N = C + NO

  key = jax.random.PRNGKey(0)
  kx, kmat, kp = jax.random.split(key, 3)
  P = init_params(kp, H, O)

  # Synthetic adjacency (replaces np.load in load_nodes):
  u = jax.random.uniform(kmat, (C, NO), jnp.float32)
  mat = jnp.where(u > 0.5, u, 0.0)                          # sparse-ish weights
  Ain = jnp.zeros((N, N), jnp.float32).at[:C, C:].set(mat)  # relationship -> object
  Aout = jnp.zeros((N, N), jnp.float32).at[C:, :C].set(mat.T)
  mask = (mat > 0).astype(jnp.float32)                      # (C, NO)

  consts = prepare_consts(P, Ain, Aout, mask)   # one-time constant packing

  x = jax.random.normal(kx, (B, N * H), jnp.float32)        # flat graph input

  out = ggnn_forward(x, consts, time_step=T)
  out = jax.block_until_ready(out)

  ref = ggnn_reference(x, P, Ain, Aout, mask, num_classes=C, time_step=T)
  assert out.shape == (B, C, NO + 1, O), out.shape
  assert jnp.allclose(out, ref, atol=1e-4, rtol=1e-4), \
      float(jnp.max(jnp.abs(out - ref)))
  print("KERNEL_OK")
</pallas_src>

<mosaic_0001>
module attributes {stable_mosaic.version = 11 : i64} {
  func.func @ggnn_kernel(%arg0: i32, %arg1: memref<32x16xf32, #tpu.memory_space<vmem>>, %arg2: memref<56x128xf32, #tpu.memory_space<vmem>>, %arg3: memref<2x3x112xf32, #tpu.memory_space<vmem>>) attributes {dimension_semantics = [#tpu.dimension_semantics<parallel>], iteration_bounds = array<i64: 1>, scalar_prefetch = 0 : i64, scratch_operands = 0 : i64, tpu.core_type = #tpu.core_type<tc>, window_params = [{transform_indices = @transform_0, window_bounds = array<i64: 32, 16>}, {pipeline_mode = #tpu.pipeline_mode<synchronous>, transform_indices = @transform_1, window_bounds = array<i64: 56, 128>}, {transform_indices = @transform_2, window_bounds = array<i64: 2, 3, 112>}]} {
    %c0 = arith.constant 0 : index
    %c0_0 = arith.constant 0 : index
    %0 = vector.load %arg1[%c0, %c0_0] : memref<32x16xf32, #tpu.memory_space<vmem>>, vector<32x16xf32>
    %c0_1 = arith.constant 0 : index
    %c0_2 = arith.constant 0 : index
    %1 = vector.load %arg2[%c0_1, %c0_2] : memref<56x128xf32, #tpu.memory_space<vmem>>, vector<48x48xf32>
    %c0_3 = arith.constant 0 : index
    %c48 = arith.constant 48 : index
    %2 = vector.load %arg2[%c0_3, %c48] : memref<56x128xf32, #tpu.memory_space<vmem>>, vector<16x16xf32>
    %c0_4 = arith.constant 0 : index
    %c64 = arith.constant 64 : index
    %3 = vector.load %arg2[%c0_4, %c64] : memref<56x128xf32, #tpu.memory_space<vmem>>, vector<32x24xf32>
    %c0_5 = arith.constant 0 : index
    %c88 = arith.constant 88 : index
    %4 = vector.load %arg2[%c0_5, %c88] : memref<56x128xf32, #tpu.memory_space<vmem>>, vector<32x16xf32>
    %c0_6 = arith.constant 0 : index
    %c104 = arith.constant 104 : index
    %5 = vector.load %arg2[%c0_6, %c104] : memref<56x128xf32, #tpu.memory_space<vmem>>, vector<3x13xf32>
    %c48_7 = arith.constant 48 : index
    %c0_8 = arith.constant 0 : index
    %6 = vector.load %arg2[%c48_7, %c0_8] : memref<56x128xf32, #tpu.memory_space<vmem>>, vector<1x48xf32>
    %c48_9 = arith.constant 48 : index
    %c64_10 = arith.constant 64 : index
    %7 = vector.load %arg2[%c48_9, %c64_10] : memref<56x128xf32, #tpu.memory_space<vmem>>, vector<1x24xf32>
    %c48_11 = arith.constant 48 : index
    %c88_12 = arith.constant 88 : index
    %8 = vector.load %arg2[%c48_11, %c88_12] : memref<56x128xf32, #tpu.memory_space<vmem>>, vector<1x8xf32>
    %c48_13 = arith.constant 48 : index
    %c96 = arith.constant 96 : index
    %9 = vector.load %arg2[%c48_13, %c96] : memref<56x128xf32, #tpu.memory_space<vmem>>, vector<1x1xf32>
    %10 = vector.shape_cast %6 : vector<1x48xf32> to vector<1x48xf32>
    %11 = vector.broadcast %10 : vector<1x48xf32> to vector<32x48xf32>
    %12 = vector.shape_cast %4 : vector<32x16xf32> to vector<1x32x16xf32>
    %13 = vector.broadcast %12 : vector<1x32x16xf32> to vector<2x32x16xf32>
    %14 = vector.shape_cast %0 : vector<32x16xf32> to vector<2x16x16xf32>
    "tpu.trace_start"() <{level = 10 : i32, message = "gij,gjh->gih"}> : () -> ()
    %cst = arith.constant dense<0.000000e+00> : vector<2x32x16xf32>
    %15 = tpu.matmul %13, %14, %cst {dimension_numbers = #tpu.dot_dimension_numbers<[2], [1], [1], [2], [0, 0, 0, 1, 1, 2], [0], [0]>} : vector<2x32x16xf32>, vector<2x16x16xf32>, vector<2x32x16xf32> -> vector<2x32x16xf32>
    "tpu.trace_stop"() : () -> ()
    %16 = vector.extract_strided_slice %15 {offsets = [0, 0, 0], sizes = [2, 16, 16], strides = [1, 1, 1]} : vector<2x32x16xf32> to vector<2x16x16xf32>
    %17 = vector.shape_cast %16 : vector<2x16x16xf32> to vector<32x16xf32>
    %18 = vector.extract_strided_slice %15 {offsets = [0, 16, 0], sizes = [2, 16, 16], strides = [1, 1, 1]} : vector<2x32x16xf32> to vector<2x16x16xf32>
    %19 = vector.shape_cast %18 : vector<2x16x16xf32> to vector<32x16xf32>
    %20 = tpu.concatenate %17, %19, %0 in 1 : vector<32x16xf32>, vector<32x16xf32>, vector<32x16xf32> -> vector<32x48xf32>
    %cst_14 = arith.constant dense<0.000000e+00> : vector<32x48xf32>
    %21 = tpu.matmul %20, %1, %cst_14 {dimension_numbers = #tpu.dot_dimension_numbers<[1], [0], [0], [1], [0, 0, 1, 1], [], []>} : vector<32x48xf32>, vector<48x48xf32>, vector<32x48xf32> -> vector<32x48xf32>
    %22 = arith.addf %21, %11 : vector<32x48xf32>
    %23 = vector.extract_strided_slice %22 {offsets = [0, 0], sizes = [32, 16], strides = [1, 1]} : vector<32x48xf32> to vector<32x16xf32>
    %24 = arith.negf %23 : vector<32x16xf32>
    %25 = math.exp %24 : vector<32x16xf32>
    %cst_15 = arith.constant 1.000000e+00 : f32
    %26 = vector.broadcast %cst_15 : f32 to vector<32x16xf32>
    %27 = arith.addf %26, %25 : vector<32x16xf32>
    %28 = arith.divf %26, %27 : vector<32x16xf32>
    %29 = vector.extract_strided_slice %22 {offsets = [0, 16], sizes = [32, 16], strides = [1, 1]} : vector<32x48xf32> to vector<32x16xf32>
    %30 = arith.negf %29 : vector<32x16xf32>
    %31 = math.exp %30 : vector<32x16xf32>
    %cst_16 = arith.constant 1.000000e+00 : f32
    %32 = vector.broadcast %cst_16 : f32 to vector<32x16xf32>
    %33 = arith.addf %32, %31 : vector<32x16xf32>
    %34 = arith.divf %32, %33 : vector<32x16xf32>
    %35 = vector.extract_strided_slice %22 {offsets = [0, 32], sizes = [32, 16], strides = [1, 1]} : vector<32x48xf32> to vector<32x16xf32>
    %36 = arith.mulf %34, %0 : vector<32x16xf32>
    %cst_17 = arith.constant dense<0.000000e+00> : vector<32x16xf32>
    %37 = tpu.matmul %36, %2, %cst_17 {dimension_numbers = #tpu.dot_dimension_numbers<[1], [0], [0], [1], [0, 0, 1, 1], [], []>} : vector<32x16xf32>, vector<16x16xf32>, vector<32x16xf32> -> vector<32x16xf32>
    %38 = arith.addf %35, %37 : vector<32x16xf32>
    %39 = math.tanh %38 : vector<32x16xf32>
    %cst_18 = arith.constant 1.000000e+00 : f32
    %40 = vector.broadcast %cst_18 : f32 to vector<32x16xf32>
    %41 = arith.subf %40, %28 : vector<32x16xf32>
    %42 = arith.mulf %41, %0 : vector<32x16xf32>
    %43 = arith.mulf %28, %39 : vector<32x16xf32>
    %44 = arith.addf %42, %43 : vector<32x16xf32>
    %45 = vector.shape_cast %44 : vector<32x16xf32> to vector<2x16x16xf32>
    "tpu.trace_start"() <{level = 10 : i32, message = "gij,gjh->gih"}> : () -> ()
    %cst_19 = arith.constant dense<0.000000e+00> : vector<2x32x16xf32>
    %46 = tpu.matmul %13, %45, %cst_19 {dimension_numbers = #tpu.dot_dimension_numbers<[2], [1], [1], [2], [0, 0, 0, 1, 1, 2], [0], [0]>} : vector<2x32x16xf32>, vector<2x16x16xf32>, vector<2x32x16xf32> -> vector<2x32x16xf32>
    "tpu.trace_stop"() : () -> ()
    %47 = vector.extract_strided_slice %46 {offsets = [0, 0, 0], sizes = [2, 16, 16], strides = [1, 1, 1]} : vector<2x32x16xf32> to vector<2x16x16xf32>
    %48 = vector.shape_cast %47 : vector<2x16x16xf32> to vector<32x16xf32>
    %49 = vector.extract_strided_slice %46 {offsets = [0, 16, 0], sizes = [2, 16, 16], strides = [1, 1, 1]} : vector<2x32x16xf32> to vector<2x16x16xf32>
    %50 = vector.shape_cast %49 : vector<2x16x16xf32> to vector<32x16xf32>
    %51 = tpu.concatenate %48, %50, %44 in 1 : vector<32x16xf32>, vector<32x16xf32>, vector<32x16xf32> -> vector<32x48xf32>
    %cst_20 = arith.constant dense<0.000000e+00> : vector<32x48xf32>
    %52 = tpu.matmul %51, %1, %cst_20 {dimension_numbers = #tpu.dot_dimension_numbers<[1], [0], [0], [1], [0, 0, 1, 1], [], []>} : vector<32x48xf32>, vector<48x48xf32>, vector<32x48xf32> -> vector<32x48xf32>
    %53 = arith.addf %52, %11 : vector<32x48xf32>
    %54 = vector.extract_strided_slice %53 {offsets = [0, 0], sizes = [32, 16], strides = [1, 1]} : vector<32x48xf32> to vector<32x16xf32>
    %55 = arith.negf %54 : vector<32x16xf32>
    %56 = math.exp %55 : vector<32x16xf32>
    %cst_21 = arith.constant 1.000000e+00 : f32
    %57 = vector.broadcast %cst_21 : f32 to vector<32x16xf32>
    %58 = arith.addf %57, %56 : vector<32x16xf32>
    %59 = arith.divf %57, %58 : vector<32x16xf32>
    %60 = vector.extract_strided_slice %53 {offsets = [0, 16], sizes = [32, 16], strides = [1, 1]} : vector<32x48xf32> to vector<32x16xf32>
    %61 = arith.negf %60 : vector<32x16xf32>
    %62 = math.exp %61 : vector<32x16xf32>
    %cst_22 = arith.constant 1.000000e+00 : f32
    %63 = vector.broadcast %cst_22 : f32 to vector<32x16xf32>
    %64 = arith.addf %63, %62 : vector<32x16xf32>
    %65 = arith.divf %63, %64 : vector<32x16xf32>
    %66 = vector.extract_strided_slice %53 {offsets = [0, 32], sizes = [32, 16], strides = [1, 1]} : vector<32x48xf32> to vector<32x16xf32>
    %67 = arith.mulf %65, %44 : vector<32x16xf32>
    %cst_23 = arith.constant dense<0.000000e+00> : vector<32x16xf32>
    %68 = tpu.matmul %67, %2, %cst_23 {dimension_numbers = #tpu.dot_dimension_numbers<[1], [0], [0], [1], [0, 0, 1, 1], [], []>} : vector<32x16xf32>, vector<16x16xf32>, vector<32x16xf32> -> vector<32x16xf32>
    %69 = arith.addf %66, %68 : vector<32x16xf32>
    %70 = math.tanh %69 : vector<32x16xf32>
    %cst_24 = arith.constant 1.000000e+00 : f32
    %71 = vector.broadcast %cst_24 : f32 to vector<32x16xf32>
    %72 = arith.subf %71, %59 : vector<32x16xf32>
    %73 = arith.mulf %72, %44 : vector<32x16xf32>
    %74 = arith.mulf %59, %70 : vector<32x16xf32>
    %75 = arith.addf %73, %74 : vector<32x16xf32>
    %76 = vector.shape_cast %75 : vector<32x16xf32> to vector<2x16x16xf32>
    "tpu.trace_start"() <{level = 10 : i32, message = "gij,gjh->gih"}> : () -> ()
    %cst_25 = arith.constant dense<0.000000e+00> : vector<2x32x16xf32>
    %77 = tpu.matmul %13, %76, %cst_25 {dimension_numbers = #tpu.dot_dimension_numbers<[2], [1], [1], [2], [0, 0, 0, 1, 1, 2], [0], [0]>} : vector<2x32x16xf32>, vector<2x16x16xf32>, vector<2x32x16xf32> -> vector<2x32x16xf32>
    "tpu.trace_stop"() : () -> ()
    %78 = vector.extract_strided_slice %77 {offsets = [0, 0, 0], sizes = [2, 16, 16], strides = [1, 1, 1]} : vector<2x32x16xf32> to vector<2x16x16xf32>
    %79 = vector.shape_cast %78 : vector<2x16x16xf32> to vector<32x16xf32>
    %80 = vector.extract_strided_slice %77 {offsets = [0, 16, 0], sizes = [2, 16, 16], strides = [1, 1, 1]} : vector<2x32x16xf32> to vector<2x16x16xf32>
    %81 = vector.shape_cast %80 : vector<2x16x16xf32> to vector<32x16xf32>
    %82 = tpu.concatenate %79, %81, %75 in 1 : vector<32x16xf32>, vector<32x16xf32>, vector<32x16xf32> -> vector<32x48xf32>
    %cst_26 = arith.constant dense<0.000000e+00> : vector<32x48xf32>
    %83 = tpu.matmul %82, %1, %cst_26 {dimension_numbers = #tpu.dot_dimension_numbers<[1], [0], [0], [1], [0, 0, 1, 1], [], []>} : vector<32x48xf32>, vector<48x48xf32>, vector<32x48xf32> -> vector<32x48xf32>
    %84 = arith.addf %83, %11 : vector<32x48xf32>
    %85 = vector.extract_strided_slice %84 {offsets = [0, 0], sizes = [32, 16], strides = [1, 1]} : vector<32x48xf32> to vector<32x16xf32>
    %86 = arith.negf %85 : vector<32x16xf32>
    %87 = math.exp %86 : vector<32x16xf32>
    %cst_27 = arith.constant 1.000000e+00 : f32
    %88 = vector.broadcast %cst_27 : f32 to vector<32x16xf32>
    %89 = arith.addf %88, %87 : vector<32x16xf32>
    %90 = arith.divf %88, %89 : vector<32x16xf32>
    %91 = vector.extract_strided_slice %84 {offsets = [0, 16], sizes = [32, 16], strides = [1, 1]} : vector<32x48xf32> to vector<32x16xf32>
    %92 = arith.negf %91 : vector<32x16xf32>
    %93 = math.exp %92 : vector<32x16xf32>
    %cst_28 = arith.constant 1.000000e+00 : f32
    %94 = vector.broadcast %cst_28 : f32 to vector<32x16xf32>
    %95 = arith.addf %94, %93 : vector<32x16xf32>
    %96 = arith.divf %94, %95 : vector<32x16xf32>
    %97 = vector.extract_strided_slice %84 {offsets = [0, 32], sizes = [32, 16], strides = [1, 1]} : vector<32x48xf32> to vector<32x16xf32>
    %98 = arith.mulf %96, %75 : vector<32x16xf32>
    %cst_29 = arith.constant dense<0.000000e+00> : vector<32x16xf32>
    %99 = tpu.matmul %98, %2, %cst_29 {dimension_numbers = #tpu.dot_dimension_numbers<[1], [0], [0], [1], [0, 0, 1, 1], [], []>} : vector<32x16xf32>, vector<16x16xf32>, vector<32x16xf32> -> vector<32x16xf32>
    %100 = arith.addf %97, %99 : vector<32x16xf32>
    %101 = math.tanh %100 : vector<32x16xf32>
    %cst_30 = arith.constant 1.000000e+00 : f32
    %102 = vector.broadcast %cst_30 : f32 to vector<32x16xf32>
    %103 = arith.subf %102, %90 : vector<32x16xf32>
    %104 = arith.mulf %103, %75 : vector<32x16xf32>
    %105 = arith.mulf %90, %101 : vector<32x16xf32>
    %106 = arith.addf %104, %105 : vector<32x16xf32>
    %107 = vector.shape_cast %106 : vector<32x16xf32> to vector<2x16x16xf32>
    "tpu.trace_start"() <{level = 10 : i32, message = "gij,gjh->gih"}> : () -> ()
    %cst_31 = arith.constant dense<0.000000e+00> : vector<2x32x16xf32>
    %108 = tpu.matmul %13, %107, %cst_31 {dimension_numbers = #tpu.dot_dimension_numbers<[2], [1], [1], [2], [0, 0, 0, 1, 1, 2], [0], [0]>} : vector<2x32x16xf32>, vector<2x16x16xf32>, vector<2x32x16xf32> -> vector<2x32x16xf32>
    "tpu.trace_stop"() : () -> ()
    %109 = vector.extract_strided_slice %108 {offsets = [0, 0, 0], sizes = [2, 16, 16], strides = [1, 1, 1]} : vector<2x32x16xf32> to vector<2x16x16xf32>
    %110 = vector.shape_cast %109 : vector<2x16x16xf32> to vector<32x16xf32>
    %111 = vector.extract_strided_slice %108 {offsets = [0, 16, 0], sizes = [2, 16, 16], strides = [1, 1, 1]} : vector<2x32x16xf32> to vector<2x16x16xf32>
    %112 = vector.shape_cast %111 : vector<2x16x16xf32> to vector<32x16xf32>
    %113 = tpu.concatenate %110, %112, %106 in 1 : vector<32x16xf32>, vector<32x16xf32>, vector<32x16xf32> -> vector<32x48xf32>
    %cst_32 = arith.constant dense<0.000000e+00> : vector<32x48xf32>
    %114 = tpu.matmul %113, %1, %cst_32 {dimension_numbers = #tpu.dot_dimension_numbers<[1], [0], [0], [1], [0, 0, 1, 1], [], []>} : vector<32x48xf32>, vector<48x48xf32>, vector<32x48xf32> -> vector<32x48xf32>
    %115 = arith.addf %114, %11 : vector<32x48xf32>
    %116 = vector.extract_strided_slice %115 {offsets = [0, 0], sizes = [32, 16], strides = [1, 1]} : vector<32x48xf32> to vector<32x16xf32>
    %117 = arith.negf %116 : vector<32x16xf32>
    %118 = math.exp %117 : vector<32x16xf32>
    %cst_33 = arith.constant 1.000000e+00 : f32
    %119 = vector.broadcast %cst_33 : f32 to vector<32x16xf32>
    %120 = arith.addf %119, %118 : vector<32x16xf32>
    %121 = arith.divf %119, %120 : vector<32x16xf32>
    %122 = vector.extract_strided_slice %115 {offsets = [0, 16], sizes = [32, 16], strides = [1, 1]} : vector<32x48xf32> to vector<32x16xf32>
    %123 = arith.negf %122 : vector<32x16xf32>
    %124 = math.exp %123 : vector<32x16xf32>
    %cst_34 = arith.constant 1.000000e+00 : f32
    %125 = vector.broadcast %cst_34 : f32 to vector<32x16xf32>
    %126 = arith.addf %125, %124 : vector<32x16xf32>
    %127 = arith.divf %125, %126 : vector<32x16xf32>
    %128 = vector.extract_strided_slice %115 {offsets = [0, 32], sizes = [32, 16], strides = [1, 1]} : vector<32x48xf32> to vector<32x16xf32>
    %129 = arith.mulf %127, %106 : vector<32x16xf32>
    %cst_35 = arith.constant dense<0.000000e+00> : vector<32x16xf32>
    %130 = tpu.matmul %129, %2, %cst_35 {dimension_numbers = #tpu.dot_dimension_numbers<[1], [0], [0], [1], [0, 0, 1, 1], [], []>} : vector<32x16xf32>, vector<16x16xf32>, vector<32x16xf32> -> vector<32x16xf32>
    %131 = arith.addf %128, %130 : vector<32x16xf32>
    %132 = math.tanh %131 : vector<32x16xf32>
    %cst_36 = arith.constant 1.000000e+00 : f32
    %133 = vector.broadcast %cst_36 : f32 to vector<32x16xf32>
    %134 = arith.subf %133, %121 : vector<32x16xf32>
    %135 = arith.mulf %134, %106 : vector<32x16xf32>
    %136 = arith.mulf %121, %132 : vector<32x16xf32>
    %137 = arith.addf %135, %136 : vector<32x16xf32>
    %138 = vector.shape_cast %137 : vector<32x16xf32> to vector<2x16x16xf32>
    "tpu.trace_start"() <{level = 10 : i32, message = "gij,gjh->gih"}> : () -> ()
    %cst_37 = arith.constant dense<0.000000e+00> : vector<2x32x16xf32>
    %139 = tpu.matmul %13, %138, %cst_37 {dimension_numbers = #tpu.dot_dimension_numbers<[2], [1], [1], [2], [0, 0, 0, 1, 1, 2], [0], [0]>} : vector<2x32x16xf32>, vector<2x16x16xf32>, vector<2x32x16xf32> -> vector<2x32x16xf32>
    "tpu.trace_stop"() : () -> ()
    %140 = vector.extract_strided_slice %139 {offsets = [0, 0, 0], sizes = [2, 16, 16], strides = [1, 1, 1]} : vector<2x32x16xf32> to vector<2x16x16xf32>
    %141 = vector.shape_cast %140 : vector<2x16x16xf32> to vector<32x16xf32>
    %142 = vector.extract_strided_slice %139 {offsets = [0, 16, 0], sizes = [2, 16, 16], strides = [1, 1, 1]} : vector<2x32x16xf32> to vector<2x16x16xf32>
    %143 = vector.shape_cast %142 : vector<2x16x16xf32> to vector<32x16xf32>
    %144 = tpu.concatenate %141, %143, %137 in 1 : vector<32x16xf32>, vector<32x16xf32>, vector<32x16xf32> -> vector<32x48xf32>
    %cst_38 = arith.constant dense<0.000000e+00> : vector<32x48xf32>
    %145 = tpu.matmul %144, %1, %cst_38 {dimension_numbers = #tpu.dot_dimension_numbers<[1], [0], [0], [1], [0, 0, 1, 1], [], []>} : vector<32x48xf32>, vector<48x48xf32>, vector<32x48xf32> -> vector<32x48xf32>
    %146 = arith.addf %145, %11 : vector<32x48xf32>
    %147 = vector.extract_strided_slice %146 {offsets = [0, 0], sizes = [32, 16], strides = [1, 1]} : vector<32x48xf32> to vector<32x16xf32>
    %148 = arith.negf %147 : vector<32x16xf32>
    %149 = math.exp %148 : vector<32x16xf32>
    %cst_39 = arith.constant 1.000000e+00 : f32
    %150 = vector.broadcast %cst_39 : f32 to vector<32x16xf32>
    %151 = arith.addf %150, %149 : vector<32x16xf32>
    %152 = arith.divf %150, %151 : vector<32x16xf32>
    %153 = vector.extract_strided_slice %146 {offsets = [0, 16], sizes = [32, 16], strides = [1, 1]} : vector<32x48xf32> to vector<32x16xf32>
    %154 = arith.negf %153 : vector<32x16xf32>
    %155 = math.exp %154 : vector<32x16xf32>
    %cst_40 = arith.constant 1.000000e+00 : f32
    %156 = vector.broadcast %cst_40 : f32 to vector<32x16xf32>
    %157 = arith.addf %156, %155 : vector<32x16xf32>
    %158 = arith.divf %156, %157 : vector<32x16xf32>
    %159 = vector.extract_strided_slice %146 {offsets = [0, 32], sizes = [32, 16], strides = [1, 1]} : vector<32x48xf32> to vector<32x16xf32>
    %160 = arith.mulf %158, %137 : vector<32x16xf32>
    %cst_41 = arith.constant dense<0.000000e+00> : vector<32x16xf32>
    %161 = tpu.matmul %160, %2, %cst_41 {dimension_numbers = #tpu.dot_dimension_numbers<[1], [0], [0], [1], [0, 0, 1, 1], [], []>} : vector<32x16xf32>, vector<16x16xf32>, vector<32x16xf32> -> vector<32x16xf32>
    %162 = arith.addf %159, %161 : vector<32x16xf32>
    %163 = math.tanh %162 : vector<32x16xf32>
    %cst_42 = arith.constant 1.000000e+00 : f32
    %164 = vector.broadcast %cst_42 : f32 to vector<32x16xf32>
    %165 = arith.subf %164, %152 : vector<32x16xf32>
    %166 = arith.mulf %165, %137 : vector<32x16xf32>
    %167 = arith.mulf %152, %163 : vector<32x16xf32>
    %168 = arith.addf %166, %167 : vector<32x16xf32>
    %169 = tpu.concatenate %168, %0 in 1 : vector<32x16xf32>, vector<32x16xf32> -> vector<32x32xf32>
    %cst_43 = arith.constant dense<0.000000e+00> : vector<32x24xf32>
    %170 = tpu.matmul %169, %3, %cst_43 {dimension_numbers = #tpu.dot_dimension_numbers<[1], [0], [0], [1], [0, 0, 1, 1], [], []>} : vector<32x32xf32>, vector<32x24xf32>, vector<32x24xf32> -> vector<32x24xf32>
    %171 = vector.shape_cast %7 : vector<1x24xf32> to vector<1x24xf32>
    %172 = vector.broadcast %171 : vector<1x24xf32> to vector<32x24xf32>
    %173 = arith.addf %170, %172 : vector<32x24xf32>
    %174 = math.tanh %173 : vector<32x24xf32>
    %175 = vector.shape_cast %174 : vector<32x24xf32> to vector<2x16x24xf32>
    %176 = vector.extract_strided_slice %175 {offsets = [0, 0, 0], sizes = [2, 16, 8], strides = [1, 1, 1]} : vector<2x16x24xf32> to vector<2x16x8xf32>
    %177 = vector.extract_strided_slice %175 {offsets = [0, 0, 8], sizes = [2, 3, 8], strides = [1, 1, 1]} : vector<2x16x24xf32> to vector<2x3x8xf32>
    %178 = vector.extract_strided_slice %175 {offsets = [0, 3, 16], sizes = [2, 13, 8], strides = [1, 1, 1]} : vector<2x16x24xf32> to vector<2x13x8xf32>
    %179 = vector.shape_cast %8 : vector<1x8xf32> to vector<1x1x8xf32>
    %180 = vector.broadcast %179 : vector<1x1x8xf32> to vector<2x3x8xf32>
    %181 = arith.mulf %177, %180 : vector<2x3x8xf32>
    %cst_44 = arith.constant dense<0.000000e+00> : vector<2x3x13xf32>
    %182 = tpu.matmul %181, %178, %cst_44 {dimension_numbers = #tpu.dot_dimension_numbers<[2], [2], [1], [1], [0, 0, 0, 1, 1, 1], [0], [0]>} : vector<2x3x8xf32>, vector<2x13x8xf32>, vector<2x3x13xf32> -> vector<2x3x13xf32>
    %183 = vector.shape_cast %9 : vector<1x1xf32> to vector<1x1x1xf32>
    %184 = vector.broadcast %183 : vector<1x1x1xf32> to vector<2x3x13xf32>
    %185 = arith.addf %182, %184 : vector<2x3x13xf32>
    %186 = arith.negf %185 : vector<2x3x13xf32>
    %187 = math.exp %186 : vector<2x3x13xf32>
    %cst_45 = arith.constant 1.000000e+00 : f32
    %188 = vector.broadcast %cst_45 : f32 to vector<2x3x13xf32>
    %189 = arith.addf %188, %187 : vector<2x3x13xf32>
    %190 = arith.divf %188, %189 : vector<2x3x13xf32>
    %191 = vector.shape_cast %5 : vector<3x13xf32> to vector<1x3x13xf32>
    %192 = vector.broadcast %191 : vector<1x3x13xf32> to vector<2x3x13xf32>
    %193 = arith.mulf %190, %192 : vector<2x3x13xf32>
    %194 = vector.extract_strided_slice %176 {offsets = [0, 0, 0], sizes = [2, 3, 8], strides = [1, 1, 1]} : vector<2x16x8xf32> to vector<2x3x8xf32>
    %195 = vector.extract_strided_slice %176 {offsets = [0, 3, 0], sizes = [2, 13, 8], strides = [1, 1, 1]} : vector<2x16x8xf32> to vector<2x13x8xf32>
    %196 = vector.shape_cast %195 : vector<2x13x8xf32> to vector<2x1x13x8xf32>
    %197 = vector.shape_cast %193 : vector<2x3x13xf32> to vector<2x3x13x1xf32>
    %198 = vector.broadcast %196 : vector<2x1x13x8xf32> to vector<2x3x13x8xf32>
    %199 = vector.broadcast %197 : vector<2x3x13x1xf32> to vector<2x3x13x8xf32>
    %200 = arith.mulf %198, %199 : vector<2x3x13x8xf32>
    %201 = vector.extract_strided_slice %200 {offsets = [0, 0, 0, 0], sizes = [2, 3, 1, 8], strides = [1, 1, 1, 1]} : vector<2x3x13x8xf32> to vector<2x3x1x8xf32>
    %202 = vector.shape_cast %201 : vector<2x3x1x8xf32> to vector<2x3x8xf32>
    %203 = vector.extract_strided_slice %200 {offsets = [0, 0, 1, 0], sizes = [2, 3, 1, 8], strides = [1, 1, 1, 1]} : vector<2x3x13x8xf32> to vector<2x3x1x8xf32>
    %204 = vector.shape_cast %203 : vector<2x3x1x8xf32> to vector<2x3x8xf32>
    %205 = vector.extract_strided_slice %200 {offsets = [0, 0, 2, 0], sizes = [2, 3, 1, 8], strides = [1, 1, 1, 1]} : vector<2x3x13x8xf32> to vector<2x3x1x8xf32>
    %206 = vector.shape_cast %205 : vector<2x3x1x8xf32> to vector<2x3x8xf32>
    %207 = vector.extract_strided_slice %200 {offsets = [0, 0, 3, 0], sizes = [2, 3, 1, 8], strides = [1, 1, 1, 1]} : vector<2x3x13x8xf32> to vector<2x3x1x8xf32>
    %208 = vector.shape_cast %207 : vector<2x3x1x8xf32> to vector<2x3x8xf32>
    %209 = vector.extract_strided_slice %200 {offsets = [0, 0, 4, 0], sizes = [2, 3, 1, 8], strides = [1, 1, 1, 1]} : vector<2x3x13x8xf32> to vector<2x3x1x8xf32>
    %210 = vector.shape_cast %209 : vector<2x3x1x8xf32> to vector<2x3x8xf32>
    %211 = vector.extract_strided_slice %200 {offsets = [0, 0, 5, 0], sizes = [2, 3, 1, 8], strides = [1, 1, 1, 1]} : vector<2x3x13x8xf32> to vector<2x3x1x8xf32>
    %212 = vector.shape_cast %211 : vector<2x3x1x8xf32> to vector<2x3x8xf32>
    %213 = vector.extract_strided_slice %200 {offsets = [0, 0, 6, 0], sizes = [2, 3, 1, 8], strides = [1, 1, 1, 1]} : vector<2x3x13x8xf32> to vector<2x3x1x8xf32>
    %214 = vector.shape_cast %213 : vector<2x3x1x8xf32> to vector<2x3x8xf32>
    %215 = vector.extract_strided_slice %200 {offsets = [0, 0, 7, 0], sizes = [2, 3, 1, 8], strides = [1, 1, 1, 1]} : vector<2x3x13x8xf32> to vector<2x3x1x8xf32>
    %216 = vector.shape_cast %215 : vector<2x3x1x8xf32> to vector<2x3x8xf32>
    %217 = vector.extract_strided_slice %200 {offsets = [0, 0, 8, 0], sizes = [2, 3, 1, 8], strides = [1, 1, 1, 1]} : vector<2x3x13x8xf32> to vector<2x3x1x8xf32>
    %218 = vector.shape_cast %217 : vector<2x3x1x8xf32> to vector<2x3x8xf32>
    %219 = vector.extract_strided_slice %200 {offsets = [0, 0, 9, 0], sizes = [2, 3, 1, 8], strides = [1, 1, 1, 1]} : vector<2x3x13x8xf32> to vector<2x3x1x8xf32>
    %220 = vector.shape_cast %219 : vector<2x3x1x8xf32> to vector<2x3x8xf32>
    %221 = vector.extract_strided_slice %200 {offsets = [0, 0, 10, 0], sizes = [2, 3, 1, 8], strides = [1, 1, 1, 1]} : vector<2x3x13x8xf32> to vector<2x3x1x8xf32>
    %222 = vector.shape_cast %221 : vector<2x3x1x8xf32> to vector<2x3x8xf32>
    %223 = vector.extract_strided_slice %200 {offsets = [0, 0, 11, 0], sizes = [2, 3, 1, 8], strides = [1, 1, 1, 1]} : vector<2x3x13x8xf32> to vector<2x3x1x8xf32>
    %224 = vector.shape_cast %223 : vector<2x3x1x8xf32> to vector<2x3x8xf32>
    %225 = vector.extract_strided_slice %200 {offsets = [0, 0, 12, 0], sizes = [2, 3, 1, 8], strides = [1, 1, 1, 1]} : vector<2x3x13x8xf32> to vector<2x3x1x8xf32>
    %226 = vector.shape_cast %225 : vector<2x3x1x8xf32> to vector<2x3x8xf32>
    %227 = tpu.concatenate %194, %202, %204, %206, %208, %210, %212, %214, %216, %218, %220, %222, %224, %226 in 2 : vector<2x3x8xf32>, vector<2x3x8xf32>, vector<2x3x8xf32>, vector<2x3x8xf32>, vector<2x3x8xf32>, vector<2x3x8xf32>, vector<2x3x8xf32>, vector<2x3x8xf32>, vector<2x3x8xf32>, vector<2x3x8xf32>, vector<2x3x8xf32>, vector<2x3x8xf32>, vector<2x3x8xf32>, vector<2x3x8xf32> -> vector<2x3x112xf32>
    %c0_46 = arith.constant 0 : index
    %c0_47 = arith.constant 0 : index
    %c0_48 = arith.constant 0 : index
    %228 = vector.load %arg3[%c0_46, %c0_47, %c0_48] : memref<2x3x112xf32, #tpu.memory_space<vmem>>, vector<2x3x112xf32>
    tpu.vector_store %arg3[%c0_46, %c0_47, %c0_48], %227 {strides = array<i32>} : memref<2x3x112xf32, #tpu.memory_space<vmem>>, vector<2x3x112xf32>,
    return
  }
  func.func @transform_0(%arg0: i32) -> (i32, i32) {
    %c0_i32 = arith.constant 0 : i32
    %c0_i32_0 = arith.constant 0 : i32
    return %arg0, %c0_i32 : i32, i32
  }
  func.func @transform_1(%arg0: i32) -> (i32, i32) {
    %c0_i32 = arith.constant 0 : i32
    %c0_i32_0 = arith.constant 0 : i32
    %c0_i32_1 = arith.constant 0 : i32
    return %c0_i32, %c0_i32_0 : i32, i32
  }
  func.func @transform_2(%arg0: i32) -> (i32, i32, i32) {
    %c0_i32 = arith.constant 0 : i32
    %c0_i32_0 = arith.constant 0 : i32
    %c0_i32_1 = arith.constant 0 : i32
    return %arg0, %c0_i32, %c0_i32_0 : i32, i32, i32
  }
}

</mosaic_0001>

<llo_original>
// kernel: tpu_custom_call.1
$region0: #{tpu_custom_call.1}
  #allocation0 [shape = 'u32[]', space=smem, size = 0x4, offset = 0x4, fixed_abs, tag = 'smem constant byte address 0x4 - core index']
  #allocation1 [shape = 'u32[144,128]{1,0:T(1,128)}', space=vmem, size = 0x12000, scoped, tag = 'internal scratch']
  %s0 = inlined_call_operand.vmem [shape: f32[32,16], index: 0, kind: input, shape index: {}]
  %s1 = inlined_call_operand.hbm [shape: f32[56,128], index: 1, kind: input, shape index: {}]
  %s2 = inlined_call_operand.vmem [shape: f32[2,3,112], index: 2, kind: output, shape index: {}]
  %s3 = sld [smem:[#allocation0]]
  $region22: #{tpu_custom_call.1} parent=0
    _
  %s5 = ssub.s32 1, %s3
  %s6 = scalar_select 0, %s5, %s3
  $region1: #{tpu_custom_call.1} parent=0
    #allocation2 [shape = 'u8[28672]{0}', space=vmem, size = 0x7000, scoped, tag = 'input window, operand 1, single buffered']
    #allocation3 [shape = 's32[1]{0}', space=sflag, size = 0x4, scoped, tag = 'scoped memory for tpu_custom_call.1']
    %7 = vsyncpa [#allocation3], 0
    // Predicated region
    $region2: #{tpu_custom_call.1} parent=1 // pred_check
      _
    $region3: #{tpu_custom_call.1} parent=1 // pred_check_branch
      %9 = sbr.rel (0) target = $region5
    $region4: #{tpu_custom_call.1} parent=1 // pred_region
      _
    $region5: #{tpu_custom_call.1} parent=1 // pred_fallthru
      _
    // Predicated region
    $region6: #{tpu_custom_call.1} parent=1 // pred_check
      _
    $region7: #{tpu_custom_call.1} parent=1 // pred_check_branch
      %11 = sbr.rel (0) target = $region9
    $region8: #{tpu_custom_call.1} parent=1 // pred_region
      %s13 = ssub.s32 896, 896
      %14 = vsyncadd [#allocation3], %s13
      %s15 = sshll.u32 [#allocation2], 4
      %s16 = int_to_ptr.vmem [resolvable:$true] %s15
      %21 = dma.hbm_to_vmem [thread:$0]  %s1, 896, %s16, [#allocation3], 128, 128, 8
    $region9: #{tpu_custom_call.1} parent=1 // pred_fallthru
      _
    // Predicated region
    $region10: #{tpu_custom_call.1} parent=1 // pred_check
      _
    $region11: #{tpu_custom_call.1} parent=1 // pred_check_branch
      %23 = sbr.rel (0) target = $region13
    $region12: #{tpu_custom_call.1} parent=1 // pred_region
      %24 = dma.done [#allocation3], 896
    $region13: #{tpu_custom_call.1} parent=1 // pred_fallthru
      _
    %v25 = vld [vmem:[%s0] sm:$0xff]
    %v26 = vld [vmem:[%s0 + $0x8] sm:$0xff]
    %v27 = vld [vmem:[%s0 + $0x10] sm:$0xff]
    %v28 = vld [vmem:[%s0 + $0x18] sm:$0xff]
    %v29 = vld [vmem:[#allocation2] sm:$0xff]
    %v30 = vld [vmem:[#allocation2 + $0x8] sm:$0xff]
    %v31 = vld [vmem:[#allocation2 + $0x10] sm:$0xff]
    %v32 = vld [vmem:[#allocation2 + $0x18] sm:$0xff]
    %v33 = vld [vmem:[#allocation2 + $0x20] sm:$0xff]
    %v34 = vld [vmem:[#allocation2 + $0x28] sm:$0xff]
    %v35 = vld [vmem:[#allocation2] sm:$0x7]
    %v36 = vld [vmem:[#allocation2 + $0x30] sm:$0x1]
    %v37 = vlaneseq
    %v38 = vshrl.u32 %v37, 7
    %v39 = vsub.s32 0, %v38
    %v40 = vrot.slane %v36, %v39
    %45 = vrot.lane.b32.xlu0 %v29, 40
    %v46 = vpop.permute.xlu0 %45
    %47 = vrot.lane.b32.xlu0 %v30, 40
    %v48 = vpop.permute.xlu0 %47
    %49 = vrot.lane.b32.xlu0 %v31, 40
    %v50 = vpop.permute.xlu0 %49
    %51 = vrot.lane.b32.xlu0 %v32, 40
    %v52 = vpop.permute.xlu0 %51
    %vm53 = vcmask 130048
    %v54 = vsel %vm53, %v46, 0
    %v56 = vsel %vm53, %v48, 0
    %v58 = vsel %vm53, %v50, 0
    %v60 = vsel %vm53, %v52, 0
    %62 = vmatprep.subr.mxu0 0.0
    %63 = vmatpush1.msra.mxu0 %v25
    %64 = vmatprep.subr.mxu0 0.0
    %65 = vmatpush1.msra.mxu0 %v26
    %66 = vmatprep.subr.mxu0 0.0
    %67 = vmatpush1.msra.mxu0 0.0
    %68 = vmatprep.subr.mxu0 0.0
    %69 = vmatpush1.msra.mxu0 0.0
    %70 = vmatprep.subr.mxu0 0.0
    %71 = vmatpush1.msra.mxu0 0.0
    %72 = vmatprep.subr.mxu0 0.0
    %73 = vmatpush1.msra.mxu0 0.0
    %74 = vmatprep.subr.mxu0 0.0
    %75 = vmatpush1.msra.mxu0 0.0
    %76 = vmatprep.subr.mxu0 0.0
    %77 = vmatpush1.msra.mxu0 0.0
    %78 = vmatprep.subr.mxu0 0.0
    %79 = vmatpush1.msra.mxu0 0.0
    %80 = vmatprep.subr.mxu0 0.0
    %81 = vmatpush1.msra.mxu0 0.0
    %82 = vmatprep.subr.mxu0 0.0
    %83 = vmatpush1.msra.mxu0 0.0
    %84 = vmatprep.subr.mxu0 0.0
    %85 = vmatpush1.msra.mxu0 0.0
    %86 = vmatprep.subr.mxu0 0.0
    %87 = vmatpush1.msra.mxu0 0.0
    %88 = vmatprep.subr.mxu0 0.0
    %89 = vmatpush1.msra.mxu0 0.0
    %90 = vmatprep.subr.mxu0 0.0
    %91 = vmatpush1.msra.mxu0 0.0
    %92 = vmatprep.subr.mxu0 0.0
    %93 = vmatpush1.msra.mxu0 0.0
    %94 = vmatprep.subr.mxu0 0.0
    %95 = vmatpush1.msra.mxu0 0.0
    %96 = vmatprep.subr.mxu0 0.0
    %97 = vmatpush1.msra.mxu0 0.0
    %98 = vmatprep.subr.mxu0 0.0
    %99 = vmatpush1.msra.mxu0 0.0
    %100 = vmatprep.subr.mxu0 0.0
    %101 = vmatpush1.msra.mxu0 0.0
    %102 = vmatprep.subr.mxu0 0.0
    %103 = vmatpush1.msra.mxu0 0.0
    %104 = vmatprep.subr.mxu0 0.0
    %105 = vmatpush1.msra.mxu0 0.0
    %106 = vmatprep.subr.mxu0 0.0
    %107 = vmatpush1.msra.mxu0 0.0
    %108 = vmatprep.subr.mxu0 0.0
    %109 = vmatpush1.msra.mxu0 0.0
    %110 = vmatprep.subr.mxu0 0.0
    %111 = vmatpush1.msra.mxu0 0.0
    %112 = vmatprep.subr.mxu0 0.0
    %113 = vmatpush1.msra.mxu0 0.0
    %114 = vmatprep.subr.mxu0 0.0
    %115 = vmatpush1.msra.mxu0 0.0
    %116 = vmatprep.subr.mxu0 0.0
    %117 = vmatpush1.msra.mxu0 0.0
    %118 = vmatprep.subr.mxu0 0.0
    %119 = vmatpush1.msra.mxu0 0.0
    %120 = vmatprep.subr.mxu0 0.0
    %121 = vmatpush1.msra.mxu0 0.0
    %122 = vmatprep.subr.mxu0 0.0
    %123 = vmatpush1.msra.mxu0 0.0
    %124 = vmatprep.subr.mxu0 0.0
    %125 = vmatpush1.msra.mxu0 0.0
    %126 = vmatprep.mubr.f32.mxu0 0.0
    %127 = vmatmul.mubr.f32.gmra.mrb[0].mxu0 %v54
    %v128 = vpop.f32.mrb[0].mxu0
    %v129 = vadd.f32 0.0, %v128
    %v130 = vpop.f32.mrb[0].mxu0
    %131 = vmatprep.mubr.f32.mxu0 0.0
    %132 = vmatmul.mubr.f32.gmra.mrb[0].mxu0 %v56
    %v133 = vpop.f32.mrb[0].mxu0
    %v134 = vadd.f32 0.0, %v133
    %v135 = vpop.f32.mrb[0].mxu0
    %136 = vmatprep.mubr.f32.mxu0 0.0
    %137 = vmatmul.mubr.f32.gmra.mrb[0].mxu0 %v58
    %v138 = vpop.f32.mrb[0].mxu0
    %v139 = vadd.f32 0.0, %v138
    %v140 = vpop.f32.mrb[0].mxu0
    %141 = vmatprep.mubr.f32.mxu0 0.0
    %142 = vmatmul.mubr.f32.gmra.mrb[0].mxu0 %v60
    %v143 = vpop.f32.mrb[0].mxu0
    %v144 = vadd.f32 0.0, %v143
    %v145 = vpop.f32.mrb[0].mxu0
    %146 = vdwg.mxu0
    %147 = vmatprep.subr.mxu0 0.0
    %148 = vmatpush1.msra.mxu0 %v27
    %149 = vmatprep.subr.mxu0 0.0
    %150 = vmatpush1.msra.mxu0 %v28
    %151 = vmatprep.subr.mxu0 0.0
    %152 = vmatpush1.msra.mxu0 0.0
    %153 = vmatprep.subr.mxu0 0.0
    %154 = vmatpush1.msra.mxu0 0.0
    %155 = vmatprep.subr.mxu0 0.0
    %156 = vmatpush1.msra.mxu0 0.0
    %157 = vmatprep.subr.mxu0 0.0
    %158 = vmatpush1.msra.mxu0 0.0
    %159 = vmatprep.subr.mxu0 0.0
    %160 = vmatpush1.msra.mxu0 0.0
    %161 = vmatprep.subr.mxu0 0.0
    %162 = vmatpush1.msra.mxu0 0.0
    %163 = vmatprep.subr.mxu0 0.0
    %164 = vmatpush1.msra.mxu0 0.0
    %165 = vmatprep.subr.mxu0 0.0
    %166 = vmatpush1.msra.mxu0 0.0
    %167 = vmatprep.subr.mxu0 0.0
    %168 = vmatpush1.msra.mxu0 0.0
    %169 = vmatprep.subr.mxu0 0.0
    %170 = vmatpush1.msra.mxu0 0.0
    %171 = vmatprep.subr.mxu0 0.0
    %172 = vmatpush1.msra.mxu0 0.0
    %173 = vmatprep.subr.mxu0 0.0
    %174 = vmatpush1.msra.mxu0 0.0
    %175 = vmatprep.subr.mxu0 0.0
    %176 = vmatpush1.msra.mxu0 0.0
    %177 = vmatprep.subr.mxu0 0.0
    %178 = vmatpush1.msra.mxu0 0.0
    %179 = vmatprep.subr.mxu0 0.0
    %180 = vmatpush1.msra.mxu0 0.0
    %181 = vmatprep.subr.mxu0 0.0
    %182 = vmatpush1.msra.mxu0 0.0
    %183 = vmatprep.subr.mxu0 0.0
    %184 = vmatpush1.msra.mxu0 0.0
    %185 = vmatprep.subr.mxu0 0.0
    %186 = vmatpush1.msra.mxu0 0.0
    %187 = vmatprep.subr.mxu0 0.0
    %188 = vmatpush1.msra.mxu0 0.0
    %189 = vmatprep.subr.mxu0 0.0
    %190 = vmatpush1.msra.mxu0 0.0
    %191 = vmatprep.subr.mxu0 0.0
    %192 = vmatpush1.msra.mxu0 0.0
    %193 = vmatprep.subr.mxu0 0.0
    %194 = vmatpush1.msra.mxu0 0.0
    %195 = vmatprep.subr.mxu0 0.0
    %196 = vmatpush1.msra.mxu0 0.0
    %197 = vmatprep.subr.mxu0 0.0
    %198 = vmatpush1.msra.mxu0 0.0
    %199 = vmatprep.subr.mxu0 0.0
    %200 = vmatpush1.msra.mxu0 0.0
    %201 = vmatprep.subr.mxu0 0.0
    %202 = vmatpush1.msra.mxu0 0.0
    %203 = vmatprep.subr.mxu0 0.0
    %204 = vmatpush1.msra.mxu0 0.0
    %205 = vmatprep.subr.mxu0 0.0
    %206 = vmatpush1.msra.mxu0 0.0
    %207 = vmatprep.subr.mxu0 0.0
    %208 = vmatpush1.msra.mxu0 0.0
    %209 = vmatprep.subr.mxu0 0.0
    %210 = vmatpush1.msra.mxu0 0.0
    %211 = vmatprep.mubr.f32.mxu0 0.0
    %212 = vmatmul.mubr.f32.gmra.mrb[0].mxu0 %v54
    %v213 = vpop.f32.mrb[0].mxu0
    %v214 = vadd.f32 0.0, %v213
    %v215 = vpop.f32.mrb[0].mxu0
    %216 = vmatprep.mubr.f32.mxu0 0.0
    %217 = vmatmul.mubr.f32.gmra.mrb[0].mxu0 %v56
    %v218 = vpop.f32.mrb[0].mxu0
    %v219 = vadd.f32 0.0, %v218
    %v220 = vpop.f32.mrb[0].mxu0
    %221 = vmatprep.mubr.f32.mxu0 0.0
    %222 = vmatmul.mubr.f32.gmra.mrb[0].mxu0 %v58
    %v223 = vpop.f32.mrb[0].mxu0
    %v224 = vadd.f32 0.0, %v223
    %v225 = vpop.f32.mrb[0].mxu0
    %226 = vmatprep.mubr.f32.mxu0 0.0
    %227 = vmatmul.mubr.f32.gmra.mrb[0].mxu0 %v60
    %v228 = vpop.f32.mrb[0].mxu0
    %v229 = vadd.f32 0.0, %v228
    %v230 = vpop.f32.mrb[0].mxu0
    %231 = vdwg.mxu0
    %236 = vrot.lane.b32.xlu0 %v139, 16
    %v237 = vpop.permute.xlu0 %236
    %238 = vrot.lane.b32.xlu0 %v144, 16
    %v239 = vpop.permute.xlu0 %238
    %240 = vrot.lane.b32.xlu0 %v224, 16
    %v241 = vpop.permute.xlu0 %240
    %242 = vrot.lane.b32.xlu0 %v229, 16
    %v243 = vpop.permute.xlu0 %242
    %252 = vrot.lane.b32.xlu0 %v25, 32
    %v253 = vpop.permute.xlu0 %252
    %254 = vrot.lane.b32.xlu0 %v26, 32
    %v255 = vpop.permute.xlu0 %254
    %256 = vrot.lane.b32.xlu0 %v27, 32
    %v257 = vpop.permute.xlu0 %256
    %258 = vrot.lane.b32.xlu0 %v28, 32
    %v259 = vpop.permute.xlu0 %258
    %v264 = vsel %vm53, %v129, %v237
    %v265 = vsel %vm53, %v134, %v239
    %v266 = vsel %vm53, %v214, %v241
    %v267 = vsel %vm53, %v219, %v243
    %vm268 = vcmask 261120
    %v269 = vsel %vm268, %v264, %v253
    %v270 = vsel %vm268, %v265, %v255
    %v271 = vsel %vm268, %v266, %v257
    %v272 = vsel %vm268, %v267, %v259
    %vm273 = vcmask 392192
    %v275 = vsel %vm273, %v269, 0
    %v278 = vsel %vm273, %v270, 0
    %v281 = vsel %vm273, %v271, 0
    %v284 = vsel %vm273, %v272, 0
    %286 = vmatprep.subr.mxu0 0.0
    %287 = vmatpush1.msra.mxu0 %v29
    %288 = vmatprep.subr.mxu0 0.0
    %289 = vmatpush1.msra.mxu0 %v30
    %290 = vmatprep.subr.mxu0 0.0
    %291 = vmatpush1.msra.mxu0 %v31
    %292 = vmatprep.subr.mxu0 0.0
    %293 = vmatpush1.msra.mxu0 %v32
    %294 = vmatprep.subr.mxu0 0.0
    %295 = vmatpush1.msra.mxu0 %v33
    %296 = vmatprep.subr.mxu0 0.0
    %297 = vmatpush1.msra.mxu0 %v34
    %298 = vmatprep.subr.mxu0 0.0
    %299 = vmatpush1.msra.mxu0 0.0
    %300 = vmatprep.subr.mxu0 0.0
    %301 = vmatpush1.msra.mxu0 0.0
    %302 = vmatprep.subr.mxu0 0.0
    %303 = vmatpush1.msra.mxu0 0.0
    %304 = vmatprep.subr.mxu0 0.0
    %305 = vmatpush1.msra.mxu0 0.0
    %306 = vmatprep.subr.mxu0 0.0
    %307 = vmatpush1.msra.mxu0 0.0
    %308 = vmatprep.subr.mxu0 0.0
    %309 = vmatpush1.msra.mxu0 0.0
    %310 = vmatprep.subr.mxu0 0.0
    %311 = vmatpush1.msra.mxu0 0.0
    %312 = vmatprep.subr.mxu0 0.0
    %313 = vmatpush1.msra.mxu0 0.0
    %314 = vmatprep.subr.mxu0 0.0
    %315 = vmatpush1.msra.mxu0 0.0
    %316 = vmatprep.subr.mxu0 0.0
    %317 = vmatpush1.msra.mxu0 0.0
    %318 = vmatprep.subr.mxu0 0.0
    %319 = vmatpush1.msra.mxu0 0.0
    %320 = vmatprep.subr.mxu0 0.0
    %321 = vmatpush1.msra.mxu0 0.0
    %322 = vmatprep.subr.mxu0 0.0
    %323 = vmatpush1.msra.mxu0 0.0
    %324 = vmatprep.subr.mxu0 0.0
    %325 = vmatpush1.msra.mxu0 0.0
    %326 = vmatprep.subr.mxu0 0.0
    %327 = vmatpush1.msra.mxu0 0.0
    %328 = vmatprep.subr.mxu0 0.0
    %329 = vmatpush1.msra.mxu0 0.0
    %330 = vmatprep.subr.mxu0 0.0
    %331 = vmatpush1.msra.mxu0 0.0
    %332 = vmatprep.subr.mxu0 0.0
    %333 = vmatpush1.msra.mxu0 0.0
    %334 = vmatprep.subr.mxu0 0.0
    %335 = vmatpush1.msra.mxu0 0.0
    %336 = vmatprep.subr.mxu0 0.0
    %337 = vmatpush1.msra.mxu0 0.0
    %338 = vmatprep.subr.mxu0 0.0
    %339 = vmatpush1.msra.mxu0 0.0
    %340 = vmatprep.subr.mxu0 0.0
    %341 = vmatpush1.msra.mxu0 0.0
    %342 = vmatprep.subr.mxu0 0.0
    %343 = vmatpush1.msra.mxu0 0.0
    %344 = vmatprep.subr.mxu0 0.0
    %345 = vmatpush1.msra.mxu0 0.0
    %346 = vmatprep.subr.mxu0 0.0
    %347 = vmatpush1.msra.mxu0 0.0
    %348 = vmatprep.subr.mxu0 0.0
    %349 = vmatpush1.msra.mxu0 0.0
    %350 = vmatprep.mubr.f32.mxu0 0.0
    %351 = vmatmul.mubr.f32.gmra.mrb[0].mxu0 %v275
    %v352 = vpop.f32.mrb[0].mxu0
    %v353 = vadd.f32 %v40, %v352
    %v354 = vpop.f32.mrb[0].mxu0
    %355 = vmatprep.mubr.f32.mxu0 0.0
    %356 = vmatmul.mubr.f32.gmra.mrb[0].mxu0 %v278
    %v357 = vpop.f32.mrb[0].mxu0
    %v358 = vadd.f32 %v40, %v357
    %v359 = vpop.f32.mrb[0].mxu0
    %360 = vmatprep.mubr.f32.mxu0 0.0
    %361 = vmatmul.mubr.f32.gmra.mrb[0].mxu0 %v281
    %v362 = vpop.f32.mrb[0].mxu0
    %v363 = vadd.f32 %v40, %v362
    %v364 = vpop.f32.mrb[0].mxu0
    %365 = vmatprep.mubr.f32.mxu0 0.0
    %366 = vmatmul.mubr.f32.gmra.mrb[0].mxu0 %v284
    %v367 = vpop.f32.mrb[0].mxu0
    %v368 = vadd.f32 %v40, %v367
    %v369 = vpop.f32.mrb[0].mxu0
    %370 = vdwg.mxu0
    %v371 = vxor.u32 %v353, 2147483648
    %v372 = vxor.u32 %v358, 2147483648
    %v373 = vxor.u32 %v363, 2147483648
    %v374 = vxor.u32 %v368, 2147483648
    %v375 = vmul.f32 %v371, 1.442695
    %v376 = vpow.pop %v375
    %v377 = vmul.f32 %v372, 1.442695
    %v378 = vpow.pop %v377
    %v379 = vmul.f32 %v373, 1.442695
    %v380 = vpow.pop %v379
    %v381 = vmul.f32 %v374, 1.442695
    %v382 = vpow.pop %v381
    %v383 = vadd.f32 %v376, 1.0
    %v384 = vadd.f32 %v378, 1.0
    %v385 = vadd.f32 %v380, 1.0
    %v386 = vadd.f32 %v382, 1.0
    %v387 = vrcp.pop %v383
    %v388 = vmul.f32 1.0, %v387
    %v389 = vrcp.pop %v384
    %v390 = vmul.f32 1.0, %v389
    %v391 = vrcp.pop %v385
    %v392 = vmul.f32 1.0, %v391
    %v393 = vrcp.pop %v386
    %v394 = vmul.f32 1.0, %v393
    %395 = vrot.lane.b32.xlu0 %v25, 16
    %v396 = vpop.permute.xlu0 %395
    %397 = vrot.lane.b32.xlu0 %v26, 16
    %v398 = vpop.permute.xlu0 %397
    %399 = vrot.lane.b32.xlu0 %v27, 16
    %v400 = vpop.permute.xlu0 %399
    %401 = vrot.lane.b32.xlu0 %v28, 16
    %v402 = vpop.permute.xlu0 %401
    %v407 = vmul.f32 %v388, %v396
    %v408 = vmul.f32 %v390, %v398
    %v409 = vmul.f32 %v392, %v400
    %v410 = vmul.f32 %v394, %v402
    %415 = vrot.lane.b32.xlu0 %v407, 112
    %v416 = vpop.permute.xlu0 %415
    %417 = vrot.lane.b32.xlu0 %v408, 112
    %v418 = vpop.permute.xlu0 %417
    %419 = vrot.lane.b32.xlu0 %v409, 112
    %v420 = vpop.permute.xlu0 %419
    %421 = vrot.lane.b32.xlu0 %v410, 112
    %v422 = vpop.permute.xlu0 %421
    %423 = vrot.lane.b32.xlu0 %v29, 80
    %v424 = vpop.permute.xlu0 %423
    %425 = vrot.lane.b32.xlu0 %v30, 80
    %v426 = vpop.permute.xlu0 %425
    %v429 = vsel %vm53, %v416, 0
    %v431 = vsel %vm53, %v418, 0
    %v433 = vsel %vm53, %v420, 0
    %v435 = vsel %vm53, %v422, 0
    %437 = vmatprep.subr.mxu0 0.0
    %438 = vmatpush1.msra.mxu0 %v424
    %439 = vmatprep.subr.mxu0 0.0
    %440 = vmatpush1.msra.mxu0 %v426
    %441 = vmatprep.subr.mxu0 0.0
    %442 = vmatpush1.msra.mxu0 0.0
    %443 = vmatprep.subr.mxu0 0.0
    %444 = vmatpush1.msra.mxu0 0.0
    %445 = vmatprep.subr.mxu0 0.0
    %446 = vmatpush1.msra.mxu0 0.0
    %447 = vmatprep.subr.mxu0 0.0
    %448 = vmatpush1.msra.mxu0 0.0
    %449 = vmatprep.subr.mxu0 0.0
    %450 = vmatpush1.msra.mxu0 0.0
    %451 = vmatprep.subr.mxu0 0.0
    %452 = vmatpush1.msra.mxu0 0.0
    %453 = vmatprep.subr.mxu0 0.0
    %454 = vmatpush1.msra.mxu0 0.0
    %455 = vmatprep.subr.mxu0 0.0
    %456 = vmatpush1.msra.mxu0 0.0
    %457 = vmatprep.subr.mxu0 0.0
    %458 = vmatpush1.msra.mxu0 0.0
    %459 = vmatprep.subr.mxu0 0.0
    %460 = vmatpush1.msra.mxu0 0.0
    %461 = vmatprep.subr.mxu0 0.0
    %462 = vmatpush1.msra.mxu0 0.0
    %463 = vmatprep.subr.mxu0 0.0
    %464 = vmatpush1.msra.mxu0 0.0
    %465 = vmatprep.subr.mxu0 0.0
    %466 = vmatpush1.msra.mxu0 0.0
    %467 = vmatprep.subr.mxu0 0.0
    %468 = vmatpush1.msra.mxu0 0.0
    %469 = vmatprep.subr.mxu0 0.0
    %470 = vmatpush1.msra.mxu0 0.0
    %471 = vmatprep.subr.mxu0 0.0
    %472 = vmatpush1.msra.mxu0 0.0
    %473 = vmatprep.subr.mxu0 0.0
    %474 = vmatpush1.msra.mxu0 0.0
    %475 = vmatprep.subr.mxu0 0.0
    %476 = vmatpush1.msra.mxu0 0.0
    %477 = vmatprep.subr.mxu0 0.0
    %478 = vmatpush1.msra.mxu0 0.0
    %479 = vmatprep.subr.mxu0 0.0
    %480 = vmatpush1.msra.mxu0 0.0
    %481 = vmatprep.subr.mxu0 0.0
    %482 = vmatpush1.msra.mxu0 0.0
    %483 = vmatprep.subr.mxu0 0.0
    %484 = vmatpush1.msra.mxu0 0.0
    %485 = vmatprep.subr.mxu0 0.0
    %486 = vmatpush1.msra.mxu0 0.0
    %487 = vmatprep.subr.mxu0 0.0
    %488 = vmatpush1.msra.mxu0 0.0
    %489 = vmatprep.subr.mxu0 0.0
    %490 = vmatpush1.msra.mxu0 0.0
    %491 = vmatprep.subr.mxu0 0.0
    %492 = vmatpush1.msra.mxu0 0.0
    %493 = vmatprep.subr.mxu0 0.0
    %494 = vmatpush1.msra.mxu0 0.0
    %495 = vmatprep.subr.mxu0 0.0
    %496 = vmatpush1.msra.mxu0 0.0
    %497 = vmatprep.subr.mxu0 0.0
    %498 = vmatpush1.msra.mxu0 0.0
    %499 = vmatprep.subr.mxu0 0.0
    %500 = vmatpush1.msra.mxu0 0.0
    %501 = vmatprep.mubr.f32.mxu0 0.0
    %502 = vmatmul.mubr.f32.gmra.mrb[0].mxu0 %v429
    %v503 = vpop.f32.mrb[0].mxu0
    %v504 = vadd.f32 0.0, %v503
    %v505 = vpop.f32.mrb[0].mxu0
    %506 = vmatprep.mubr.f32.mxu0 0.0
    %507 = vmatmul.mubr.f32.gmra.mrb[0].mxu0 %v431
    %v508 = vpop.f32.mrb[0].mxu0
    %v509 = vadd.f32 0.0, %v508
    %v510 = vpop.f32.mrb[0].mxu0
    %511 = vmatprep.mubr.f32.mxu0 0.0
    %512 = vmatmul.mubr.f32.gmra.mrb[0].mxu0 %v433
    %v513 = vpop.f32.mrb[0].mxu0
    %v514 = vadd.f32 0.0, %v513
    %v515 = vpop.f32.mrb[0].mxu0
    %516 = vmatprep.mubr.f32.mxu0 0.0
    %517 = vmatmul.mubr.f32.gmra.mrb[0].mxu0 %v435
    %v518 = vpop.f32.mrb[0].mxu0
    %v519 = vadd.f32 0.0, %v518
    %v520 = vpop.f32.mrb[0].mxu0
    %521 = vdwg.mxu0
    %526 = vrot.lane.b32.xlu0 %v504, 32
    %v527 = vpop.permute.xlu0 %526
    %528 = vrot.lane.b32.xlu0 %v509, 32
    %v529 = vpop.permute.xlu0 %528
    %530 = vrot.lane.b32.xlu0 %v514, 32
    %v531 = vpop.permute.xlu0 %530
    %532 = vrot.lane.b32.xlu0 %v519, 32
    %v533 = vpop.permute.xlu0 %532
    %v538 = vadd.f32 %v353, %v527
    %v539 = vadd.f32 %v358, %v529
    %v540 = vadd.f32 %v363, %v531
    %v541 = vadd.f32 %v368, %v533
    %v542 = vtanh.pop %v538
    %v543 = vtanh.pop %v539
    %v544 = vtanh.pop %v540
    %v545 = vtanh.pop %v541
    %v546 = vsub.f32 1.0, %v388
    %v547 = vsub.f32 1.0, %v390
    %v548 = vsub.f32 1.0, %v392
    %v549 = vsub.f32 1.0, %v394
    %v550 = vmul.f32 %v546, %v25
    %v551 = vmul.f32 %v547, %v26
    %v552 = vmul.f32 %v548, %v27
    %v553 = vmul.f32 %v549, %v28
    %558 = vrot.lane.b32.xlu0 %v542, 96
    %v559 = vpop.permute.xlu0 %558
    %560 = vrot.lane.b32.xlu0 %v543, 96
    %v561 = vpop.permute.xlu0 %560
    %562 = vrot.lane.b32.xlu0 %v544, 96
    %v563 = vpop.permute.xlu0 %562
    %564 = vrot.lane.b32.xlu0 %v545, 96
    %v565 = vpop.permute.xlu0 %564
    %v570 = vmul.f32 %v388, %v559
    %v571 = vmul.f32 %v390, %v561
    %v572 = vmul.f32 %v392, %v563
    %v573 = vmul.f32 %v394, %v565
    %v574 = vadd.f32 %v550, %v570
    %v575 = vadd.f32 %v551, %v571
    %v576 = vadd.f32 %v552, %v572
    %v577 = vadd.f32 %v553, %v573
    %578 = vmatprep.subr.mxu0 0.0
    %579 = vmatpush1.msra.mxu0 %v574
    %580 = vmatprep.subr.mxu0 0.0
    %581 = vmatpush1.msra.mxu0 %v575
    %582 = vmatprep.subr.mxu0 0.0
    %583 = vmatpush1.msra.mxu0 0.0
    %584 = vmatprep.subr.mxu0 0.0
    %585 = vmatpush1.msra.mxu0 0.0
    %586 = vmatprep.subr.mxu0 0.0
    %587 = vmatpush1.msra.mxu0 0.0
    %588 = vmatprep.subr.mxu0 0.0
    %589 = vmatpush1.msra.mxu0 0.0
    %590 = vmatprep.subr.mxu0 0.0
    %591 = vmatpush1.msra.mxu0 0.0
    %592 = vmatprep.subr.mxu0 0.0
    %593 = vmatpush1.msra.mxu0 0.0
    %594 = vmatprep.subr.mxu0 0.0
    %595 = vmatpush1.msra.mxu0 0.0
    %596 = vmatprep.subr.mxu0 0.0
    %597 = vmatpush1.msra.mxu0 0.0
    %598 = vmatprep.subr.mxu0 0.0
    %599 = vmatpush1.msra.mxu0 0.0
    %600 = vmatprep.subr.mxu0 0.0
    %601 = vmatpush1.msra.mxu0 0.0
    %602 = vmatprep.subr.mxu0 0.0
    %603 = vmatpush1.msra.mxu0 0.0
    %604 = vmatprep.subr.mxu0 0.0
    %605 = vmatpush1.msra.mxu0 0.0
    %606 = vmatprep.subr.mxu0 0.0
    %607 = vmatpush1.msra.mxu0 0.0
    %608 = vmatprep.subr.mxu0 0.0
    %609 = vmatpush1.msra.mxu0 0.0
    %610 = vmatprep.subr.mxu0 0.0
    %611 = vmatpush1.msra.mxu0 0.0
    %612 = vmatprep.subr.mxu0 0.0
    %613 = vmatpush1.msra.mxu0 0.0
    %614 = vmatprep.subr.mxu0 0.0
    %615 = vmatpush1.msra.mxu0 0.0
    %616 = vmatprep.subr.mxu0 0.0
    %617 = vmatpush1.msra.mxu0 0.0
    %618 = vmatprep.subr.mxu0 0.0
    %619 = vmatpush1.msra.mxu0 0.0
    %620 = vmatprep.subr.mxu0 0.0
    %621 = vmatpush1.msra.mxu0 0.0
    %622 = vmatprep.subr.mxu0 0.0
    %623 = vmatpush1.msra.mxu0 0.0
    %624 = vmatprep.subr.mxu0 0.0
    %625 = vmatpush1.msra.mxu0 0.0
    %626 = vmatprep.subr.mxu0 0.0
    %627 = vmatpush1.msra.mxu0 0.0
    %628 = vmatprep.subr.mxu0 0.0
    %629 = vmatpush1.msra.mxu0 0.0
    %630 = vmatprep.subr.mxu0 0.0
    %631 = vmatpush1.msra.mxu0 0.0
    %632 = vmatprep.subr.mxu0 0.0
    %633 = vmatpush1.msra.mxu0 0.0
    %634 = vmatprep.subr.mxu0 0.0
    %635 = vmatpush1.msra.mxu0 0.0
    %636 = vmatprep.subr.mxu0 0.0
    %637 = vmatpush1.msra.mxu0 0.0
    %638 = vmatprep.subr.mxu0 0.0
    %639 = vmatpush1.msra.mxu0 0.0
    %640 = vmatprep.subr.mxu0 0.0
    %641 = vmatpush1.msra.mxu0 0.0
    %642 = vmatprep.mubr.f32.mxu0 0.0
    %643 = vmatmul.mubr.f32.gmra.mrb[0].mxu0 %v54
    %v644 = vpop.f32.mrb[0].mxu0
    %v645 = vadd.f32 0.0, %v644
    %v646 = vpop.f32.mrb[0].mxu0
    %647 = vmatprep.mubr.f32.mxu0 0.0
    %648 = vmatmul.mubr.f32.gmra.mrb[0].mxu0 %v56
    %v649 = vpop.f32.mrb[0].mxu0
    %v650 = vadd.f32 0.0, %v649
    %v651 = vpop.f32.mrb[0].mxu0
    %652 = vmatprep.mubr.f32.mxu0 0.0
    %653 = vmatmul.mubr.f32.gmra.mrb[0].mxu0 %v58
    %v654 = vpop.f32.mrb[0].mxu0
    %v655 = vadd.f32 0.0, %v654
    %v656 = vpop.f32.mrb[0].mxu0
    %657 = vmatprep.mubr.f32.mxu0 0.0
    %658 = vmatmul.mubr.f32.gmra.mrb[0].mxu0 %v60
    %v659 = vpop.f32.mrb[0].mxu0
    %v660 = vadd.f32 0.0, %v659
    %v661 = vpop.f32.mrb[0].mxu0
    %662 = vdwg.mxu0
    %663 = vmatprep.subr.mxu0 0.0
    %664 = vmatpush1.msra.mxu0 %v576
    %665 = vmatprep.subr.mxu0 0.0
    %666 = vmatpush1.msra.mxu0 %v577
    %667 = vmatprep.subr.mxu0 0.0
    %668 = vmatpush1.msra.mxu0 0.0
    %669 = vmatprep.subr.mxu0 0.0
    %670 = vmatpush1.msra.mxu0 0.0
    %671 = vmatprep.subr.mxu0 0.0
    %672 = vmatpush1.msra.mxu0 0.0
    %673 = vmatprep.subr.mxu0 0.0
    %674 = vmatpush1.msra.mxu0 0.0
    %675 = vmatprep.subr.mxu0 0.0
    %676 = vmatpush1.msra.mxu0 0.0
    %677 = vmatprep.subr.mxu0 0.0
    %678 = vmatpush1.msra.mxu0 0.0
    %679 = vmatprep.subr.mxu0 0.0
    %680 = vmatpush1.msra.mxu0 0.0
    %681 = vmatprep.subr.mxu0 0.0
    %682 = vmatpush1.msra.mxu0 0.0
    %683 = vmatprep.subr.mxu0 0.0
    %684 = vmatpush1.msra.mxu0 0.0
    %685 = vmatprep.subr.mxu0 0.0
    %686 = vmatpush1.msra.mxu0 0.0
    %687 = vmatprep.subr.mxu0 0.0
    %688 = vmatpush1.msra.mxu0 0.0
    %689 = vmatprep.subr.mxu0 0.0
    %690 = vmatpush1.msra.mxu0 0.0
    %691 = vmatprep.subr.mxu0 0.0
    %692 = vmatpush1.msra.mxu0 0.0
    %693 = vmatprep.subr.mxu0 0.0
    %694 = vmatpush1.msra.mxu0 0.0
    %695 = vmatprep.subr.mxu0 0.0
    %696 = vmatpush1.msra.mxu0 0.0
    %697 = vmatprep.subr.mxu0 0.0
    %698 = vmatpush1.msra.mxu0 0.0
    %699 = vmatprep.subr.mxu0 0.0
    %700 = vmatpush1.msra.mxu0 0.0
    %701 = vmatprep.subr.mxu0 0.0
    %702 = vmatpush1.msra.mxu0 0.0
    %703 = vmatprep.subr.mxu0 0.0
    %704 = vmatpush1.msra.mxu0 0.0
    %705 = vmatprep.subr.mxu0 0.0
    %706 = vmatpush1.msra.mxu0 0.0
    %707 = vmatprep.subr.mxu0 0.0
    %708 = vmatpush1.msra.mxu0 0.0
    %709 = vmatprep.subr.mxu0 0.0
    %710 = vmatpush1.msra.mxu0 0.0
    %711 = vmatprep.subr.mxu0 0.0
    %712 = vmatpush1.msra.mxu0 0.0
    %713 = vmatprep.subr.mxu0 0.0
    %714 = vmatpush1.msra.mxu0 0.0
    %715 = vmatprep.subr.mxu0 0.0
    %716 = vmatpush1.msra.mxu0 0.0
    %717 = vmatprep.subr.mxu0 0.0
    %718 = vmatpush1.msra.mxu0 0.0
    %719 = vmatprep.subr.mxu0 0.0
    %720 = vmatpush1.msra.mxu0 0.0
    %721 = vmatprep.subr.mxu0 0.0
    %722 = vmatpush1.msra.mxu0 0.0
    %723 = vmatprep.subr.mxu0 0.0
    %724 = vmatpush1.msra.mxu0 0.0
    %725 = vmatprep.subr.mxu0 0.0
    %726 = vmatpush1.msra.mxu0 0.0
    %727 = vmatprep.mubr.f32.mxu0 0.0
    %728 = vmatmul.mubr.f32.gmra.mrb[0].mxu0 %v54
    %v729 = vpop.f32.mrb[0].mxu0
    %v730 = vadd.f32 0.0, %v729
    %v731 = vpop.f32.mrb[0].mxu0
    %732 = vmatprep.mubr.f32.mxu0 0.0
    %733 = vmatmul.mubr.f32.gmra.mrb[0].mxu0 %v56
    %v734 = vpop.f32.mrb[0].mxu0
    %v735 = vadd.f32 0.0, %v734
    %v736 = vpop.f32.mrb[0].mxu0
    %737 = vmatprep.mubr.f32.mxu0 0.0
    %738 = vmatmul.mubr.f32.gmra.mrb[0].mxu0 %v58
    %v739 = vpop.f32.mrb[0].mxu0
    %v740 = vadd.f32 0.0, %v739
    %v741 = vpop.f32.mrb[0].mxu0
    %742 = vmatprep.mubr.f32.mxu0 0.0
    %743 = vmatmul.mubr.f32.gmra.mrb[0].mxu0 %v60
    %v744 = vpop.f32.mrb[0].mxu0
    %v745 = vadd.f32 0.0, %v744
    %v746 = vpop.f32.mrb[0].mxu0
    %747 = vdwg.mxu0
    %752 = vrot.lane.b32.xlu0 %v655, 16
    %v753 = vpop.permute.xlu0 %752
    %754 = vrot.lane.b32.xlu0 %v660, 16
    %v755 = vpop.permute.xlu0 %754
    %756 = vrot.lane.b32.xlu0 %v740, 16
    %v757 = vpop.permute.xlu0 %756
    %758 = vrot.lane.b32.xlu0 %v745, 16
    %v759 = vpop.permute.xlu0 %758
    %768 = vrot.lane.b32.xlu0 %v574, 32
    %v769 = vpop.permute.xlu0 %768
    %770 = vrot.lane.b32.xlu0 %v575, 32
    %v771 = vpop.permute.xlu0 %770
    %772 = vrot.lane.b32.xlu0 %v576, 32
    %v773 = vpop.permute.xlu0 %772
    %774 = vrot.lane.b32.xlu0 %v577, 32
    %v775 = vpop.permute.xlu0 %774
    %v780 = vsel %vm53, %v645, %v753
    %v781 = vsel %vm53, %v650, %v755
    %v782 = vsel %vm53, %v730, %v757
    %v783 = vsel %vm53, %v735, %v759
    %v784 = vsel %vm268, %v780, %v769
    %v785 = vsel %vm268, %v781, %v771
    %v786 = vsel %vm268, %v782, %v773
    %v787 = vsel %vm268, %v783, %v775
    %v789 = vsel %vm273, %v784, 0
    %v792 = vsel %vm273, %v785, 0
    %v795 = vsel %vm273, %v786, 0
    %v798 = vsel %vm273, %v787, 0
    %800 = vmatprep.subr.mxu0 0.0
    %801 = vmatpush1.msra.mxu0 %v29
    %802 = vmatprep.subr.mxu0 0.0
    %803 = vmatpush1.msra.mxu0 %v30
    %804 = vmatprep.subr.mxu0 0.0
    %805 = vmatpush1.msra.mxu0 %v31
    %806 = vmatprep.subr.mxu0 0.0
    %807 = vmatpush1.msra.mxu0 %v32
    %808 = vmatprep.subr.mxu0 0.0
    %809 = vmatpush1.msra.mxu0 %v33
    %810 = vmatprep.subr.mxu0 0.0
    %811 = vmatpush1.msra.mxu0 %v34
    %812 = vmatprep.subr.mxu0 0.0
    %813 = vmatpush1.msra.mxu0 0.0
    %814 = vmatprep.subr.mxu0 0.0
    %815 = vmatpush1.msra.mxu0 0.0
    %816 = vmatprep.subr.mxu0 0.0
    %817 = vmatpush1.msra.mxu0 0.0
    %818 = vmatprep.subr.mxu0 0.0
    %819 = vmatpush1.msra.mxu0 0.0
    %820 = vmatprep.subr.mxu0 0.0
    %821 = vmatpush1.msra.mxu0 0.0
    %822 = vmatprep.subr.mxu0 0.0
    %823 = vmatpush1.msra.mxu0 0.0
    %824 = vmatprep.subr.mxu0 0.0
    %825 = vmatpush1.msra.mxu0 0.0
    %826 = vmatprep.subr.mxu0 0.0
    %827 = vmatpush1.msra.mxu0 0.0
    %828 = vmatprep.subr.mxu0 0.0
    %829 = vmatpush1.msra.mxu0 0.0
    %830 = vmatprep.subr.mxu0 0.0
    %831 = vmatpush1.msra.mxu0 0.0
    %832 = vmatprep.subr.mxu0 0.0
    %833 = vmatpush1.msra.mxu0 0.0
    %834 = vmatprep.subr.mxu0 0.0
    %835 = vmatpush1.msra.mxu0 0.0
    %836 = vmatprep.subr.mxu0 0.0
    %837 = vmatpush1.msra.mxu0 0.0
    %838 = vmatprep.subr.mxu0 0.0
    %839 = vmatpush1.msra.mxu0 0.0
    %840 = vmatprep.subr.mxu0 0.0
    %841 = vmatpush1.msra.mxu0 0.0
    %842 = vmatprep.subr.mxu0 0.0
    %843 = vmatpush1.msra.mxu0 0.0
    %844 = vmatprep.subr.mxu0 0.0
    %845 = vmatpush1.msra.mxu0 0.0
    %846 = vmatprep.subr.mxu0 0.0
    %847 = vmatpush1.msra.mxu0 0.0
    %848 = vmatprep.subr.mxu0 0.0
    %849 = vmatpush1.msra.mxu0 0.0
    %850 = vmatprep.subr.mxu0 0.0
    %851 = vmatpush1.msra.mxu0 0.0
    %852 = vmatprep.subr.mxu0 0.0
    %853 = vmatpush1.msra.mxu0 0.0
    %854 = vmatprep.subr.mxu0 0.0
    %855 = vmatpush1.msra.mxu0 0.0
    %856 = vmatprep.subr.mxu0 0.0
    %857 = vmatpush1.msra.mxu0 0.0
    %858 = vmatprep.subr.mxu0 0.0
    %859 = vmatpush1.msra.mxu0 0.0
    %860 = vmatprep.subr.mxu0 0.0
    %861 = vmatpush1.msra.mxu0 0.0
    %862 = vmatprep.subr.mxu0 0.0
    %863 = vmatpush1.msra.mxu0 0.0
    %864 = vmatprep.mubr.f32.mxu0 0.0
    %865 = vmatmul.mubr.f32.gmra.mrb[0].mxu0 %v789
    %v866 = vpop.f32.mrb[0].mxu0
    %v867 = vadd.f32 %v40, %v866
    %v868 = vpop.f32.mrb[0].mxu0
    %869 = vmatprep.mubr.f32.mxu0 0.0
    %870 = vmatmul.mubr.f32.gmra.mrb[0].mxu0 %v792
    %v871 = vpop.f32.mrb[0].mxu0
    %v872 = vadd.f32 %v40, %v871
    %v873 = vpop.f32.mrb[0].mxu0
    %874 = vmatprep.mubr.f32.mxu0 0.0
    %875 = vmatmul.mubr.f32.gmra.mrb[0].mxu0 %v795
    %v876 = vpop.f32.mrb[0].mxu0
    %v877 = vadd.f32 %v40, %v876
    %v878 = vpop.f32.mrb[0].mxu0
    %879 = vmatprep.mubr.f32.mxu0 0.0
    %880 = vmatmul.mubr.f32.gmra.mrb[0].mxu0 %v798
    %v881 = vpop.f32.mrb[0].mxu0
    %v882 = vadd.f32 %v40, %v881
    %v883 = vpop.f32.mrb[0].mxu0
    %884 = vdwg.mxu0
    %v885 = vxor.u32 %v867, 2147483648
    %v886 = vxor.u32 %v872, 2147483648
    %v887 = vxor.u32 %v877, 2147483648
    %v888 = vxor.u32 %v882, 2147483648
    %v889 = vmul.f32 %v885, 1.442695
    %v890 = vpow.pop %v889
    %v891 = vmul.f32 %v886, 1.442695
    %v892 = vpow.pop %v891
    %v893 = vmul.f32 %v887, 1.442695
    %v894 = vpow.pop %v893
    %v895 = vmul.f32 %v888, 1.442695
    %v896 = vpow.pop %v895
    %v897 = vadd.f32 %v890, 1.0
    %v898 = vadd.f32 %v892, 1.0
    %v899 = vadd.f32 %v894, 1.0
    %v900 = vadd.f32 %v896, 1.0
    %v901 = vrcp.pop %v897
    %v902 = vmul.f32 1.0, %v901
    %v903 = vrcp.pop %v898
    %v904 = vmul.f32 1.0, %v903
    %v905 = vrcp.pop %v899
    %v906 = vmul.f32 1.0, %v905
    %v907 = vrcp.pop %v900
    %v908 = vmul.f32 1.0, %v907
    %909 = vrot.lane.b32.xlu0 %v574, 16
    %v910 = vpop.permute.xlu0 %909
    %911 = vrot.lane.b32.xlu0 %v575, 16
    %v912 = vpop.permute.xlu0 %911
    %913 = vrot.lane.b32.xlu0 %v576, 16
    %v914 = vpop.permute.xlu0 %913
    %915 = vrot.lane.b32.xlu0 %v577, 16
    %v916 = vpop.permute.xlu0 %915
    %v921 = vmul.f32 %v902, %v910
    %v922 = vmul.f32 %v904, %v912
    %v923 = vmul.f32 %v906, %v914
    %v924 = vmul.f32 %v908, %v916
    %929 = vrot.lane.b32.xlu0 %v921, 112
    %v930 = vpop.permute.xlu0 %929
    %931 = vrot.lane.b32.xlu0 %v922, 112
    %v932 = vpop.permute.xlu0 %931
    %933 = vrot.lane.b32.xlu0 %v923, 112
    %v934 = vpop.permute.xlu0 %933
    %935 = vrot.lane.b32.xlu0 %v924, 112
    %v936 = vpop.permute.xlu0 %935
    %v937 = vsel %vm53, %v930, 0
    %v939 = vsel %vm53, %v932, 0
    %v941 = vsel %vm53, %v934, 0
    %v943 = vsel %vm53, %v936, 0
    %945 = vmatprep.subr.mxu0 0.0
    %946 = vmatpush1.msra.mxu0 %v424
    %947 = vmatprep.subr.mxu0 0.0
    %948 = vmatpush1.msra.mxu0 %v426
    %949 = vmatprep.subr.mxu0 0.0
    %950 = vmatpush1.msra.mxu0 0.0
    %951 = vmatprep.subr.mxu0 0.0
    %952 = vmatpush1.msra.mxu0 0.0
    %953 = vmatprep.subr.mxu0 0.0
    %954 = vmatpush1.msra.mxu0 0.0
    %955 = vmatprep.subr.mxu0 0.0
    %956 = vmatpush1.msra.mxu0 0.0
    %957 = vmatprep.subr.mxu0 0.0
    %958 = vmatpush1.msra.mxu0 0.0
    %959 = vmatprep.subr.mxu0 0.0
    %960 = vmatpush1.msra.mxu0 0.0
    %961 = vmatprep.subr.mxu0 0.0
    %962 = vmatpush1.msra.mxu0 0.0
    %963 = vmatprep.subr.mxu0 0.0
    %964 = vmatpush1.msra.mxu0 0.0
    %965 = vmatprep.subr.mxu0 0.0
    %966 = vmatpush1.msra.mxu0 0.0
    %967 = vmatprep.subr.mxu0 0.0
    %968 = vmatpush1.msra.mxu0 0.0
    %969 = vmatprep.subr.mxu0 0.0
    %970 = vmatpush1.msra.mxu0 0.0
    %971 = vmatprep.subr.mxu0 0.0
    %972 = vmatpush1.msra.mxu0 0.0
    %973 = vmatprep.subr.mxu0 0.0
    %974 = vmatpush1.msra.mxu0 0.0
    %975 = vmatprep.subr.mxu0 0.0
    %976 = vmatpush1.msra.mxu0 0.0
    %977 = vmatprep.subr.mxu0 0.0
    %978 = vmatpush1.msra.mxu0 0.0
    %979 = vmatprep.subr.mxu0 0.0
    %980 = vmatpush1.msra.mxu0 0.0
    %981 = vmatprep.subr.mxu0 0.0
    %982 = vmatpush1.msra.mxu0 0.0
    %983 = vmatprep.subr.mxu0 0.0
    %984 = vmatpush1.msra.mxu0 0.0
    %985 = vmatprep.subr.mxu0 0.0
    %986 = vmatpush1.msra.mxu0 0.0
    %987 = vmatprep.subr.mxu0 0.0
    %988 = vmatpush1.msra.mxu0 0.0
    %989 = vmatprep.subr.mxu0 0.0
    %990 = vmatpush1.msra.mxu0 0.0
    %991 = vmatprep.subr.mxu0 0.0
    %992 = vmatpush1.msra.mxu0 0.0
    %993 = vmatprep.subr.mxu0 0.0
    %994 = vmatpush1.msra.mxu0 0.0
    %995 = vmatprep.subr.mxu0 0.0
    %996 = vmatpush1.msra.mxu0 0.0
    %997 = vmatprep.subr.mxu0 0.0
    %998 = vmatpush1.msra.mxu0 0.0
    %999 = vmatprep.subr.mxu0 0.0
    %1000 = vmatpush1.msra.mxu0 0.0
    %1001 = vmatprep.subr.mxu0 0.0
    %1002 = vmatpush1.msra.mxu0 0.0
    %1003 = vmatprep.subr.mxu0 0.0
    %1004 = vmatpush1.msra.mxu0 0.0
    %1005 = vmatprep.subr.mxu0 0.0
    %1006 = vmatpush1.msra.mxu0 0.0
    %1007 = vmatprep.subr.mxu0 0.0
    %1008 = vmatpush1.msra.mxu0 0.0
    %1009 = vmatprep.mubr.f32.mxu0 0.0
    %1010 = vmatmul.mubr.f32.gmra.mrb[0].mxu0 %v937
    %v1011 = vpop.f32.mrb[0].mxu0
    %v1012 = vadd.f32 0.0, %v1011
    %v1013 = vpop.f32.mrb[0].mxu0
    %1014 = vmatprep.mubr.f32.mxu0 0.0
    %1015 = vmatmul.mubr.f32.gmra.mrb[0].mxu0 %v939
    %v1016 = vpop.f32.mrb[0].mxu0
    %v1017 = vadd.f32 0.0, %v1016
    %v1018 = vpop.f32.mrb[0].mxu0
    %1019 = vmatprep.mubr.f32.mxu0 0.0
    %1020 = vmatmul.mubr.f32.gmra.mrb[0].mxu0 %v941
    %v1021 = vpop.f32.mrb[0].mxu0
    %v1022 = vadd.f32 0.0, %v1021
    %v1023 = vpop.f32.mrb[0].mxu0
    %1024 = vmatprep.mubr.f32.mxu0 0.0
    %1025 = vmatmul.mubr.f32.gmra.mrb[0].mxu0 %v943
    %v1026 = vpop.f32.mrb[0].mxu0
    %v1027 = vadd.f32 0.0, %v1026
    %v1028 = vpop.f32.mrb[0].mxu0
    %1029 = vdwg.mxu0
    %1034 = vrot.lane.b32.xlu0 %v1012, 32
    %v1035 = vpop.permute.xlu0 %1034
    %1036 = vrot.lane.b32.xlu0 %v1017, 32
    %v1037 = vpop.permute.xlu0 %1036
    %1038 = vrot.lane.b32.xlu0 %v1022, 32
    %v1039 = vpop.permute.xlu0 %1038
    %1040 = vrot.lane.b32.xlu0 %v1027, 32
    %v1041 = vpop.permute.xlu0 %1040
    %v1046 = vadd.f32 %v867, %v1035
    %v1047 = vadd.f32 %v872, %v1037
    %v1048 = vadd.f32 %v877, %v1039
    %v1049 = vadd.f32 %v882, %v1041
    %v1050 = vtanh.pop %v1046
    %v1051 = vtanh.pop %v1047
    %v1052 = vtanh.pop %v1048
    %v1053 = vtanh.pop %v1049
    %v1054 = vsub.f32 1.0, %v902
    %v1055 = vsub.f32 1.0, %v904
    %v1056 = vsub.f32 1.0, %v906
    %v1057 = vsub.f32 1.0, %v908
    %v1058 = vmul.f32 %v1054, %v574
    %v1059 = vmul.f32 %v1055, %v575
    %v1060 = vmul.f32 %v1056, %v576
    %v1061 = vmul.f32 %v1057, %v577
    %1066 = vrot.lane.b32.xlu0 %v1050, 96
    %v1067 = vpop.permute.xlu0 %1066
    %1068 = vrot.lane.b32.xlu0 %v1051, 96
    %v1069 = vpop.permute.xlu0 %1068
    %1070 = vrot.lane.b32.xlu0 %v1052, 96
    %v1071 = vpop.permute.xlu0 %1070
    %1072 = vrot.lane.b32.xlu0 %v1053, 96
    %v1073 = vpop.permute.xlu0 %1072
    %v1078 = vmul.f32 %v902, %v1067
    %v1079 = vmul.f32 %v904, %v1069
    %v1080 = vmul.f32 %v906, %v1071
    %v1081 = vmul.f32 %v908, %v1073
    %v1082 = vadd.f32 %v1058, %v1078
    %v1083 = vadd.f32 %v1059, %v1079
    %v1084 = vadd.f32 %v1060, %v1080
    %v1085 = vadd.f32 %v1061, %v1081
    %1086 = vmatprep.subr.mxu0 0.0
    %1087 = vmatpush1.msra.mxu0 %v1082
    %1088 = vmatprep.subr.mxu0 0.0
    %1089 = vmatpush1.msra.mxu0 %v1083
    %1090 = vmatprep.subr.mxu0 0.0
    %1091 = vmatpush1.msra.mxu0 0.0
    %1092 = vmatprep.subr.mxu0 0.0
    %1093 = vmatpush1.msra.mxu0 0.0
    %1094 = vmatprep.subr.mxu0 0.0
    %1095 = vmatpush1.msra.mxu0 0.0
    %1096 = vmatprep.subr.mxu0 0.0
    %1097 = vmatpush1.msra.mxu0 0.0
    %1098 = vmatprep.subr.mxu0 0.0
    %1099 = vmatpush1.msra.mxu0 0.0
    %1100 = vmatprep.subr.mxu0 0.0
    %1101 = vmatpush1.msra.mxu0 0.0
    %1102 = vmatprep.subr.mxu0 0.0
    %1103 = vmatpush1.msra.mxu0 0.0
    %1104 = vmatprep.subr.mxu0 0.0
    %1105 = vmatpush1.msra.mxu0 0.0
    %1106 = vmatprep.subr.mxu0 0.0
    %1107 = vmatpush1.msra.mxu0 0.0
    %1108 = vmatprep.subr.mxu0 0.0
    %1109 = vmatpush1.msra.mxu0 0.0
    %1110 = vmatprep.subr.mxu0 0.0
    %1111 = vmatpush1.msra.mxu0 0.0
    %1112 = vmatprep.subr.mxu0 0.0
    %1113 = vmatpush1.msra.mxu0 0.0
    %1114 = vmatprep.subr.mxu0 0.0
    %1115 = vmatpush1.msra.mxu0 0.0
    %1116 = vmatprep.subr.mxu0 0.0
    %1117 = vmatpush1.msra.mxu0 0.0
    %1118 = vmatprep.subr.mxu0 0.0
    %1119 = vmatpush1.msra.mxu0 0.0
    %1120 = vmatprep.subr.mxu0 0.0
    %1121 = vmatpush1.msra.mxu0 0.0
    %1122 = vmatprep.subr.mxu0 0.0
    %1123 = vmatpush1.msra.mxu0 0.0
    %1124 = vmatprep.subr.mxu0 0.0
    %1125 = vmatpush1.msra.mxu0 0.0
    %1126 = vmatprep.subr.mxu0 0.0
    %1127 = vmatpush1.msra.mxu0 0.0
    %1128 = vmatprep.subr.mxu0 0.0
    %1129 = vmatpush1.msra.mxu0 0.0
    %1130 = vmatprep.subr.mxu0 0.0
    %1131 = vmatpush1.msra.mxu0 0.0
    %1132 = vmatprep.subr.mxu0 0.0
    %1133 = vmatpush1.msra.mxu0 0.0
    %1134 = vmatprep.subr.mxu0 0.0
    %1135 = vmatpush1.msra.mxu0 0.0
    %1136 = vmatprep.subr.mxu0 0.0
    %1137 = vmatpush1.msra.mxu0 0.0
    %1138 = vmatprep.subr.mxu0 0.0
    %1139 = vmatpush1.msra.mxu0 0.0
    %1140 = vmatprep.subr.mxu0 0.0
    %1141 = vmatpush1.msra.mxu0 0.0
    %1142 = vmatprep.subr.mxu0 0.0
    %1143 = vmatpush1.msra.mxu0 0.0
    %1144 = vmatprep.subr.mxu0 0.0
    %1145 = vmatpush1.msra.mxu0 0.0
    %1146 = vmatprep.subr.mxu0 0.0
    %1147 = vmatpush1.msra.mxu0 0.0
    %1148 = vmatprep.subr.mxu0 0.0
    %1149 = vmatpush1.msra.mxu0 0.0
    %1150 = vmatprep.mubr.f32.mxu0 0.0
    %1151 = vmatmul.mubr.f32.gmra.mrb[0].mxu0 %v54
    %v1152 = vpop.f32.mrb[0].mxu0
    %v1153 = vadd.f32 0.0, %v1152
    %v1154 = vpop.f32.mrb[0].mxu0
    %1155 = vmatprep.mubr.f32.mxu0 0.0
    %1156 = vmatmul.mubr.f32.gmra.mrb[0].mxu0 %v56
    %v1157 = vpop.f32.mrb[0].mxu0
    %v1158 = vadd.f32 0.0, %v1157
    %v1159 = vpop.f32.mrb[0].mxu0
    %1160 = vmatprep.mubr.f32.mxu0 0.0
    %1161 = vmatmul.mubr.f32.gmra.mrb[0].mxu0 %v58
    %v1162 = vpop.f32.mrb[0].mxu0
    %v1163 = vadd.f32 0.0, %v1162
    %v1164 = vpop.f32.mrb[0].mxu0
    %1165 = vmatprep.mubr.f32.mxu0 0.0
    %1166 = vmatmul.mubr.f32.gmra.mrb[0].mxu0 %v60
    %v1167 = vpop.f32.mrb[0].mxu0
    %v1168 = vadd.f32 0.0, %v1167
    %v1169 = vpop.f32.mrb[0].mxu0
    %1170 = vdwg.mxu0
    %1171 = vmatprep.subr.mxu0 0.0
    %1172 = vmatpush1.msra.mxu0 %v1084
    %1173 = vmatprep.subr.mxu0 0.0
    %1174 = vmatpush1.msra.mxu0 %v1085
    %1175 = vmatprep.subr.mxu0 0.0
    %1176 = vmatpush1.msra.mxu0 0.0
    %1177 = vmatprep.subr.mxu0 0.0
    %1178 = vmatpush1.msra.mxu0 0.0
    %1179 = vmatprep.subr.mxu0 0.0
    %1180 = vmatpush1.msra.mxu0 0.0
    %1181 = vmatprep.subr.mxu0 0.0
    %1182 = vmatpush1.msra.mxu0 0.0
    %1183 = vmatprep.subr.mxu0 0.0
    %1184 = vmatpush1.msra.mxu0 0.0
    %1185 = vmatprep.subr.mxu0 0.0
    %1186 = vmatpush1.msra.mxu0 0.0
    %1187 = vmatprep.subr.mxu0 0.0
    %1188 = vmatpush1.msra.mxu0 0.0
    %1189 = vmatprep.subr.mxu0 0.0
    %1190 = vmatpush1.msra.mxu0 0.0
    %1191 = vmatprep.subr.mxu0 0.0
    %1192 = vmatpush1.msra.mxu0 0.0
    %1193 = vmatprep.subr.mxu0 0.0
    %1194 = vmatpush1.msra.mxu0 0.0
    %1195 = vmatprep.subr.mxu0 0.0
    %1196 = vmatpush1.msra.mxu0 0.0
    %1197 = vmatprep.subr.mxu0 0.0
    %1198 = vmatpush1.msra.mxu0 0.0
    %1199 = vmatprep.subr.mxu0 0.0
    %1200 = vmatpush1.msra.mxu0 0.0
    %1201 = vmatprep.subr.mxu0 0.0
    %1202 = vmatpush1.msra.mxu0 0.0
    %1203 = vmatprep.subr.mxu0 0.0
    %1204 = vmatpush1.msra.mxu0 0.0
    %1205 = vmatprep.subr.mxu0 0.0
    %1206 = vmatpush1.msra.mxu0 0.0
    %1207 = vmatprep.subr.mxu0 0.0
    %1208 = vmatpush1.msra.mxu0 0.0
    %1209 = vmatprep.subr.mxu0 0.0
    %1210 = vmatpush1.msra.mxu0 0.0
    %1211 = vmatprep.subr.mxu0 0.0
    %1212 = vmatpush1.msra.mxu0 0.0
    %1213 = vmatprep.subr.mxu0 0.0
    %1214 = vmatpush1.msra.mxu0 0.0
    %1215 = vmatprep.subr.mxu0 0.0
    %1216 = vmatpush1.msra.mxu0 0.0
    %1217 = vmatprep.subr.mxu0 0.0
    %1218 = vmatpush1.msra.mxu0 0.0
    %1219 = vmatprep.subr.mxu0 0.0
    %1220 = vmatpush1.msra.mxu0 0.0
    %1221 = vmatprep.subr.mxu0 0.0
    %1222 = vmatpush1.msra.mxu0 0.0
    %1223 = vmatprep.subr.mxu0 0.0
    %1224 = vmatpush1.msra.mxu0 0.0
    %1225 = vmatprep.subr.mxu0 0.0
    %1226 = vmatpush1.msra.mxu0 0.0
    %1227 = vmatprep.subr.mxu0 0.0
    %1228 = vmatpush1.msra.mxu0 0.0
    %1229 = vmatprep.subr.mxu0 0.0
    %1230 = vmatpush1.msra.mxu0 0.0
    %1231 = vmatprep.subr.mxu0 0.0
    %1232 = vmatpush1.msra.mxu0 0.0
    %1233 = vmatprep.subr.mxu0 0.0
    %1234 = vmatpush1.msra.mxu0 0.0
    %1235 = vmatprep.mubr.f32.mxu0 0.0
    %1236 = vmatmul.mubr.f32.gmra.mrb[0].mxu0 %v54
    %v1237 = vpop.f32.mrb[0].mxu0
    %v1238 = vadd.f32 0.0, %v1237
    %v1239 = vpop.f32.mrb[0].mxu0
    %1240 = vmatprep.mubr.f32.mxu0 0.0
    %1241 = vmatmul.mubr.f32.gmra.mrb[0].mxu0 %v56
    %v1242 = vpop.f32.mrb[0].mxu0
    %v1243 = vadd.f32 0.0, %v1242
    %v1244 = vpop.f32.mrb[0].mxu0
    %1245 = vmatprep.mubr.f32.mxu0 0.0
    %1246 = vmatmul.mubr.f32.gmra.mrb[0].mxu0 %v58
    %v1247 = vpop.f32.mrb[0].mxu0
    %v1248 = vadd.f32 0.0, %v1247
    %v1249 = vpop.f32.mrb[0].mxu0
    %1250 = vmatprep.mubr.f32.mxu0 0.0
    %1251 = vmatmul.mubr.f32.gmra.mrb[0].mxu0 %v60
    %v1252 = vpop.f32.mrb[0].mxu0
    %v1253 = vadd.f32 0.0, %v1252
    %v1254 = vpop.f32.mrb[0].mxu0
    %1255 = vdwg.mxu0
    %1260 = vrot.lane.b32.xlu0 %v1163, 16
    %v1261 = vpop.permute.xlu0 %1260
    %1262 = vrot.lane.b32.xlu0 %v1168, 16
    %v1263 = vpop.permute.xlu0 %1262
    %1264 = vrot.lane.b32.xlu0 %v1248, 16
    %v1265 = vpop.permute.xlu0 %1264
    %1266 = vrot.lane.b32.xlu0 %v1253, 16
    %v1267 = vpop.permute.xlu0 %1266
    %1276 = vrot.lane.b32.xlu0 %v1082, 32
    %v1277 = vpop.permute.xlu0 %1276
    %1278 = vrot.lane.b32.xlu0 %v1083, 32
    %v1279 = vpop.permute.xlu0 %1278
    %1280 = vrot.lane.b32.xlu0 %v1084, 32
    %v1281 = vpop.permute.xlu0 %1280
    %1282 = vrot.lane.b32.xlu0 %v1085, 32
    %v1283 = vpop.permute.xlu0 %1282
    %v1288 = vsel %vm53, %v1153, %v1261
    %v1289 = vsel %vm53, %v1158, %v1263
    %v1290 = vsel %vm53, %v1238, %v1265
    %v1291 = vsel %vm53, %v1243, %v1267
    %v1292 = vsel %vm268, %v1288, %v1277
    %v1293 = vsel %vm268, %v1289, %v1279
    %v1294 = vsel %vm268, %v1290, %v1281
    %v1295 = vsel %vm268, %v1291, %v1283
    %v1297 = vsel %vm273, %v1292, 0
    %v1300 = vsel %vm273, %v1293, 0
    %v1303 = vsel %vm273, %v1294, 0
    %v1306 = vsel %vm273, %v1295, 0
    %1308 = vmatprep.subr.mxu0 0.0
    %1309 = vmatpush1.msra.mxu0 %v29
    %1310 = vmatprep.subr.mxu0 0.0
    %1311 = vmatpush1.msra.mxu0 %v30
    %1312 = vmatprep.subr.mxu0 0.0
    %1313 = vmatpush1.msra.mxu0 %v31
    %1314 = vmatprep.subr.mxu0 0.0
    %1315 = vmatpush1.msra.mxu0 %v32
    %1316 = vmatprep.subr.mxu0 0.0
    %1317 = vmatpush1.msra.mxu0 %v33
    %1318 = vmatprep.subr.mxu0 0.0
    %1319 = vmatpush1.msra.mxu0 %v34
    %1320 = vmatprep.subr.mxu0 0.0
    %1321 = vmatpush1.msra.mxu0 0.0
    %1322 = vmatprep.subr.mxu0 0.0
    %1323 = vmatpush1.msra.mxu0 0.0
    %1324 = vmatprep.subr.mxu0 0.0
    %1325 = vmatpush1.msra.mxu0 0.0
    %1326 = vmatprep.subr.mxu0 0.0
    %1327 = vmatpush1.msra.mxu0 0.0
    %1328 = vmatprep.subr.mxu0 0.0
    %1329 = vmatpush1.msra.mxu0 0.0
    %1330 = vmatprep.subr.mxu0 0.0
    %1331 = vmatpush1.msra.mxu0 0.0
    %1332 = vmatprep.subr.mxu0 0.0
    %1333 = vmatpush1.msra.mxu0 0.0
    %1334 = vmatprep.subr.mxu0 0.0
    %1335 = vmatpush1.msra.mxu0 0.0
    %1336 = vmatprep.subr.mxu0 0.0
    %1337 = vmatpush1.msra.mxu0 0.0
    %1338 = vmatprep.subr.mxu0 0.0
    %1339 = vmatpush1.msra.mxu0 0.0
    %1340 = vmatprep.subr.mxu0 0.0
    %1341 = vmatpush1.msra.mxu0 0.0
    %1342 = vmatprep.subr.mxu0 0.0
    %1343 = vmatpush1.msra.mxu0 0.0
    %1344 = vmatprep.subr.mxu0 0.0
    %1345 = vmatpush1.msra.mxu0 0.0
    %1346 = vmatprep.subr.mxu0 0.0
    %1347 = vmatpush1.msra.mxu0 0.0
    %1348 = vmatprep.subr.mxu0 0.0
    %1349 = vmatpush1.msra.mxu0 0.0
    %1350 = vmatprep.subr.mxu0 0.0
    %1351 = vmatpush1.msra.mxu0 0.0
    %1352 = vmatprep.subr.mxu0 0.0
    %1353 = vmatpush1.msra.mxu0 0.0
    %1354 = vmatprep.subr.mxu0 0.0
    %1355 = vmatpush1.msra.mxu0 0.0
    %1356 = vmatprep.subr.mxu0 0.0
    %1357 = vmatpush1.msra.mxu0 0.0
    %1358 = vmatprep.subr.mxu0 0.0
    %1359 = vmatpush1.msra.mxu0 0.0
    %1360 = vmatprep.subr.mxu0 0.0
    %1361 = vmatpush1.msra.mxu0 0.0
    %1362 = vmatprep.subr.mxu0 0.0
    %1363 = vmatpush1.msra.mxu0 0.0
    %1364 = vmatprep.subr.mxu0 0.0
    %1365 = vmatpush1.msra.mxu0 0.0
    %1366 = vmatprep.subr.mxu0 0.0
    %1367 = vmatpush1.msra.mxu0 0.0
    %1368 = vmatprep.subr.mxu0 0.0
    %1369 = vmatpush1.msra.mxu0 0.0
    %1370 = vmatprep.subr.mxu0 0.0
    %1371 = vmatpush1.msra.mxu0 0.0
    %1372 = vmatprep.mubr.f32.mxu0 0.0
    %1373 = vmatmul.mubr.f32.gmra.mrb[0].mxu0 %v1297
    %v1374 = vpop.f32.mrb[0].mxu0
    %v1375 = vadd.f32 %v40, %v1374
    %v1376 = vpop.f32.mrb[0].mxu0
    %1377 = vmatprep.mubr.f32.mxu0 0.0
    %1378 = vmatmul.mubr.f32.gmra.mrb[0].mxu0 %v1300
    %v1379 = vpop.f32.mrb[0].mxu0
    %v1380 = vadd.f32 %v40, %v1379
    %v1381 = vpop.f32.mrb[0].mxu0
    %1382 = vmatprep.mubr.f32.mxu0 0.0
    %1383 = vmatmul.mubr.f32.gmra.mrb[0].mxu0 %v1303
    %v1384 = vpop.f32.mrb[0].mxu0
    %v1385 = vadd.f32 %v40, %v1384
    %v1386 = vpop.f32.mrb[0].mxu0
    %1387 = vmatprep.mubr.f32.mxu0 0.0
    %1388 = vmatmul.mubr.f32.gmra.mrb[0].mxu0 %v1306
    %v1389 = vpop.f32.mrb[0].mxu0
    %v1390 = vadd.f32 %v40, %v1389
    %v1391 = vpop.f32.mrb[0].mxu0
    %1392 = vdwg.mxu0
    %v1393 = vxor.u32 %v1375, 2147483648
    %v1394 = vxor.u32 %v1380, 2147483648
    %v1395 = vxor.u32 %v1385, 2147483648
    %v1396 = vxor.u32 %v1390, 2147483648
    %v1397 = vmul.f32 %v1393, 1.442695
    %v1398 = vpow.pop %v1397
    %v1399 = vmul.f32 %v1394, 1.442695
    %v1400 = vpow.pop %v1399
    %v1401 = vmul.f32 %v1395, 1.442695
    %v1402 = vpow.pop %v1401
    %v1403 = vmul.f32 %v1396, 1.442695
    %v1404 = vpow.pop %v1403
    %v1405 = vadd.f32 %v1398, 1.0
    %v1406 = vadd.f32 %v1400, 1.0
    %v1407 = vadd.f32 %v1402, 1.0
    %v1408 = vadd.f32 %v1404, 1.0
    %v1409 = vrcp.pop %v1405
    %v1410 = vmul.f32 1.0, %v1409
    %v1411 = vrcp.pop %v1406
    %v1412 = vmul.f32 1.0, %v1411
    %v1413 = vrcp.pop %v1407
    %v1414 = vmul.f32 1.0, %v1413
    %v1415 = vrcp.pop %v1408
    %v1416 = vmul.f32 1.0, %v1415
    %1417 = vrot.lane.b32.xlu0 %v1082, 16
    %v1418 = vpop.permute.xlu0 %1417
    %1419 = vrot.lane.b32.xlu0 %v1083, 16
    %v1420 = vpop.permute.xlu0 %1419
    %1421 = vrot.lane.b32.xlu0 %v1084, 16
    %v1422 = vpop.permute.xlu0 %1421
    %1423 = vrot.lane.b32.xlu0 %v1085, 16
    %v1424 = vpop.permute.xlu0 %1423
    %v1429 = vmul.f32 %v1410, %v1418
    %v1430 = vmul.f32 %v1412, %v1420
    %v1431 = vmul.f32 %v1414, %v1422
    %v1432 = vmul.f32 %v1416, %v1424
    %1437 = vrot.lane.b32.xlu0 %v1429, 112
    %v1438 = vpop.permute.xlu0 %1437
    %1439 = vrot.lane.b32.xlu0 %v1430, 112
    %v1440 = vpop.permute.xlu0 %1439
    %1441 = vrot.lane.b32.xlu0 %v1431, 112
    %v1442 = vpop.permute.xlu0 %1441
    %1443 = vrot.lane.b32.xlu0 %v1432, 112
    %v1444 = vpop.permute.xlu0 %1443
    %v1445 = vsel %vm53, %v1438, 0
    %v1447 = vsel %vm53, %v1440, 0
    %v1449 = vsel %vm53, %v1442, 0
    %v1451 = vsel %vm53, %v1444, 0
    %1453 = vmatprep.subr.mxu0 0.0
    %1454 = vmatpush1.msra.mxu0 %v424
    %1455 = vmatprep.subr.mxu0 0.0
    %1456 = vmatpush1.msra.mxu0 %v426
    %1457 = vmatprep.subr.mxu0 0.0
    %1458 = vmatpush1.msra.mxu0 0.0
    %1459 = vmatprep.subr.mxu0 0.0
    %1460 = vmatpush1.msra.mxu0 0.0
    %1461 = vmatprep.subr.mxu0 0.0
    %1462 = vmatpush1.msra.mxu0 0.0
    %1463 = vmatprep.subr.mxu0 0.0
    %1464 = vmatpush1.msra.mxu0 0.0
    %1465 = vmatprep.subr.mxu0 0.0
    %1466 = vmatpush1.msra.mxu0 0.0
    %1467 = vmatprep.subr.mxu0 0.0
    %1468 = vmatpush1.msra.mxu0 0.0
    %1469 = vmatprep.subr.mxu0 0.0
    %1470 = vmatpush1.msra.mxu0 0.0
    %1471 = vmatprep.subr.mxu0 0.0
    %1472 = vmatpush1.msra.mxu0 0.0
    %1473 = vmatprep.subr.mxu0 0.0
    %1474 = vmatpush1.msra.mxu0 0.0
    %1475 = vmatprep.subr.mxu0 0.0
    %1476 = vmatpush1.msra.mxu0 0.0
    %1477 = vmatprep.subr.mxu0 0.0
    %1478 = vmatpush1.msra.mxu0 0.0
    %1479 = vmatprep.subr.mxu0 0.0
    %1480 = vmatpush1.msra.mxu0 0.0
    %1481 = vmatprep.subr.mxu0 0.0
    %1482 = vmatpush1.msra.mxu0 0.0
    %1483 = vmatprep.subr.mxu0 0.0
    %1484 = vmatpush1.msra.mxu0 0.0
    %1485 = vmatprep.subr.mxu0 0.0
    %1486 = vmatpush1.msra.mxu0 0.0
    %1487 = vmatprep.subr.mxu0 0.0
    %1488 = vmatpush1.msra.mxu0 0.0
    %1489 = vmatprep.subr.mxu0 0.0
    %1490 = vmatpush1.msra.mxu0 0.0
    %1491 = vmatprep.subr.mxu0 0.0
    %1492 = vmatpush1.msra.mxu0 0.0
    %1493 = vmatprep.subr.mxu0 0.0
    %1494 = vmatpush1.msra.mxu0 0.0
    %1495 = vmatprep.subr.mxu0 0.0
    %1496 = vmatpush1.msra.mxu0 0.0
    %1497 = vmatprep.subr.mxu0 0.0
    %1498 = vmatpush1.msra.mxu0 0.0
    %1499 = vmatprep.subr.mxu0 0.0
    %1500 = vmatpush1.msra.mxu0 0.0
    %1501 = vmatprep.subr.mxu0 0.0
    %1502 = vmatpush1.msra.mxu0 0.0
    %1503 = vmatprep.subr.mxu0 0.0
    %1504 = vmatpush1.msra.mxu0 0.0
    %1505 = vmatprep.subr.mxu0 0.0
    %1506 = vmatpush1.msra.mxu0 0.0
    %1507 = vmatprep.subr.mxu0 0.0
    %1508 = vmatpush1.msra.mxu0 0.0
    %1509 = vmatprep.subr.mxu0 0.0
    %1510 = vmatpush1.msra.mxu0 0.0
    %1511 = vmatprep.subr.mxu0 0.0
    %1512 = vmatpush1.msra.mxu0 0.0
    %1513 = vmatprep.subr.mxu0 0.0
    %1514 = vmatpush1.msra.mxu0 0.0
    %1515 = vmatprep.subr.mxu0 0.0
    %1516 = vmatpush1.msra.mxu0 0.0
    %1517 = vmatprep.mubr.f32.mxu0 0.0
    %1518 = vmatmul.mubr.f32.gmra.mrb[0].mxu0 %v1445
    %v1519 = vpop.f32.mrb[0].mxu0
    %v1520 = vadd.f32 0.0, %v1519
    %v1521 = vpop.f32.mrb[0].mxu0
    %1522 = vmatprep.mubr.f32.mxu0 0.0
    %1523 = vmatmul.mubr.f32.gmra.mrb[0].mxu0 %v1447
    %v1524 = vpop.f32.mrb[0].mxu0
    %v1525 = vadd.f32 0.0, %v1524
    %v1526 = vpop.f32.mrb[0].mxu0
    %1527 = vmatprep.mubr.f32.mxu0 0.0
    %1528 = vmatmul.mubr.f32.gmra.mrb[0].mxu0 %v1449
    %v1529 = vpop.f32.mrb[0].mxu0
    %v1530 = vadd.f32 0.0, %v1529
    %v1531 = vpop.f32.mrb[0].mxu0
    %1532 = vmatprep.mubr.f32.mxu0 0.0
    %1533 = vmatmul.mubr.f32.gmra.mrb[0].mxu0 %v1451
    %v1534 = vpop.f32.mrb[0].mxu0
    %v1535 = vadd.f32 0.0, %v1534
    %v1536 = vpop.f32.mrb[0].mxu0
    %1537 = vdwg.mxu0
    %1542 = vrot.lane.b32.xlu0 %v1520, 32
    %v1543 = vpop.permute.xlu0 %1542
    %1544 = vrot.lane.b32.xlu0 %v1525, 32
    %v1545 = vpop.permute.xlu0 %1544
    %1546 = vrot.lane.b32.xlu0 %v1530, 32
    %v1547 = vpop.permute.xlu0 %1546
    %1548 = vrot.lane.b32.xlu0 %v1535, 32
    %v1549 = vpop.permute.xlu0 %1548
    %v1554 = vadd.f32 %v1375, %v1543
    %v1555 = vadd.f32 %v1380, %v1545
    %v1556 = vadd.f32 %v1385, %v1547
    %v1557 = vadd.f32 %v1390, %v1549
    %v1558 = vtanh.pop %v1554
    %v1559 = vtanh.pop %v1555
    %v1560 = vtanh.pop %v1556
    %v1561 = vtanh.pop %v1557
    %v1562 = vsub.f32 1.0, %v1410
    %v1563 = vsub.f32 1.0, %v1412
    %v1564 = vsub.f32 1.0, %v1414
    %v1565 = vsub.f32 1.0, %v1416
    %v1566 = vmul.f32 %v1562, %v1082
    %v1567 = vmul.f32 %v1563, %v1083
    %v1568 = vmul.f32 %v1564, %v1084
    %v1569 = vmul.f32 %v1565, %v1085
    %1574 = vrot.lane.b32.xlu0 %v1558, 96
    %v1575 = vpop.permute.xlu0 %1574
    %1576 = vrot.lane.b32.xlu0 %v1559, 96
    %v1577 = vpop.permute.xlu0 %1576
    %1578 = vrot.lane.b32.xlu0 %v1560, 96
    %v1579 = vpop.permute.xlu0 %1578
    %1580 = vrot.lane.b32.xlu0 %v1561, 96
    %v1581 = vpop.permute.xlu0 %1580
    %v1586 = vmul.f32 %v1410, %v1575
    %v1587 = vmul.f32 %v1412, %v1577
    %v1588 = vmul.f32 %v1414, %v1579
    %v1589 = vmul.f32 %v1416, %v1581
    %v1590 = vadd.f32 %v1566, %v1586
    %v1591 = vadd.f32 %v1567, %v1587
    %v1592 = vadd.f32 %v1568, %v1588
    %v1593 = vadd.f32 %v1569, %v1589
    %1594 = vmatprep.subr.mxu0 0.0
    %1595 = vmatpush1.msra.mxu0 %v1590
    %1596 = vmatprep.subr.mxu0 0.0
    %1597 = vmatpush1.msra.mxu0 %v1591
    %1598 = vmatprep.subr.mxu0 0.0
    %1599 = vmatpush1.msra.mxu0 0.0
    %1600 = vmatprep.subr.mxu0 0.0
    %1601 = vmatpush1.msra.mxu0 0.0
    %1602 = vmatprep.subr.mxu0 0.0
    %1603 = vmatpush1.msra.mxu0 0.0
    %1604 = vmatprep.subr.mxu0 0.0
    %1605 = vmatpush1.msra.mxu0 0.0
    %1606 = vmatprep.subr.mxu0 0.0
    %1607 = vmatpush1.msra.mxu0 0.0
    %1608 = vmatprep.subr.mxu0 0.0
    %1609 = vmatpush1.msra.mxu0 0.0
    %1610 = vmatprep.subr.mxu0 0.0
    %1611 = vmatpush1.msra.mxu0 0.0
    %1612 = vmatprep.subr.mxu0 0.0
    %1613 = vmatpush1.msra.mxu0 0.0
    %1614 = vmatprep.subr.mxu0 0.0
    %1615 = vmatpush1.msra.mxu0 0.0
    %1616 = vmatprep.subr.mxu0 0.0
    %1617 = vmatpush1.msra.mxu0 0.0
    %1618 = vmatprep.subr.mxu0 0.0
    %1619 = vmatpush1.msra.mxu0 0.0
    %1620 = vmatprep.subr.mxu0 0.0
    %1621 = vmatpush1.msra.mxu0 0.0
    %1622 = vmatprep.subr.mxu0 0.0
    %1623 = vmatpush1.msra.mxu0 0.0
    %1624 = vmatprep.subr.mxu0 0.0
    %1625 = vmatpush1.msra.mxu0 0.0
    %1626 = vmatprep.subr.mxu0 0.0
    %1627 = vmatpush1.msra.mxu0 0.0
    %1628 = vmatprep.subr.mxu0 0.0
    %1629 = vmatpush1.msra.mxu0 0.0
    %1630 = vmatprep.subr.mxu0 0.0
    %1631 = vmatpush1.msra.mxu0 0.0
    %1632 = vmatprep.subr.mxu0 0.0
    %1633 = vmatpush1.msra.mxu0 0.0
    %1634 = vmatprep.subr.mxu0 0.0
    %1635 = vmatpush1.msra.mxu0 0.0
    %1636 = vmatprep.subr.mxu0 0.0
    %1637 = vmatpush1.msra.mxu0 0.0
    %1638 = vmatprep.subr.mxu0 0.0
    %1639 = vmatpush1.msra.mxu0 0.0
    %1640 = vmatprep.subr.mxu0 0.0
    %1641 = vmatpush1.msra.mxu0 0.0
    %1642 = vmatprep.subr.mxu0 0.0
    %1643 = vmatpush1.msra.mxu0 0.0
    %1644 = vmatprep.subr.mxu0 0.0
    %1645 = vmatpush1.msra.mxu0 0.0
    %1646 = vmatprep.subr.mxu0 0.0
    %1647 = vmatpush1.msra.mxu0 0.0
    %1648 = vmatprep.subr.mxu0 0.0
    %1649 = vmatpush1.msra.mxu0 0.0
    %1650 = vmatprep.subr.mxu0 0.0
    %1651 = vmatpush1.msra.mxu0 0.0
    %1652 = vmatprep.subr.mxu0 0.0
    %1653 = vmatpush1.msra.mxu0 0.0
    %1654 = vmatprep.subr.mxu0 0.0
    %1655 = vmatpush1.msra.mxu0 0.0
    %1656 = vmatprep.subr.mxu0 0.0
    %1657 = vmatpush1.msra.mxu0 0.0
    %1658 = vmatprep.mubr.f32.mxu0 0.0
    %1659 = vmatmul.mubr.f32.gmra.mrb[0].mxu0 %v54
    %v1660 = vpop.f32.mrb[0].mxu0
    %v1661 = vadd.f32 0.0, %v1660
    %v1662 = vpop.f32.mrb[0].mxu0
    %1663 = vmatprep.mubr.f32.mxu0 0.0
    %1664 = vmatmul.mubr.f32.gmra.mrb[0].mxu0 %v56
    %v1665 = vpop.f32.mrb[0].mxu0
    %v1666 = vadd.f32 0.0, %v1665
    %v1667 = vpop.f32.mrb[0].mxu0
    %1668 = vmatprep.mubr.f32.mxu0 0.0
    %1669 = vmatmul.mubr.f32.gmra.mrb[0].mxu0 %v58
    %v1670 = vpop.f32.mrb[0].mxu0
    %v1671 = vadd.f32 0.0, %v1670
    %v1672 = vpop.f32.mrb[0].mxu0
    %1673 = vmatprep.mubr.f32.mxu0 0.0
    %1674 = vmatmul.mubr.f32.gmra.mrb[0].mxu0 %v60
    %v1675 = vpop.f32.mrb[0].mxu0
    %v1676 = vadd.f32 0.0, %v1675
    %v1677 = vpop.f32.mrb[0].mxu0
    %1678 = vdwg.mxu0
    %1679 = vmatprep.subr.mxu0 0.0
    %1680 = vmatpush1.msra.mxu0 %v1592
    %1681 = vmatprep.subr.mxu0 0.0
    %1682 = vmatpush1.msra.mxu0 %v1593
    %1683 = vmatprep.subr.mxu0 0.0
    %1684 = vmatpush1.msra.mxu0 0.0
    %1685 = vmatprep.subr.mxu0 0.0
    %1686 = vmatpush1.msra.mxu0 0.0
    %1687 = vmatprep.subr.mxu0 0.0
    %1688 = vmatpush1.msra.mxu0 0.0
    %1689 = vmatprep.subr.mxu0 0.0
    %1690 = vmatpush1.msra.mxu0 0.0
    %1691 = vmatprep.subr.mxu0 0.0
    %1692 = vmatpush1.msra.mxu0 0.0
    %1693 = vmatprep.subr.mxu0 0.0
    %1694 = vmatpush1.msra.mxu0 0.0
    %1695 = vmatprep.subr.mxu0 0.0
    %1696 = vmatpush1.msra.mxu0 0.0
    %1697 = vmatprep.subr.mxu0 0.0
    %1698 = vmatpush1.msra.mxu0 0.0
    %1699 = vmatprep.subr.mxu0 0.0
    %1700 = vmatpush1.msra.mxu0 0.0
    %1701 = vmatprep.subr.mxu0 0.0
    %1702 = vmatpush1.msra.mxu0 0.0
    %1703 = vmatprep.subr.mxu0 0.0
    %1704 = vmatpush1.msra.mxu0 0.0
    %1705 = vmatprep.subr.mxu0 0.0
    %1706 = vmatpush1.msra.mxu0 0.0
    %1707 = vmatprep.subr.mxu0 0.0
    %1708 = vmatpush1.msra.mxu0 0.0
    %1709 = vmatprep.subr.mxu0 0.0
    %1710 = vmatpush1.msra.mxu0 0.0
    %1711 = vmatprep.subr.mxu0 0.0
    %1712 = vmatpush1.msra.mxu0 0.0
    %1713 = vmatprep.subr.mxu0 0.0
    %1714 = vmatpush1.msra.mxu0 0.0
    %1715 = vmatprep.subr.mxu0 0.0
    %1716 = vmatpush1.msra.mxu0 0.0
    %1717 = vmatprep.subr.mxu0 0.0
    %1718 = vmatpush1.msra.mxu0 0.0
    %1719 = vmatprep.subr.mxu0 0.0
    %1720 = vmatpush1.msra.mxu0 0.0
    %1721 = vmatprep.subr.mxu0 0.0
    %1722 = vmatpush1.msra.mxu0 0.0
    %1723 = vmatprep.subr.mxu0 0.0
    %1724 = vmatpush1.msra.mxu0 0.0
    %1725 = vmatprep.subr.mxu0 0.0
    %1726 = vmatpush1.msra.mxu0 0.0
    %1727 = vmatprep.subr.mxu0 0.0
    %1728 = vmatpush1.msra.mxu0 0.0
    %1729 = vmatprep.subr.mxu0 0.0
    %1730 = vmatpush1.msra.mxu0 0.0
    %1731 = vmatprep.subr.mxu0 0.0
    %1732 = vmatpush1.msra.mxu0 0.0
    %1733 = vmatprep.subr.mxu0 0.0
    %1734 = vmatpush1.msra.mxu0 0.0
    %1735 = vmatprep.subr.mxu0 0.0
    %1736 = vmatpush1.msra.mxu0 0.0
    %1737 = vmatprep.subr.mxu0 0.0
    %1738 = vmatpush1.msra.mxu0 0.0
    %1739 = vmatprep.subr.mxu0 0.0
    %1740 = vmatpush1.msra.mxu0 0.0
    %1741 = vmatprep.subr.mxu0 0.0
    %1742 = vmatpush1.msra.mxu0 0.0
    %1743 = vmatprep.mubr.f32.mxu0 0.0
    %1744 = vmatmul.mubr.f32.gmra.mrb[0].mxu0 %v54
    %v1745 = vpop.f32.mrb[0].mxu0
    %v1746 = vadd.f32 0.0, %v1745
    %v1747 = vpop.f32.mrb[0].mxu0
    %1748 = vmatprep.mubr.f32.mxu0 0.0
    %1749 = vmatmul.mubr.f32.gmra.mrb[0].mxu0 %v56
    %v1750 = vpop.f32.mrb[0].mxu0
    %v1751 = vadd.f32 0.0, %v1750
    %v1752 = vpop.f32.mrb[0].mxu0
    %1753 = vmatprep.mubr.f32.mxu0 0.0
    %1754 = vmatmul.mubr.f32.gmra.mrb[0].mxu0 %v58
    %v1755 = vpop.f32.mrb[0].mxu0
    %v1756 = vadd.f32 0.0, %v1755
    %v1757 = vpop.f32.mrb[0].mxu0
    %1758 = vmatprep.mubr.f32.mxu0 0.0
    %1759 = vmatmul.mubr.f32.gmra.mrb[0].mxu0 %v60
    %v1760 = vpop.f32.mrb[0].mxu0
    %v1761 = vadd.f32 0.0, %v1760
    %v1762 = vpop.f32.mrb[0].mxu0
    %1763 = vdwg.mxu0
    %1768 = vrot.lane.b32.xlu0 %v1671, 16
    %v1769 = vpop.permute.xlu0 %1768
    %1770 = vrot.lane.b32.xlu0 %v1676, 16
    %v1771 = vpop.permute.xlu0 %1770
    %1772 = vrot.lane.b32.xlu0 %v1756, 16
    %v1773 = vpop.permute.xlu0 %1772
    %1774 = vrot.lane.b32.xlu0 %v1761, 16
    %v1775 = vpop.permute.xlu0 %1774
    %1784 = vrot.lane.b32.xlu0 %v1590, 32
    %v1785 = vpop.permute.xlu0 %1784
    %1786 = vrot.lane.b32.xlu0 %v1591, 32
    %v1787 = vpop.permute.xlu0 %1786
    %1788 = vrot.lane.b32.xlu0 %v1592, 32
    %v1789 = vpop.permute.xlu0 %1788
    %1790 = vrot.lane.b32.xlu0 %v1593, 32
    %v1791 = vpop.permute.xlu0 %1790
    %v1796 = vsel %vm53, %v1661, %v1769
    %v1797 = vsel %vm53, %v1666, %v1771
    %v1798 = vsel %vm53, %v1746, %v1773
    %v1799 = vsel %vm53, %v1751, %v1775
    %v1800 = vsel %vm268, %v1796, %v1785
    %v1801 = vsel %vm268, %v1797, %v1787
    %v1802 = vsel %vm268, %v1798, %v1789
    %v1803 = vsel %vm268, %v1799, %v1791
    %v1805 = vsel %vm273, %v1800, 0
    %v1808 = vsel %vm273, %v1801, 0
    %v1811 = vsel %vm273, %v1802, 0
    %v1814 = vsel %vm273, %v1803, 0
    %1816 = vmatprep.subr.mxu0 0.0
    %1817 = vmatpush1.msra.mxu0 %v29
    %1818 = vmatprep.subr.mxu0 0.0
    %1819 = vmatpush1.msra.mxu0 %v30
    %1820 = vmatprep.subr.mxu0 0.0
    %1821 = vmatpush1.msra.mxu0 %v31
    %1822 = vmatprep.subr.mxu0 0.0
    %1823 = vmatpush1.msra.mxu0 %v32
    %1824 = vmatprep.subr.mxu0 0.0
    %1825 = vmatpush1.msra.mxu0 %v33
    %1826 = vmatprep.subr.mxu0 0.0
    %1827 = vmatpush1.msra.mxu0 %v34
    %1828 = vmatprep.subr.mxu0 0.0
    %1829 = vmatpush1.msra.mxu0 0.0
    %1830 = vmatprep.subr.mxu0 0.0
    %1831 = vmatpush1.msra.mxu0 0.0
    %1832 = vmatprep.subr.mxu0 0.0
    %1833 = vmatpush1.msra.mxu0 0.0
    %1834 = vmatprep.subr.mxu0 0.0
    %1835 = vmatpush1.msra.mxu0 0.0
    %1836 = vmatprep.subr.mxu0 0.0
    %1837 = vmatpush1.msra.mxu0 0.0
    %1838 = vmatprep.subr.mxu0 0.0
    %1839 = vmatpush1.msra.mxu0 0.0
    %1840 = vmatprep.subr.mxu0 0.0
    %1841 = vmatpush1.msra.mxu0 0.0
    %1842 = vmatprep.subr.mxu0 0.0
    %1843 = vmatpush1.msra.mxu0 0.0
    %1844 = vmatprep.subr.mxu0 0.0
    %1845 = vmatpush1.msra.mxu0 0.0
    %1846 = vmatprep.subr.mxu0 0.0
    %1847 = vmatpush1.msra.mxu0 0.0
    %1848 = vmatprep.subr.mxu0 0.0
    %1849 = vmatpush1.msra.mxu0 0.0
    %1850 = vmatprep.subr.mxu0 0.0
    %1851 = vmatpush1.msra.mxu0 0.0
    %1852 = vmatprep.subr.mxu0 0.0
    %1853 = vmatpush1.msra.mxu0 0.0
    %1854 = vmatprep.subr.mxu0 0.0
    %1855 = vmatpush1.msra.mxu0 0.0
    %1856 = vmatprep.subr.mxu0 0.0
    %1857 = vmatpush1.msra.mxu0 0.0
    %1858 = vmatprep.subr.mxu0 0.0
    %1859 = vmatpush1.msra.mxu0 0.0
    %1860 = vmatprep.subr.mxu0 0.0
    %1861 = vmatpush1.msra.mxu0 0.0
    %1862 = vmatprep.subr.mxu0 0.0
    %1863 = vmatpush1.msra.mxu0 0.0
    %1864 = vmatprep.subr.mxu0 0.0
    %1865 = vmatpush1.msra.mxu0 0.0
    %1866 = vmatprep.subr.mxu0 0.0
    %1867 = vmatpush1.msra.mxu0 0.0
    %1868 = vmatprep.subr.mxu0 0.0
    %1869 = vmatpush1.msra.mxu0 0.0
    %1870 = vmatprep.subr.mxu0 0.0
    %1871 = vmatpush1.msra.mxu0 0.0
    %1872 = vmatprep.subr.mxu0 0.0
    %1873 = vmatpush1.msra.mxu0 0.0
    %1874 = vmatprep.subr.mxu0 0.0
    %1875 = vmatpush1.msra.mxu0 0.0
    %1876 = vmatprep.subr.mxu0 0.0
    %1877 = vmatpush1.msra.mxu0 0.0
    %1878 = vmatprep.subr.mxu0 0.0
    %1879 = vmatpush1.msra.mxu0 0.0
    %1880 = vmatprep.mubr.f32.mxu0 0.0
    %1881 = vmatmul.mubr.f32.gmra.mrb[0].mxu0 %v1805
    %v1882 = vpop.f32.mrb[0].mxu0
    %v1883 = vadd.f32 %v40, %v1882
    %v1884 = vpop.f32.mrb[0].mxu0
    %1885 = vmatprep.mubr.f32.mxu0 0.0
    %1886 = vmatmul.mubr.f32.gmra.mrb[0].mxu0 %v1808
    %v1887 = vpop.f32.mrb[0].mxu0
    %v1888 = vadd.f32 %v40, %v1887
    %v1889 = vpop.f32.mrb[0].mxu0
    %1890 = vmatprep.mubr.f32.mxu0 0.0
    %1891 = vmatmul.mubr.f32.gmra.mrb[0].mxu0 %v1811
    %v1892 = vpop.f32.mrb[0].mxu0
    %v1893 = vadd.f32 %v40, %v1892
    %v1894 = vpop.f32.mrb[0].mxu0
    %1895 = vmatprep.mubr.f32.mxu0 0.0
    %1896 = vmatmul.mubr.f32.gmra.mrb[0].mxu0 %v1814
    %v1897 = vpop.f32.mrb[0].mxu0
    %v1898 = vadd.f32 %v40, %v1897
    %v1899 = vpop.f32.mrb[0].mxu0
    %1900 = vdwg.mxu0
    %v1901 = vxor.u32 %v1883, 2147483648
    %v1902 = vxor.u32 %v1888, 2147483648
    %v1903 = vxor.u32 %v1893, 2147483648
    %v1904 = vxor.u32 %v1898, 2147483648
    %v1905 = vmul.f32 %v1901, 1.442695
    %v1906 = vpow.pop %v1905
    %v1907 = vmul.f32 %v1902, 1.442695
    %v1908 = vpow.pop %v1907
    %v1909 = vmul.f32 %v1903, 1.442695
    %v1910 = vpow.pop %v1909
    %v1911 = vmul.f32 %v1904, 1.442695
    %v1912 = vpow.pop %v1911
    %v1913 = vadd.f32 %v1906, 1.0
    %v1914 = vadd.f32 %v1908, 1.0
    %v1915 = vadd.f32 %v1910, 1.0
    %v1916 = vadd.f32 %v1912, 1.0
    %v1917 = vrcp.pop %v1913
    %v1918 = vmul.f32 1.0, %v1917
    %v1919 = vrcp.pop %v1914
    %v1920 = vmul.f32 1.0, %v1919
    %v1921 = vrcp.pop %v1915
    %v1922 = vmul.f32 1.0, %v1921
    %v1923 = vrcp.pop %v1916
    %v1924 = vmul.f32 1.0, %v1923
    %1925 = vrot.lane.b32.xlu0 %v1590, 16
    %v1926 = vpop.permute.xlu0 %1925
    %1927 = vrot.lane.b32.xlu0 %v1591, 16
    %v1928 = vpop.permute.xlu0 %1927
    %1929 = vrot.lane.b32.xlu0 %v1592, 16
    %v1930 = vpop.permute.xlu0 %1929
    %1931 = vrot.lane.b32.xlu0 %v1593, 16
    %v1932 = vpop.permute.xlu0 %1931
    %v1937 = vmul.f32 %v1918, %v1926
    %v1938 = vmul.f32 %v1920, %v1928
    %v1939 = vmul.f32 %v1922, %v1930
    %v1940 = vmul.f32 %v1924, %v1932
    %1945 = vrot.lane.b32.xlu0 %v1937, 112
    %v1946 = vpop.permute.xlu0 %1945
    %1947 = vrot.lane.b32.xlu0 %v1938, 112
    %v1948 = vpop.permute.xlu0 %1947
    %1949 = vrot.lane.b32.xlu0 %v1939, 112
    %v1950 = vpop.permute.xlu0 %1949
    %1951 = vrot.lane.b32.xlu0 %v1940, 112
    %v1952 = vpop.permute.xlu0 %1951
    %v1953 = vsel %vm53, %v1946, 0
    %v1955 = vsel %vm53, %v1948, 0
    %v1957 = vsel %vm53, %v1950, 0
    %v1959 = vsel %vm53, %v1952, 0
    %1961 = vmatprep.subr.mxu0 0.0
    %1962 = vmatpush1.msra.mxu0 %v424
    %1963 = vmatprep.subr.mxu0 0.0
    %1964 = vmatpush1.msra.mxu0 %v426
    %1965 = vmatprep.subr.mxu0 0.0
    %1966 = vmatpush1.msra.mxu0 0.0
    %1967 = vmatprep.subr.mxu0 0.0
    %1968 = vmatpush1.msra.mxu0 0.0
    %1969 = vmatprep.subr.mxu0 0.0
    %1970 = vmatpush1.msra.mxu0 0.0
    %1971 = vmatprep.subr.mxu0 0.0
    %1972 = vmatpush1.msra.mxu0 0.0
    %1973 = vmatprep.subr.mxu0 0.0
    %1974 = vmatpush1.msra.mxu0 0.0
    %1975 = vmatprep.subr.mxu0 0.0
    %1976 = vmatpush1.msra.mxu0 0.0
    %1977 = vmatprep.subr.mxu0 0.0
    %1978 = vmatpush1.msra.mxu0 0.0
    %1979 = vmatprep.subr.mxu0 0.0
    %1980 = vmatpush1.msra.mxu0 0.0
    %1981 = vmatprep.subr.mxu0 0.0
    %1982 = vmatpush1.msra.mxu0 0.0
    %1983 = vmatprep.subr.mxu0 0.0
    %1984 = vmatpush1.msra.mxu0 0.0
    %1985 = vmatprep.subr.mxu0 0.0
    %1986 = vmatpush1.msra.mxu0 0.0
    %1987 = vmatprep.subr.mxu0 0.0
    %1988 = vmatpush1.msra.mxu0 0.0
    %1989 = vmatprep.subr.mxu0 0.0
    %1990 = vmatpush1.msra.mxu0 0.0
    %1991 = vmatprep.subr.mxu0 0.0
    %1992 = vmatpush1.msra.mxu0 0.0
    %1993 = vmatprep.subr.mxu0 0.0
    %1994 = vmatpush1.msra.mxu0 0.0
    %1995 = vmatprep.subr.mxu0 0.0
    %1996 = vmatpush1.msra.mxu0 0.0
    %1997 = vmatprep.subr.mxu0 0.0
    %1998 = vmatpush1.msra.mxu0 0.0
    %1999 = vmatprep.subr.mxu0 0.0
    %2000 = vmatpush1.msra.mxu0 0.0
    %2001 = vmatprep.subr.mxu0 0.0
    %2002 = vmatpush1.msra.mxu0 0.0
    %2003 = vmatprep.subr.mxu0 0.0
    %2004 = vmatpush1.msra.mxu0 0.0
    %2005 = vmatprep.subr.mxu0 0.0
    %2006 = vmatpush1.msra.mxu0 0.0
    %2007 = vmatprep.subr.mxu0 0.0
    %2008 = vmatpush1.msra.mxu0 0.0
    %2009 = vmatprep.subr.mxu0 0.0
    %2010 = vmatpush1.msra.mxu0 0.0
    %2011 = vmatprep.subr.mxu0 0.0
    %2012 = vmatpush1.msra.mxu0 0.0
    %2013 = vmatprep.subr.mxu0 0.0
    %2014 = vmatpush1.msra.mxu0 0.0
    %2015 = vmatprep.subr.mxu0 0.0
    %2016 = vmatpush1.msra.mxu0 0.0
    %2017 = vmatprep.subr.mxu0 0.0
    %2018 = vmatpush1.msra.mxu0 0.0
    %2019 = vmatprep.subr.mxu0 0.0
    %2020 = vmatpush1.msra.mxu0 0.0
    %2021 = vmatprep.subr.mxu0 0.0
    %2022 = vmatpush1.msra.mxu0 0.0
    %2023 = vmatprep.subr.mxu0 0.0
    %2024 = vmatpush1.msra.mxu0 0.0
    %2025 = vmatprep.mubr.f32.mxu0 0.0
    %2026 = vmatmul.mubr.f32.gmra.mrb[0].mxu0 %v1953
    %v2027 = vpop.f32.mrb[0].mxu0
    %v2028 = vadd.f32 0.0, %v2027
    %v2029 = vpop.f32.mrb[0].mxu0
    %2030 = vmatprep.mubr.f32.mxu0 0.0
    %2031 = vmatmul.mubr.f32.gmra.mrb[0].mxu0 %v1955
    %v2032 = vpop.f32.mrb[0].mxu0
    %v2033 = vadd.f32 0.0, %v2032
    %v2034 = vpop.f32.mrb[0].mxu0
    %2035 = vmatprep.mubr.f32.mxu0 0.0
    %2036 = vmatmul.mubr.f32.gmra.mrb[0].mxu0 %v1957
    %v2037 = vpop.f32.mrb[0].mxu0
    %v2038 = vadd.f32 0.0, %v2037
    %v2039 = vpop.f32.mrb[0].mxu0
    %2040 = vmatprep.mubr.f32.mxu0 0.0
    %2041 = vmatmul.mubr.f32.gmra.mrb[0].mxu0 %v1959
    %v2042 = vpop.f32.mrb[0].mxu0
    %v2043 = vadd.f32 0.0, %v2042
    %v2044 = vpop.f32.mrb[0].mxu0
    %2045 = vdwg.mxu0
    %2050 = vrot.lane.b32.xlu0 %v2028, 32
    %v2051 = vpop.permute.xlu0 %2050
    %2052 = vrot.lane.b32.xlu0 %v2033, 32
    %v2053 = vpop.permute.xlu0 %2052
    %2054 = vrot.lane.b32.xlu0 %v2038, 32
    %v2055 = vpop.permute.xlu0 %2054
    %2056 = vrot.lane.b32.xlu0 %v2043, 32
    %v2057 = vpop.permute.xlu0 %2056
    %v2062 = vadd.f32 %v1883, %v2051
    %v2063 = vadd.f32 %v1888, %v2053
    %v2064 = vadd.f32 %v1893, %v2055
    %v2065 = vadd.f32 %v1898, %v2057
    %v2066 = vtanh.pop %v2062
    %v2067 = vtanh.pop %v2063
    %v2068 = vtanh.pop %v2064
    %v2069 = vtanh.pop %v2065
    %v2070 = vsub.f32 1.0, %v1918
    %v2071 = vsub.f32 1.0, %v1920
    %v2072 = vsub.f32 1.0, %v1922
    %v2073 = vsub.f32 1.0, %v1924
    %v2074 = vmul.f32 %v2070, %v1590
    %v2075 = vmul.f32 %v2071, %v1591
    %v2076 = vmul.f32 %v2072, %v1592
    %v2077 = vmul.f32 %v2073, %v1593
    %2082 = vrot.lane.b32.xlu0 %v2066, 96
    %v2083 = vpop.permute.xlu0 %2082
    %2084 = vrot.lane.b32.xlu0 %v2067, 96
    %v2085 = vpop.permute.xlu0 %2084
    %2086 = vrot.lane.b32.xlu0 %v2068, 96
    %v2087 = vpop.permute.xlu0 %2086
    %2088 = vrot.lane.b32.xlu0 %v2069, 96
    %v2089 = vpop.permute.xlu0 %2088
    %v2094 = vmul.f32 %v1918, %v2083
    %v2095 = vmul.f32 %v1920, %v2085
    %v2096 = vmul.f32 %v1922, %v2087
    %v2097 = vmul.f32 %v1924, %v2089
    %v2098 = vadd.f32 %v2074, %v2094
    %v2099 = vadd.f32 %v2075, %v2095
    %v2100 = vadd.f32 %v2076, %v2096
    %v2101 = vadd.f32 %v2077, %v2097
    %2102 = vmatprep.subr.mxu0 0.0
    %2103 = vmatpush1.msra.mxu0 %v2098
    %2104 = vmatprep.subr.mxu0 0.0
    %2105 = vmatpush1.msra.mxu0 %v2099
    %2106 = vmatprep.subr.mxu0 0.0
    %2107 = vmatpush1.msra.mxu0 0.0
    %2108 = vmatprep.subr.mxu0 0.0
    %2109 = vmatpush1.msra.mxu0 0.0
    %2110 = vmatprep.subr.mxu0 0.0
    %2111 = vmatpush1.msra.mxu0 0.0
    %2112 = vmatprep.subr.mxu0 0.0
    %2113 = vmatpush1.msra.mxu0 0.0
    %2114 = vmatprep.subr.mxu0 0.0
    %2115 = vmatpush1.msra.mxu0 0.0
    %2116 = vmatprep.subr.mxu0 0.0
    %2117 = vmatpush1.msra.mxu0 0.0
    %2118 = vmatprep.subr.mxu0 0.0
    %2119 = vmatpush1.msra.mxu0 0.0
    %2120 = vmatprep.subr.mxu0 0.0
    %2121 = vmatpush1.msra.mxu0 0.0
    %2122 = vmatprep.subr.mxu0 0.0
    %2123 = vmatpush1.msra.mxu0 0.0
    %2124 = vmatprep.subr.mxu0 0.0
    %2125 = vmatpush1.msra.mxu0 0.0
    %2126 = vmatprep.subr.mxu0 0.0
    %2127 = vmatpush1.msra.mxu0 0.0
    %2128 = vmatprep.subr.mxu0 0.0
    %2129 = vmatpush1.msra.mxu0 0.0
    %2130 = vmatprep.subr.mxu0 0.0
    %2131 = vmatpush1.msra.mxu0 0.0
    %2132 = vmatprep.subr.mxu0 0.0
    %2133 = vmatpush1.msra.mxu0 0.0
    %2134 = vmatprep.subr.mxu0 0.0
    %2135 = vmatpush1.msra.mxu0 0.0
    %2136 = vmatprep.subr.mxu0 0.0
    %2137 = vmatpush1.msra.mxu0 0.0
    %2138 = vmatprep.subr.mxu0 0.0
    %2139 = vmatpush1.msra.mxu0 0.0
    %2140 = vmatprep.subr.mxu0 0.0
    %2141 = vmatpush1.msra.mxu0 0.0
    %2142 = vmatprep.subr.mxu0 0.0
    %2143 = vmatpush1.msra.mxu0 0.0
    %2144 = vmatprep.subr.mxu0 0.0
    %2145 = vmatpush1.msra.mxu0 0.0
    %2146 = vmatprep.subr.mxu0 0.0
    %2147 = vmatpush1.msra.mxu0 0.0
    %2148 = vmatprep.subr.mxu0 0.0
    %2149 = vmatpush1.msra.mxu0 0.0
    %2150 = vmatprep.subr.mxu0 0.0
    %2151 = vmatpush1.msra.mxu0 0.0
    %2152 = vmatprep.subr.mxu0 0.0
    %2153 = vmatpush1.msra.mxu0 0.0
    %2154 = vmatprep.subr.mxu0 0.0
    %2155 = vmatpush1.msra.mxu0 0.0
    %2156 = vmatprep.subr.mxu0 0.0
    %2157 = vmatpush1.msra.mxu0 0.0
    %2158 = vmatprep.subr.mxu0 0.0
    %2159 = vmatpush1.msra.mxu0 0.0
    %2160 = vmatprep.subr.mxu0 0.0
    %2161 = vmatpush1.msra.mxu0 0.0
    %2162 = vmatprep.subr.mxu0 0.0
    %2163 = vmatpush1.msra.mxu0 0.0
    %2164 = vmatprep.subr.mxu0 0.0
    %2165 = vmatpush1.msra.mxu0 0.0
    %2166 = vmatprep.mubr.f32.mxu0 0.0
    %2167 = vmatmul.mubr.f32.gmra.mrb[0].mxu0 %v54
    %v2168 = vpop.f32.mrb[0].mxu0
    %v2169 = vadd.f32 0.0, %v2168
    %v2170 = vpop.f32.mrb[0].mxu0
    %2171 = vmatprep.mubr.f32.mxu0 0.0
    %2172 = vmatmul.mubr.f32.gmra.mrb[0].mxu0 %v56
    %v2173 = vpop.f32.mrb[0].mxu0
    %v2174 = vadd.f32 0.0, %v2173
    %v2175 = vpop.f32.mrb[0].mxu0
    %2176 = vmatprep.mubr.f32.mxu0 0.0
    %2177 = vmatmul.mubr.f32.gmra.mrb[0].mxu0 %v58
    %v2178 = vpop.f32.mrb[0].mxu0
    %v2179 = vadd.f32 0.0, %v2178
    %v2180 = vpop.f32.mrb[0].mxu0
    %2181 = vmatprep.mubr.f32.mxu0 0.0
    %2182 = vmatmul.mubr.f32.gmra.mrb[0].mxu0 %v60
    %v2183 = vpop.f32.mrb[0].mxu0
    %v2184 = vadd.f32 0.0, %v2183
    %v2185 = vpop.f32.mrb[0].mxu0
    %2186 = vdwg.mxu0
    %2187 = vmatprep.subr.mxu0 0.0
    %2188 = vmatpush1.msra.mxu0 %v2100
    %2189 = vmatprep.subr.mxu0 0.0
    %2190 = vmatpush1.msra.mxu0 %v2101
    %2191 = vmatprep.subr.mxu0 0.0
    %2192 = vmatpush1.msra.mxu0 0.0
    %2193 = vmatprep.subr.mxu0 0.0
    %2194 = vmatpush1.msra.mxu0 0.0
    %2195 = vmatprep.subr.mxu0 0.0
    %2196 = vmatpush1.msra.mxu0 0.0
    %2197 = vmatprep.subr.mxu0 0.0
    %2198 = vmatpush1.msra.mxu0 0.0
    %2199 = vmatprep.subr.mxu0 0.0
    %2200 = vmatpush1.msra.mxu0 0.0
    %2201 = vmatprep.subr.mxu0 0.0
    %2202 = vmatpush1.msra.mxu0 0.0
    %2203 = vmatprep.subr.mxu0 0.0
    %2204 = vmatpush1.msra.mxu0 0.0
    %2205 = vmatprep.subr.mxu0 0.0
    %2206 = vmatpush1.msra.mxu0 0.0
    %2207 = vmatprep.subr.mxu0 0.0
    %2208 = vmatpush1.msra.mxu0 0.0
    %2209 = vmatprep.subr.mxu0 0.0
    %2210 = vmatpush1.msra.mxu0 0.0
    %2211 = vmatprep.subr.mxu0 0.0
    %2212 = vmatpush1.msra.mxu0 0.0
    %2213 = vmatprep.subr.mxu0 0.0
    %2214 = vmatpush1.msra.mxu0 0.0
    %2215 = vmatprep.subr.mxu0 0.0
    %2216 = vmatpush1.msra.mxu0 0.0
    %2217 = vmatprep.subr.mxu0 0.0
    %2218 = vmatpush1.msra.mxu0 0.0
    %2219 = vmatprep.subr.mxu0 0.0
    %2220 = vmatpush1.msra.mxu0 0.0
    %2221 = vmatprep.subr.mxu0 0.0
    %2222 = vmatpush1.msra.mxu0 0.0
    %2223 = vmatprep.subr.mxu0 0.0
    %2224 = vmatpush1.msra.mxu0 0.0
    %2225 = vmatprep.subr.mxu0 0.0
    %2226 = vmatpush1.msra.mxu0 0.0
    %2227 = vmatprep.subr.mxu0 0.0
    %2228 = vmatpush1.msra.mxu0 0.0
    %2229 = vmatprep.subr.mxu0 0.0
    %2230 = vmatpush1.msra.mxu0 0.0
    %2231 = vmatprep.subr.mxu0 0.0
    %2232 = vmatpush1.msra.mxu0 0.0
    %2233 = vmatprep.subr.mxu0 0.0
    %2234 = vmatpush1.msra.mxu0 0.0
    %2235 = vmatprep.subr.mxu0 0.0
    %2236 = vmatpush1.msra.mxu0 0.0
    %2237 = vmatprep.subr.mxu0 0.0
    %2238 = vmatpush1.msra.mxu0 0.0
    %2239 = vmatprep.subr.mxu0 0.0
    %2240 = vmatpush1.msra.mxu0 0.0
    %2241 = vmatprep.subr.mxu0 0.0
    %2242 = vmatpush1.msra.mxu0 0.0
    %2243 = vmatprep.subr.mxu0 0.0
    %2244 = vmatpush1.msra.mxu0 0.0
    %2245 = vmatprep.subr.mxu0 0.0
    %2246 = vmatpush1.msra.mxu0 0.0
    %2247 = vmatprep.subr.mxu0 0.0
    %2248 = vmatpush1.msra.mxu0 0.0
    %2249 = vmatprep.subr.mxu0 0.0
    %2250 = vmatpush1.msra.mxu0 0.0
    %2251 = vmatprep.mubr.f32.mxu0 0.0
    %2252 = vmatmul.mubr.f32.gmra.mrb[0].mxu0 %v54
    %v2253 = vpop.f32.mrb[0].mxu0
    %v2254 = vadd.f32 0.0, %v2253
    %v2255 = vpop.f32.mrb[0].mxu0
    %2256 = vmatprep.mubr.f32.mxu0 0.0
    %2257 = vmatmul.mubr.f32.gmra.mrb[0].mxu0 %v56
    %v2258 = vpop.f32.mrb[0].mxu0
    %v2259 = vadd.f32 0.0, %v2258
    %v2260 = vpop.f32.mrb[0].mxu0
    %2261 = vmatprep.mubr.f32.mxu0 0.0
    %2262 = vmatmul.mubr.f32.gmra.mrb[0].mxu0 %v58
    %v2263 = vpop.f32.mrb[0].mxu0
    %v2264 = vadd.f32 0.0, %v2263
    %v2265 = vpop.f32.mrb[0].mxu0
    %2266 = vmatprep.mubr.f32.mxu0 0.0
    %2267 = vmatmul.mubr.f32.gmra.mrb[0].mxu0 %v60
    %v2268 = vpop.f32.mrb[0].mxu0
    %v2269 = vadd.f32 0.0, %v2268
    %v2270 = vpop.f32.mrb[0].mxu0
    %2271 = vdwg.mxu0
    %2276 = vrot.lane.b32.xlu0 %v2179, 16
    %v2277 = vpop.permute.xlu0 %2276
    %2278 = vrot.lane.b32.xlu0 %v2184, 16
    %v2279 = vpop.permute.xlu0 %2278
    %2280 = vrot.lane.b32.xlu0 %v2264, 16
    %v2281 = vpop.permute.xlu0 %2280
    %2282 = vrot.lane.b32.xlu0 %v2269, 16
    %v2283 = vpop.permute.xlu0 %2282
    %2292 = vrot.lane.b32.xlu0 %v2098, 32
    %v2293 = vpop.permute.xlu0 %2292
    %2294 = vrot.lane.b32.xlu0 %v2099, 32
    %v2295 = vpop.permute.xlu0 %2294
    %2296 = vrot.lane.b32.xlu0 %v2100, 32
    %v2297 = vpop.permute.xlu0 %2296
    %2298 = vrot.lane.b32.xlu0 %v2101, 32
    %v2299 = vpop.permute.xlu0 %2298
    %v2304 = vsel %vm53, %v2169, %v2277
    %v2305 = vsel %vm53, %v2174, %v2279
    %v2306 = vsel %vm53, %v2254, %v2281
    %v2307 = vsel %vm53, %v2259, %v2283
    %v2308 = vsel %vm268, %v2304, %v2293
    %v2309 = vsel %vm268, %v2305, %v2295
    %v2310 = vsel %vm268, %v2306, %v2297
    %v2311 = vsel %vm268, %v2307, %v2299
    %v2313 = vsel %vm273, %v2308, 0
    %v2316 = vsel %vm273, %v2309, 0
    %v2319 = vsel %vm273, %v2310, 0
    %v2322 = vsel %vm273, %v2311, 0
    %2324 = vmatprep.subr.mxu0 0.0
    %2325 = vmatpush1.msra.mxu0 %v29
    %2326 = vmatprep.subr.mxu0 0.0
    %2327 = vmatpush1.msra.mxu0 %v30
    %2328 = vmatprep.subr.mxu0 0.0
    %2329 = vmatpush1.msra.mxu0 %v31
    %2330 = vmatprep.subr.mxu0 0.0
    %2331 = vmatpush1.msra.mxu0 %v32
    %2332 = vmatprep.subr.mxu0 0.0
    %2333 = vmatpush1.msra.mxu0 %v33
    %2334 = vmatprep.subr.mxu0 0.0
    %2335 = vmatpush1.msra.mxu0 %v34
    %2336 = vmatprep.subr.mxu0 0.0
    %2337 = vmatpush1.msra.mxu0 0.0
    %2338 = vmatprep.subr.mxu0 0.0
    %2339 = vmatpush1.msra.mxu0 0.0
    %2340 = vmatprep.subr.mxu0 0.0
    %2341 = vmatpush1.msra.mxu0 0.0
    %2342 = vmatprep.subr.mxu0 0.0
    %2343 = vmatpush1.msra.mxu0 0.0
    %2344 = vmatprep.subr.mxu0 0.0
    %2345 = vmatpush1.msra.mxu0 0.0
    %2346 = vmatprep.subr.mxu0 0.0
    %2347 = vmatpush1.msra.mxu0 0.0
    %2348 = vmatprep.subr.mxu0 0.0
    %2349 = vmatpush1.msra.mxu0 0.0
    %2350 = vmatprep.subr.mxu0 0.0
    %2351 = vmatpush1.msra.mxu0 0.0
    %2352 = vmatprep.subr.mxu0 0.0
    %2353 = vmatpush1.msra.mxu0 0.0
    %2354 = vmatprep.subr.mxu0 0.0
    %2355 = vmatpush1.msra.mxu0 0.0
    %2356 = vmatprep.subr.mxu0 0.0
    %2357 = vmatpush1.msra.mxu0 0.0
    %2358 = vmatprep.subr.mxu0 0.0
    %2359 = vmatpush1.msra.mxu0 0.0
    %2360 = vmatprep.subr.mxu0 0.0
    %2361 = vmatpush1.msra.mxu0 0.0
    %2362 = vmatprep.subr.mxu0 0.0
    %2363 = vmatpush1.msra.mxu0 0.0
    %2364 = vmatprep.subr.mxu0 0.0
    %2365 = vmatpush1.msra.mxu0 0.0
    %2366 = vmatprep.subr.mxu0 0.0
    %2367 = vmatpush1.msra.mxu0 0.0
    %2368 = vmatprep.subr.mxu0 0.0
    %2369 = vmatpush1.msra.mxu0 0.0
    %2370 = vmatprep.subr.mxu0 0.0
    %2371 = vmatpush1.msra.mxu0 0.0
    %2372 = vmatprep.subr.mxu0 0.0
    %2373 = vmatpush1.msra.mxu0 0.0
    %2374 = vmatprep.subr.mxu0 0.0
    %2375 = vmatpush1.msra.mxu0 0.0
    %2376 = vmatprep.subr.mxu0 0.0
    %2377 = vmatpush1.msra.mxu0 0.0
    %2378 = vmatprep.subr.mxu0 0.0
    %2379 = vmatpush1.msra.mxu0 0.0
    %2380 = vmatprep.subr.mxu0 0.0
    %2381 = vmatpush1.msra.mxu0 0.0
    %2382 = vmatprep.subr.mxu0 0.0
    %2383 = vmatpush1.msra.mxu0 0.0
    %2384 = vmatprep.subr.mxu0 0.0
    %2385 = vmatpush1.msra.mxu0 0.0
    %2386 = vmatprep.subr.mxu0 0.0
    %2387 = vmatpush1.msra.mxu0 0.0
    %2388 = vmatprep.mubr.f32.mxu0 0.0
    %2389 = vmatmul.mubr.f32.gmra.mrb[0].mxu0 %v2313
    %v2390 = vpop.f32.mrb[0].mxu0
    %v2391 = vadd.f32 %v40, %v2390
    %v2392 = vpop.f32.mrb[0].mxu0
    %2393 = vmatprep.mubr.f32.mxu0 0.0
    %2394 = vmatmul.mubr.f32.gmra.mrb[0].mxu0 %v2316
    %v2395 = vpop.f32.mrb[0].mxu0
    %v2396 = vadd.f32 %v40, %v2395
    %v2397 = vpop.f32.mrb[0].mxu0
    %2398 = vmatprep.mubr.f32.mxu0 0.0
    %2399 = vmatmul.mubr.f32.gmra.mrb[0].mxu0 %v2319
    %v2400 = vpop.f32.mrb[0].mxu0
    %v2401 = vadd.f32 %v40, %v2400
    %v2402 = vpop.f32.mrb[0].mxu0
    %2403 = vmatprep.mubr.f32.mxu0 0.0
    %2404 = vmatmul.mubr.f32.gmra.mrb[0].mxu0 %v2322
    %v2405 = vpop.f32.mrb[0].mxu0
    %v2406 = vadd.f32 %v40, %v2405
    %v2407 = vpop.f32.mrb[0].mxu0
    %2408 = vdwg.mxu0
    %v2409 = vxor.u32 %v2391, 2147483648
    %v2410 = vxor.u32 %v2396, 2147483648
    %v2411 = vxor.u32 %v2401, 2147483648
    %v2412 = vxor.u32 %v2406, 2147483648
    %v2413 = vmul.f32 %v2409, 1.442695
    %v2414 = vpow.pop %v2413
    %v2415 = vmul.f32 %v2410, 1.442695
    %v2416 = vpow.pop %v2415
    %v2417 = vmul.f32 %v2411, 1.442695
    %v2418 = vpow.pop %v2417
    %v2419 = vmul.f32 %v2412, 1.442695
    %v2420 = vpow.pop %v2419
    %v2421 = vadd.f32 %v2414, 1.0
    %v2422 = vadd.f32 %v2416, 1.0
    %v2423 = vadd.f32 %v2418, 1.0
    %v2424 = vadd.f32 %v2420, 1.0
    %v2425 = vrcp.pop %v2421
    %v2426 = vmul.f32 1.0, %v2425
    %v2427 = vrcp.pop %v2422
    %v2428 = vmul.f32 1.0, %v2427
    %v2429 = vrcp.pop %v2423
    %v2430 = vmul.f32 1.0, %v2429
    %v2431 = vrcp.pop %v2424
    %v2432 = vmul.f32 1.0, %v2431
    %2433 = vrot.lane.b32.xlu0 %v2098, 16
    %v2434 = vpop.permute.xlu0 %2433
    %2435 = vrot.lane.b32.xlu0 %v2099, 16
    %v2436 = vpop.permute.xlu0 %2435
    %2437 = vrot.lane.b32.xlu0 %v2100, 16
    %v2438 = vpop.permute.xlu0 %2437
    %2439 = vrot.lane.b32.xlu0 %v2101, 16
    %v2440 = vpop.permute.xlu0 %2439
    %v2445 = vmul.f32 %v2426, %v2434
    %v2446 = vmul.f32 %v2428, %v2436
    %v2447 = vmul.f32 %v2430, %v2438
    %v2448 = vmul.f32 %v2432, %v2440
    %2453 = vrot.lane.b32.xlu0 %v2445, 112
    %v2454 = vpop.permute.xlu0 %2453
    %2455 = vrot.lane.b32.xlu0 %v2446, 112
    %v2456 = vpop.permute.xlu0 %2455
    %2457 = vrot.lane.b32.xlu0 %v2447, 112
    %v2458 = vpop.permute.xlu0 %2457
    %2459 = vrot.lane.b32.xlu0 %v2448, 112
    %v2460 = vpop.permute.xlu0 %2459
    %v2461 = vsel %vm53, %v2454, 0
    %v2463 = vsel %vm53, %v2456, 0
    %v2465 = vsel %vm53, %v2458, 0
    %v2467 = vsel %vm53, %v2460, 0
    %2469 = vmatprep.subr.mxu0 0.0
    %2470 = vmatpush1.msra.mxu0 %v424
    %2471 = vmatprep.subr.mxu0 0.0
    %2472 = vmatpush1.msra.mxu0 %v426
    %2473 = vmatprep.subr.mxu0 0.0
    %2474 = vmatpush1.msra.mxu0 0.0
    %2475 = vmatprep.subr.mxu0 0.0
    %2476 = vmatpush1.msra.mxu0 0.0
    %2477 = vmatprep.subr.mxu0 0.0
    %2478 = vmatpush1.msra.mxu0 0.0
    %2479 = vmatprep.subr.mxu0 0.0
    %2480 = vmatpush1.msra.mxu0 0.0
    %2481 = vmatprep.subr.mxu0 0.0
    %2482 = vmatpush1.msra.mxu0 0.0
    %2483 = vmatprep.subr.mxu0 0.0
    %2484 = vmatpush1.msra.mxu0 0.0
    %2485 = vmatprep.subr.mxu0 0.0
    %2486 = vmatpush1.msra.mxu0 0.0
    %2487 = vmatprep.subr.mxu0 0.0
    %2488 = vmatpush1.msra.mxu0 0.0
    %2489 = vmatprep.subr.mxu0 0.0
    %2490 = vmatpush1.msra.mxu0 0.0
    %2491 = vmatprep.subr.mxu0 0.0
    %2492 = vmatpush1.msra.mxu0 0.0
    %2493 = vmatprep.subr.mxu0 0.0
    %2494 = vmatpush1.msra.mxu0 0.0
    %2495 = vmatprep.subr.mxu0 0.0
    %2496 = vmatpush1.msra.mxu0 0.0
    %2497 = vmatprep.subr.mxu0 0.0
    %2498 = vmatpush1.msra.mxu0 0.0
    %2499 = vmatprep.subr.mxu0 0.0
    %2500 = vmatpush1.msra.mxu0 0.0
    %2501 = vmatprep.subr.mxu0 0.0
    %2502 = vmatpush1.msra.mxu0 0.0
    %2503 = vmatprep.subr.mxu0 0.0
    %2504 = vmatpush1.msra.mxu0 0.0
    %2505 = vmatprep.subr.mxu0 0.0
    %2506 = vmatpush1.msra.mxu0 0.0
    %2507 = vmatprep.subr.mxu0 0.0
    %2508 = vmatpush1.msra.mxu0 0.0
    %2509 = vmatprep.subr.mxu0 0.0
    %2510 = vmatpush1.msra.mxu0 0.0
    %2511 = vmatprep.subr.mxu0 0.0
    %2512 = vmatpush1.msra.mxu0 0.0
    %2513 = vmatprep.subr.mxu0 0.0
    %2514 = vmatpush1.msra.mxu0 0.0
    %2515 = vmatprep.subr.mxu0 0.0
    %2516 = vmatpush1.msra.mxu0 0.0
    %2517 = vmatprep.subr.mxu0 0.0
    %2518 = vmatpush1.msra.mxu0 0.0
    %2519 = vmatprep.subr.mxu0 0.0
    %2520 = vmatpush1.msra.mxu0 0.0
    %2521 = vmatprep.subr.mxu0 0.0
    %2522 = vmatpush1.msra.mxu0 0.0
    %2523 = vmatprep.subr.mxu0 0.0
    %2524 = vmatpush1.msra.mxu0 0.0
    %2525 = vmatprep.subr.mxu0 0.0
    %2526 = vmatpush1.msra.mxu0 0.0
    %2527 = vmatprep.subr.mxu0 0.0
    %2528 = vmatpush1.msra.mxu0 0.0
    %2529 = vmatprep.subr.mxu0 0.0
    %2530 = vmatpush1.msra.mxu0 0.0
    %2531 = vmatprep.subr.mxu0 0.0
    %2532 = vmatpush1.msra.mxu0 0.0
    %2533 = vmatprep.mubr.f32.mxu0 0.0
    %2534 = vmatmul.mubr.f32.gmra.mrb[0].mxu0 %v2461
    %v2535 = vpop.f32.mrb[0].mxu0
    %v2536 = vadd.f32 0.0, %v2535
    %v2537 = vpop.f32.mrb[0].mxu0
    %2538 = vmatprep.mubr.f32.mxu0 0.0
    %2539 = vmatmul.mubr.f32.gmra.mrb[0].mxu0 %v2463
    %v2540 = vpop.f32.mrb[0].mxu0
    %v2541 = vadd.f32 0.0, %v2540
    %v2542 = vpop.f32.mrb[0].mxu0
    %2543 = vmatprep.mubr.f32.mxu0 0.0
    %2544 = vmatmul.mubr.f32.gmra.mrb[0].mxu0 %v2465
    %v2545 = vpop.f32.mrb[0].mxu0
    %v2546 = vadd.f32 0.0, %v2545
    %v2547 = vpop.f32.mrb[0].mxu0
    %2548 = vmatprep.mubr.f32.mxu0 0.0
    %2549 = vmatmul.mubr.f32.gmra.mrb[0].mxu0 %v2467
    %v2550 = vpop.f32.mrb[0].mxu0
    %v2551 = vadd.f32 0.0, %v2550
    %v2552 = vpop.f32.mrb[0].mxu0
    %2553 = vdwg.mxu0
    %2558 = vrot.lane.b32.xlu0 %v2536, 32
    %v2559 = vpop.permute.xlu0 %2558
    %2560 = vrot.lane.b32.xlu0 %v2541, 32
    %v2561 = vpop.permute.xlu0 %2560
    %2562 = vrot.lane.b32.xlu0 %v2546, 32
    %v2563 = vpop.permute.xlu0 %2562
    %2564 = vrot.lane.b32.xlu0 %v2551, 32
    %v2565 = vpop.permute.xlu0 %2564
    %v2570 = vadd.f32 %v2391, %v2559
    %v2571 = vadd.f32 %v2396, %v2561
    %v2572 = vadd.f32 %v2401, %v2563
    %v2573 = vadd.f32 %v2406, %v2565
    %v2574 = vtanh.pop %v2570
    %v2575 = vtanh.pop %v2571
    %v2576 = vtanh.pop %v2572
    %v2577 = vtanh.pop %v2573
    %v2578 = vsub.f32 1.0, %v2426
    %v2579 = vsub.f32 1.0, %v2428
    %v2580 = vsub.f32 1.0, %v2430
    %v2581 = vsub.f32 1.0, %v2432
    %v2582 = vmul.f32 %v2578, %v2098
    %v2583 = vmul.f32 %v2579, %v2099
    %v2584 = vmul.f32 %v2580, %v2100
    %v2585 = vmul.f32 %v2581, %v2101
    %2590 = vrot.lane.b32.xlu0 %v2574, 96
    %v2591 = vpop.permute.xlu0 %2590
    %2592 = vrot.lane.b32.xlu0 %v2575, 96
    %v2593 = vpop.permute.xlu0 %2592
    %2594 = vrot.lane.b32.xlu0 %v2576, 96
    %v2595 = vpop.permute.xlu0 %2594
    %2596 = vrot.lane.b32.xlu0 %v2577, 96
    %v2597 = vpop.permute.xlu0 %2596
    %v2602 = vmul.f32 %v2426, %v2591
    %v2603 = vmul.f32 %v2428, %v2593
    %v2604 = vmul.f32 %v2430, %v2595
    %v2605 = vmul.f32 %v2432, %v2597
    %v2606 = vadd.f32 %v2582, %v2602
    %v2607 = vadd.f32 %v2583, %v2603
    %v2608 = vadd.f32 %v2584, %v2604
    %v2609 = vadd.f32 %v2585, %v2605
    %v2610 = vsel %vm53, %v2606, %v396
    %v2611 = vsel %vm53, %v2607, %v398
    %v2612 = vsel %vm53, %v2608, %v400
    %v2613 = vsel %vm53, %v2609, %v402
    %2614 = vrot.lane.b32.xlu0 %v29, 64
    %v2615 = vpop.permute.xlu0 %2614
    %2616 = vrot.lane.b32.xlu0 %v30, 64
    %v2617 = vpop.permute.xlu0 %2616
    %2618 = vrot.lane.b32.xlu0 %v31, 64
    %v2619 = vpop.permute.xlu0 %2618
    %2620 = vrot.lane.b32.xlu0 %v32, 64
    %v2621 = vpop.permute.xlu0 %2620
    %2627 = vrot.lane.b32.xlu0 %v40, 64
    %v2628 = vpop.permute.xlu0 %2627
    %v2631 = vsel %vm268, %v2610, 0
    %v2634 = vsel %vm268, %v2611, 0
    %v2637 = vsel %vm268, %v2612, 0
    %v2640 = vsel %vm268, %v2613, 0
    %2642 = vmatprep.subr.mxu0 0.0
    %2643 = vmatpush1.msra.mxu0 %v2615
    %2644 = vmatprep.subr.mxu0 0.0
    %2645 = vmatpush1.msra.mxu0 %v2617
    %2646 = vmatprep.subr.mxu0 0.0
    %2647 = vmatpush1.msra.mxu0 %v2619
    %2648 = vmatprep.subr.mxu0 0.0
    %2649 = vmatpush1.msra.mxu0 %v2621
    %2650 = vmatprep.subr.mxu0 0.0
    %2651 = vmatpush1.msra.mxu0 0.0
    %2652 = vmatprep.subr.mxu0 0.0
    %2653 = vmatpush1.msra.mxu0 0.0
    %2654 = vmatprep.subr.mxu0 0.0
    %2655 = vmatpush1.msra.mxu0 0.0
    %2656 = vmatprep.subr.mxu0 0.0
    %2657 = vmatpush1.msra.mxu0 0.0
    %2658 = vmatprep.subr.mxu0 0.0
    %2659 = vmatpush1.msra.mxu0 0.0
    %2660 = vmatprep.subr.mxu0 0.0
    %2661 = vmatpush1.msra.mxu0 0.0
    %2662 = vmatprep.subr.mxu0 0.0
    %2663 = vmatpush1.msra.mxu0 0.0
    %2664 = vmatprep.subr.mxu0 0.0
    %2665 = vmatpush1.msra.mxu0 0.0
    %2666 = vmatprep.subr.mxu0 0.0
    %2667 = vmatpush1.msra.mxu0 0.0
    %2668 = vmatprep.subr.mxu0 0.0
    %2669 = vmatpush1.msra.mxu0 0.0
    %2670 = vmatprep.subr.mxu0 0.0
    %2671 = vmatpush1.msra.mxu0 0.0
    %2672 = vmatprep.subr.mxu0 0.0
    %2673 = vmatpush1.msra.mxu0 0.0
    %2674 = vmatprep.subr.mxu0 0.0
    %2675 = vmatpush1.msra.mxu0 0.0
    %2676 = vmatprep.subr.mxu0 0.0
    %2677 = vmatpush1.msra.mxu0 0.0
    %2678 = vmatprep.subr.mxu0 0.0
    %2679 = vmatpush1.msra.mxu0 0.0
    %2680 = vmatprep.subr.mxu0 0.0
    %2681 = vmatpush1.msra.mxu0 0.0
    %2682 = vmatprep.subr.mxu0 0.0
    %2683 = vmatpush1.msra.mxu0 0.0
    %2684 = vmatprep.subr.mxu0 0.0
    %2685 = vmatpush1.msra.mxu0 0.0
    %2686 = vmatprep.subr.mxu0 0.0
    %2687 = vmatpush1.msra.mxu0 0.0
    %2688 = vmatprep.subr.mxu0 0.0
    %2689 = vmatpush1.msra.mxu0 0.0
    %2690 = vmatprep.subr.mxu0 0.0
    %2691 = vmatpush1.msra.mxu0 0.0
    %2692 = vmatprep.subr.mxu0 0.0
    %2693 = vmatpush1.msra.mxu0 0.0
    %2694 = vmatprep.subr.mxu0 0.0
    %2695 = vmatpush1.msra.mxu0 0.0
    %2696 = vmatprep.subr.mxu0 0.0
    %2697 = vmatpush1.msra.mxu0 0.0
    %2698 = vmatprep.subr.mxu0 0.0
    %2699 = vmatpush1.msra.mxu0 0.0
    %2700 = vmatprep.subr.mxu0 0.0
    %2701 = vmatpush1.msra.mxu0 0.0
    %2702 = vmatprep.subr.mxu0 0.0
    %2703 = vmatpush1.msra.mxu0 0.0
    %2704 = vmatprep.subr.mxu0 0.0
    %2705 = vmatpush1.msra.mxu0 0.0
    %2706 = vmatprep.mubr.f32.mxu0 0.0
    %2707 = vmatmul.mubr.f32.gmra.mrb[0].mxu0 %v2631
    %v2708 = vpop.f32.mrb[0].mxu0
    %v2709 = vadd.f32 %v2628, %v2708
    %v2710 = vpop.f32.mrb[0].mxu0
    %2711 = vmatprep.mubr.f32.mxu0 0.0
    %2712 = vmatmul.mubr.f32.gmra.mrb[0].mxu0 %v2634
    %v2713 = vpop.f32.mrb[0].mxu0
    %v2714 = vadd.f32 %v2628, %v2713
    %v2715 = vpop.f32.mrb[0].mxu0
    %2716 = vmatprep.mubr.f32.mxu0 0.0
    %2717 = vmatmul.mubr.f32.gmra.mrb[0].mxu0 %v2637
    %v2718 = vpop.f32.mrb[0].mxu0
    %v2719 = vadd.f32 %v2628, %v2718
    %v2720 = vpop.f32.mrb[0].mxu0
    %2721 = vmatprep.mubr.f32.mxu0 0.0
    %2722 = vmatmul.mubr.f32.gmra.mrb[0].mxu0 %v2640
    %v2723 = vpop.f32.mrb[0].mxu0
    %v2724 = vadd.f32 %v2628, %v2723
    %v2725 = vpop.f32.mrb[0].mxu0
    %2726 = vdwg.mxu0
    %v2727 = vtanh.pop %v2709
    %v2728 = vtanh.pop %v2714
    %v2729 = vtanh.pop %v2719
    %v2730 = vtanh.pop %v2724
    %2731 = vrot.lane.b32.xlu0 %v40, 48
    %v2732 = vpop.permute.xlu0 %2731
    %v2734 = vmul.f32 %v2727, %v2732
    %v2735 = vmul.f32 %v2729, %v2732
    %2737 = vrot.lane.b32.xlu0 %v36, 32
    %v2738 = vpop.permute.xlu0 %2737
    %s2739 = vtos %v2738
    %v2740 = vstv %s2739
    %2743 = vrot.lane.b32.xlu0 %v2734, 120
    %v2744 = vpop.permute.xlu0 %2743
    %vm2747 = vcmask 1044480
    %v2748 = vrot.slane %v2727, 3
    %v2749 = vrot.slane %v2728, 3
    %v2750 = vsel %vm2747, %v2748, %v2749
    %2751 = vrot.lane.b32.xlu0 %v2750, 112
    %v2752 = vpop.permute.xlu0 %2751
    %2753 = vrot.lane.b32.xlu0 %v2749, 112
    %v2754 = vpop.permute.xlu0 %2753
    %vm2755 = vcmask 64512
    %v2756 = vsel %vm2755, %v2744, 0
    %v2758 = vsel %vm2755, %v2752, 0
    %v2760 = vsel %vm2755, %v2754, 0
    %2762 = vmatprep.subr.mxu0 0.0
    %2763 = vmatpush1.xpose.msra.mxu0 %v2758
    %2764 = vmatprep.subr.mxu0 0.0
    %2765 = vmatpush1.xpose.msra.mxu0 %v2760
    %2766 = vmatprep.subr.mxu0 0.0
    %2767 = vmatpush1.xpose.msra.mxu0 0.0
    %2768 = vmatprep.subr.mxu0 0.0
    %2769 = vmatpush1.xpose.msra.mxu0 0.0
    %2770 = vmatprep.subr.mxu0 0.0
    %2771 = vmatpush1.xpose.msra.mxu0 0.0
    %2772 = vmatprep.subr.mxu0 0.0
    %2773 = vmatpush1.xpose.msra.mxu0 0.0
    %2774 = vmatprep.subr.mxu0 0.0
    %2775 = vmatpush1.xpose.msra.mxu0 0.0
    %2776 = vmatprep.subr.mxu0 0.0
    %2777 = vmatpush1.xpose.msra.mxu0 0.0
    %2778 = vmatprep.subr.mxu0 0.0
    %2779 = vmatpush1.xpose.msra.mxu0 0.0
    %2780 = vmatprep.subr.mxu0 0.0
    %2781 = vmatpush1.xpose.msra.mxu0 0.0
    %2782 = vmatprep.subr.mxu0 0.0
    %2783 = vmatpush1.xpose.msra.mxu0 0.0
    %2784 = vmatprep.subr.mxu0 0.0
    %2785 = vmatpush1.xpose.msra.mxu0 0.0
    %2786 = vmatprep.subr.mxu0 0.0
    %2787 = vmatpush1.xpose.msra.mxu0 0.0
    %2788 = vmatprep.subr.mxu0 0.0
    %2789 = vmatpush1.xpose.msra.mxu0 0.0
    %2790 = vmatprep.subr.mxu0 0.0
    %2791 = vmatpush1.xpose.msra.mxu0 0.0
    %2792 = vmatprep.subr.mxu0 0.0
    %2793 = vmatpush1.xpose.msra.mxu0 0.0
    %2794 = vmatprep.subr.mxu0 0.0
    %2795 = vmatpush1.xpose.msra.mxu0 0.0
    %2796 = vmatprep.subr.mxu0 0.0
    %2797 = vmatpush1.xpose.msra.mxu0 0.0
    %2798 = vmatprep.subr.mxu0 0.0
    %2799 = vmatpush1.xpose.msra.mxu0 0.0
    %2800 = vmatprep.subr.mxu0 0.0
    %2801 = vmatpush1.xpose.msra.mxu0 0.0
    %2802 = vmatprep.subr.mxu0 0.0
    %2803 = vmatpush1.xpose.msra.mxu0 0.0
    %2804 = vmatprep.subr.mxu0 0.0
    %2805 = vmatpush1.xpose.msra.mxu0 0.0
    %2806 = vmatprep.subr.mxu0 0.0
    %2807 = vmatpush1.xpose.msra.mxu0 0.0
    %2808 = vmatprep.subr.mxu0 0.0
    %2809 = vmatpush1.xpose.msra.mxu0 0.0
    %2810 = vmatprep.subr.mxu0 0.0
    %2811 = vmatpush1.xpose.msra.mxu0 0.0
    %2812 = vmatprep.subr.mxu0 0.0
    %2813 = vmatpush1.xpose.msra.mxu0 0.0
    %2814 = vmatprep.subr.mxu0 0.0
    %2815 = vmatpush1.xpose.msra.mxu0 0.0
    %2816 = vmatprep.subr.mxu0 0.0
    %2817 = vmatpush1.xpose.msra.mxu0 0.0
    %2818 = vmatprep.subr.mxu0 0.0
    %2819 = vmatpush1.xpose.msra.mxu0 0.0
    %2820 = vmatprep.subr.mxu0 0.0
    %2821 = vmatpush1.xpose.msra.mxu0 0.0
    %2822 = vmatprep.subr.mxu0 0.0
    %2823 = vmatpush1.xpose.msra.mxu0 0.0
    %2824 = vmatprep.subr.mxu0 0.0
    %2825 = vmatpush1.xpose.msra.mxu0 0.0
    %2826 = vmatprep.mubr.f32.mxu0 0.0
    %2827 = vmatmul.mubr.f32.gmra.mrb[0].mxu0 %v2756
    %v2828 = vpop.f32.mrb[0].mxu0
    %v2829 = vadd.f32 %v2740, %v2828
    %v2830 = vpop.f32.mrb[0].mxu0
    %2831 = vdwg.mxu0
    %2833 = vrot.lane.b32.xlu0 %v2735, 120
    %v2834 = vpop.permute.xlu0 %2833
    %v2837 = vrot.slane %v2729, 3
    %v2838 = vrot.slane %v2730, 3
    %v2839 = vsel %vm2747, %v2837, %v2838
    %2840 = vrot.lane.b32.xlu0 %v2839, 112
    %v2841 = vpop.permute.xlu0 %2840
    %2842 = vrot.lane.b32.xlu0 %v2838, 112
    %v2843 = vpop.permute.xlu0 %2842
    %v2844 = vsel %vm2755, %v2834, 0
    %v2846 = vsel %vm2755, %v2841, 0
    %v2848 = vsel %vm2755, %v2843, 0
    %2850 = vmatprep.subr.mxu0 0.0
    %2851 = vmatpush1.xpose.msra.mxu0 %v2846
    %2852 = vmatprep.subr.mxu0 0.0
    %2853 = vmatpush1.xpose.msra.mxu0 %v2848
    %2854 = vmatprep.subr.mxu0 0.0
    %2855 = vmatpush1.xpose.msra.mxu0 0.0
    %2856 = vmatprep.subr.mxu0 0.0
    %2857 = vmatpush1.xpose.msra.mxu0 0.0
    %2858 = vmatprep.subr.mxu0 0.0
    %2859 = vmatpush1.xpose.msra.mxu0 0.0
    %2860 = vmatprep.subr.mxu0 0.0
    %2861 = vmatpush1.xpose.msra.mxu0 0.0
    %2862 = vmatprep.subr.mxu0 0.0
    %2863 = vmatpush1.xpose.msra.mxu0 0.0
    %2864 = vmatprep.subr.mxu0 0.0
    %2865 = vmatpush1.xpose.msra.mxu0 0.0
    %2866 = vmatprep.subr.mxu0 0.0
    %2867 = vmatpush1.xpose.msra.mxu0 0.0
    %2868 = vmatprep.subr.mxu0 0.0
    %2869 = vmatpush1.xpose.msra.mxu0 0.0
    %2870 = vmatprep.subr.mxu0 0.0
    %2871 = vmatpush1.xpose.msra.mxu0 0.0
    %2872 = vmatprep.subr.mxu0 0.0
    %2873 = vmatpush1.xpose.msra.mxu0 0.0
    %2874 = vmatprep.subr.mxu0 0.0
    %2875 = vmatpush1.xpose.msra.mxu0 0.0
    %2876 = vmatprep.subr.mxu0 0.0
    %2877 = vmatpush1.xpose.msra.mxu0 0.0
    %2878 = vmatprep.subr.mxu0 0.0
    %2879 = vmatpush1.xpose.msra.mxu0 0.0
    %2880 = vmatprep.subr.mxu0 0.0
    %2881 = vmatpush1.xpose.msra.mxu0 0.0
    %2882 = vmatprep.subr.mxu0 0.0
    %2883 = vmatpush1.xpose.msra.mxu0 0.0
    %2884 = vmatprep.subr.mxu0 0.0
    %2885 = vmatpush1.xpose.msra.mxu0 0.0
    %2886 = vmatprep.subr.mxu0 0.0
    %2887 = vmatpush1.xpose.msra.mxu0 0.0
    %2888 = vmatprep.subr.mxu0 0.0
    %2889 = vmatpush1.xpose.msra.mxu0 0.0
    %2890 = vmatprep.subr.mxu0 0.0
    %2891 = vmatpush1.xpose.msra.mxu0 0.0
    %2892 = vmatprep.subr.mxu0 0.0
    %2893 = vmatpush1.xpose.msra.mxu0 0.0
    %2894 = vmatprep.subr.mxu0 0.0
    %2895 = vmatpush1.xpose.msra.mxu0 0.0
    %2896 = vmatprep.subr.mxu0 0.0
    %2897 = vmatpush1.xpose.msra.mxu0 0.0
    %2898 = vmatprep.subr.mxu0 0.0
    %2899 = vmatpush1.xpose.msra.mxu0 0.0
    %2900 = vmatprep.subr.mxu0 0.0
    %2901 = vmatpush1.xpose.msra.mxu0 0.0
    %2902 = vmatprep.subr.mxu0 0.0
    %2903 = vmatpush1.xpose.msra.mxu0 0.0
    %2904 = vmatprep.subr.mxu0 0.0
    %2905 = vmatpush1.xpose.msra.mxu0 0.0
    %2906 = vmatprep.subr.mxu0 0.0
    %2907 = vmatpush1.xpose.msra.mxu0 0.0
    %2908 = vmatprep.subr.mxu0 0.0
    %2909 = vmatpush1.xpose.msra.mxu0 0.0
    %2910 = vmatprep.subr.mxu0 0.0
    %2911 = vmatpush1.xpose.msra.mxu0 0.0
    %2912 = vmatprep.subr.mxu0 0.0
    %2913 = vmatpush1.xpose.msra.mxu0 0.0
    %2914 = vmatprep.mubr.f32.mxu0 0.0
    %2915 = vmatmul.mubr.f32.gmra.mrb[0].mxu0 %v2844
    %v2916 = vpop.f32.mrb[0].mxu0
    %v2917 = vadd.f32 %v2740, %v2916
    %v2918 = vpop.f32.mrb[0].mxu0
    %2919 = vdwg.mxu0
    %v2920 = vxor.u32 %v2829, 2147483648
    %v2921 = vxor.u32 %v2917, 2147483648
    %v2922 = vmul.f32 %v2920, 1.442695
    %v2923 = vpow.pop %v2922
    %v2924 = vmul.f32 %v2921, 1.442695
    %v2925 = vpow.pop %v2924
    %v2926 = vadd.f32 %v2923, 1.0
    %v2927 = vadd.f32 %v2925, 1.0
    %v2928 = vrcp.pop %v2926
    %v2929 = vmul.f32 1.0, %v2928
    %v2930 = vrcp.pop %v2927
    %v2931 = vmul.f32 1.0, %v2930
    %2933 = vrot.lane.b32.xlu0 %v35, 24
    %v2934 = vpop.permute.xlu0 %2933
    %v2936 = vmul.f32 %v2929, %v2934
    %v2937 = vmul.f32 %v2931, %v2934
    %v2938 = vlaneseq
    %v2939 = vshrl.u32 %v2938, 7
    %v2940 = vsub.s32 0, %v2939
    %v2941 = vrot.slane %v2936, %v2940
    %2943 = vbcast.lane.b32.xlu0 %v2941, 256
    %v2944 = vpop.permute.xlu0 %2943
    %s2946 = sor.u32 256, 8
    %2947 = vbcast.lane.b32.xlu0 %v2941, %s2946
    %v2948 = vpop.permute.xlu0 %2947
    %v2949 = vlaneseq
    %v2950 = vshrl.u32 %v2949, 7
    %v2951 = vsub.s32 1, %v2950
    %v2952 = vrot.slane %v2936, %v2951
    %2954 = vbcast.lane.b32.xlu0 %v2952, 256
    %v2955 = vpop.permute.xlu0 %2954
    %s2957 = sor.u32 256, 8
    %2958 = vbcast.lane.b32.xlu0 %v2952, %s2957
    %v2959 = vpop.permute.xlu0 %2958
    %v2960 = vlaneseq
    %v2961 = vshrl.u32 %v2960, 7
    %v2962 = vsub.s32 2, %v2961
    %v2963 = vrot.slane %v2936, %v2962
    %2965 = vbcast.lane.b32.xlu0 %v2963, 256
    %v2966 = vpop.permute.xlu0 %2965
    %s2968 = sor.u32 256, 8
    %2969 = vbcast.lane.b32.xlu0 %v2963, %s2968
    %v2970 = vpop.permute.xlu0 %2969
    %v2971 = vlaneseq
    %v2972 = vshrl.u32 %v2971, 7
    %v2973 = vsub.s32 0, %v2972
    %v2974 = vrot.slane %v2937, %v2973
    %2976 = vbcast.lane.b32.xlu0 %v2974, 256
    %v2977 = vpop.permute.xlu0 %2976
    %s2979 = sor.u32 256, 8
    %2980 = vbcast.lane.b32.xlu0 %v2974, %s2979
    %v2981 = vpop.permute.xlu0 %2980
    %v2982 = vlaneseq
    %v2983 = vshrl.u32 %v2982, 7
    %v2984 = vsub.s32 1, %v2983
    %v2985 = vrot.slane %v2937, %v2984
    %2987 = vbcast.lane.b32.xlu0 %v2985, 256
    %v2988 = vpop.permute.xlu0 %2987
    %s2990 = sor.u32 256, 8
    %2991 = vbcast.lane.b32.xlu0 %v2985, %s2990
    %v2992 = vpop.permute.xlu0 %2991
    %v2993 = vlaneseq
    %v2994 = vshrl.u32 %v2993, 7
    %v2995 = vsub.s32 2, %v2994
    %v2996 = vrot.slane %v2937, %v2995
    %2998 = vbcast.lane.b32.xlu0 %v2996, 256
    %v2999 = vpop.permute.xlu0 %2998
    %s3001 = sor.u32 256, 8
    %3002 = vbcast.lane.b32.xlu0 %v2996, %s3001
    %v3003 = vpop.permute.xlu0 %3002
    %vm3016 = vcmask 1042432
    %v3017 = vrot.slane %v2944, 5
    %v3018 = vrot.slane %v2948, 5
    %v3019 = vsel %vm3016, %v3017, %v3018
    %v3020 = vrot.slane %v2955, 5
    %v3021 = vrot.slane %v2959, 5
    %v3022 = vsel %vm3016, %v3020, %v3021
    %v3023 = vrot.slane %v2966, 5
    %v3024 = vrot.slane %v2970, 5
    %v3025 = vsel %vm3016, %v3023, %v3024
    %v3026 = vrot.slane %v2977, 5
    %v3027 = vrot.slane %v2981, 5
    %v3028 = vsel %vm3016, %v3026, %v3027
    %v3029 = vrot.slane %v2988, 5
    %v3030 = vrot.slane %v2992, 5
    %v3031 = vsel %vm3016, %v3029, %v3030
    %v3032 = vrot.slane %v2999, 5
    %v3033 = vrot.slane %v3003, 5
    %v3034 = vsel %vm3016, %v3032, %v3033
    %v3047 = vmul.f32 %v2727, %v3017
    %v3048 = vmul.f32 %v2728, %v3019
    %v3049 = vmul.f32 %v2727, %v3020
    %v3050 = vmul.f32 %v2728, %v3022
    %v3051 = vmul.f32 %v2727, %v3023
    %v3052 = vmul.f32 %v2728, %v3025
    %v3053 = vmul.f32 %v2729, %v3026
    %v3054 = vmul.f32 %v2730, %v3028
    %v3055 = vmul.f32 %v2729, %v3029
    %v3056 = vmul.f32 %v2730, %v3031
    %v3057 = vmul.f32 %v2729, %v3032
    %v3058 = vmul.f32 %v2730, %v3034
    %v3065 = vrot.slane %v3047, 3
    %v3066 = vrot.slane %v3049, 2
    %vm3067 = vcmask 1041409
    %v3068 = vsel %vm3067, %v3066, %v3065
    %v3069 = vrot.slane %v3051, 1
    %vm3070 = vcmask 1042434
    %v3071 = vsel %vm3070, %v3069, %v3068
    %v3072 = vrot.slane %v3053, 3
    %v3073 = vrot.slane %v3055, 2
    %v3074 = vsel %vm3067, %v3073, %v3072
    %v3075 = vrot.slane %v3057, 1
    %v3076 = vsel %vm3070, %v3075, %v3074
    %3077 = vrot.lane.b32.xlu0 %v3071, 8
    %v3078 = vpop.permute.xlu0 %3077
    %3079 = vrot.lane.b32.xlu0 %v3076, 8
    %v3080 = vpop.permute.xlu0 %3079
    %v3083 = vrot.slane %v3047, 4
    %v3084 = vrot.slane %v3049, 3
    %v3085 = vsel %vm3067, %v3084, %v3083
    %v3086 = vrot.slane %v3051, 2
    %v3087 = vsel %vm3070, %v3086, %v3085
    %v3088 = vrot.slane %v3053, 4
    %v3089 = vrot.slane %v3055, 3
    %v3090 = vsel %vm3067, %v3089, %v3088
    %v3091 = vrot.slane %v3057, 2
    %v3092 = vsel %vm3070, %v3091, %v3090
    %3093 = vrot.lane.b32.xlu0 %v3087, 16
    %v3094 = vpop.permute.xlu0 %3093
    %3095 = vrot.lane.b32.xlu0 %v3092, 16
    %v3096 = vpop.permute.xlu0 %3095
    %v3099 = vrot.slane %v3047, 5
    %v3100 = vrot.slane %v3049, 4
    %v3101 = vsel %vm3067, %v3100, %v3099
    %v3102 = vrot.slane %v3051, 3
    %v3103 = vsel %vm3070, %v3102, %v3101
    %v3104 = vrot.slane %v3053, 5
    %v3105 = vrot.slane %v3055, 4
    %v3106 = vsel %vm3067, %v3105, %v3104
    %v3107 = vrot.slane %v3057, 3
    %v3108 = vsel %vm3070, %v3107, %v3106
    %3109 = vrot.lane.b32.xlu0 %v3103, 24
    %v3110 = vpop.permute.xlu0 %3109
    %3111 = vrot.lane.b32.xlu0 %v3108, 24
    %v3112 = vpop.permute.xlu0 %3111
    %v3115 = vrot.slane %v3047, 6
    %v3116 = vrot.slane %v3049, 5
    %v3117 = vsel %vm3067, %v3116, %v3115
    %v3118 = vrot.slane %v3051, 4
    %v3119 = vsel %vm3070, %v3118, %v3117
    %v3120 = vrot.slane %v3053, 6
    %v3121 = vrot.slane %v3055, 5
    %v3122 = vsel %vm3067, %v3121, %v3120
    %v3123 = vrot.slane %v3057, 4
    %v3124 = vsel %vm3070, %v3123, %v3122
    %3125 = vrot.lane.b32.xlu0 %v3119, 32
    %v3126 = vpop.permute.xlu0 %3125
    %3127 = vrot.lane.b32.xlu0 %v3124, 32
    %v3128 = vpop.permute.xlu0 %3127
    %v3131 = vrot.slane %v3047, 7
    %v3132 = vrot.slane %v3049, 6
    %v3133 = vsel %vm3067, %v3132, %v3131
    %v3134 = vrot.slane %v3051, 5
    %v3135 = vsel %vm3070, %v3134, %v3133
    %v3136 = vrot.slane %v3053, 7
    %v3137 = vrot.slane %v3055, 6
    %v3138 = vsel %vm3067, %v3137, %v3136
    %v3139 = vrot.slane %v3057, 5
    %v3140 = vsel %vm3070, %v3139, %v3138
    %3141 = vrot.lane.b32.xlu0 %v3135, 40
    %v3142 = vpop.permute.xlu0 %3141
    %3143 = vrot.lane.b32.xlu0 %v3140, 40
    %v3144 = vpop.permute.xlu0 %3143
    %v3153 = vrot.slane %v3050, 7
    %v3154 = vsel %vm3067, %v3153, %v3048
    %v3155 = vrot.slane %v3052, 6
    %v3156 = vsel %vm3070, %v3155, %v3154
    %v3157 = vrot.slane %v3056, 7
    %v3158 = vsel %vm3067, %v3157, %v3054
    %v3159 = vrot.slane %v3058, 6
    %v3160 = vsel %vm3070, %v3159, %v3158
    %3161 = vrot.lane.b32.xlu0 %v3156, 48
    %v3162 = vpop.permute.xlu0 %3161
    %3163 = vrot.lane.b32.xlu0 %v3160, 48
    %v3164 = vpop.permute.xlu0 %3163
    %v3167 = vrot.slane %v3048, 1
    %v3168 = vsel %vm3067, %v3050, %v3167
    %v3169 = vrot.slane %v3052, 7
    %v3170 = vsel %vm3070, %v3169, %v3168
    %v3171 = vrot.slane %v3054, 1
    %v3172 = vsel %vm3067, %v3056, %v3171
    %v3173 = vrot.slane %v3058, 7
    %v3174 = vsel %vm3070, %v3173, %v3172
    %3175 = vrot.lane.b32.xlu0 %v3170, 56
    %v3176 = vpop.permute.xlu0 %3175
    %3177 = vrot.lane.b32.xlu0 %v3174, 56
    %v3178 = vpop.permute.xlu0 %3177
    %v3181 = vrot.slane %v3048, 2
    %v3182 = vrot.slane %v3050, 1
    %v3183 = vsel %vm3067, %v3182, %v3181
    %v3184 = vsel %vm3070, %v3052, %v3183
    %v3185 = vrot.slane %v3054, 2
    %v3186 = vrot.slane %v3056, 1
    %v3187 = vsel %vm3067, %v3186, %v3185
    %v3188 = vsel %vm3070, %v3058, %v3187
    %3189 = vrot.lane.b32.xlu0 %v3184, 64
    %v3190 = vpop.permute.xlu0 %3189
    %3191 = vrot.lane.b32.xlu0 %v3188, 64
    %v3192 = vpop.permute.xlu0 %3191
    %v3195 = vrot.slane %v3048, 3
    %v3196 = vrot.slane %v3050, 2
    %v3197 = vsel %vm3067, %v3196, %v3195
    %v3198 = vrot.slane %v3052, 1
    %v3199 = vsel %vm3070, %v3198, %v3197
    %v3200 = vrot.slane %v3054, 3
    %v3201 = vrot.slane %v3056, 2
    %v3202 = vsel %vm3067, %v3201, %v3200
    %v3203 = vrot.slane %v3058, 1
    %v3204 = vsel %vm3070, %v3203, %v3202
    %3205 = vrot.lane.b32.xlu0 %v3199, 72
    %v3206 = vpop.permute.xlu0 %3205
    %3207 = vrot.lane.b32.xlu0 %v3204, 72
    %v3208 = vpop.permute.xlu0 %3207
    %v3211 = vrot.slane %v3048, 4
    %v3212 = vrot.slane %v3050, 3
    %v3213 = vsel %vm3067, %v3212, %v3211
    %v3214 = vrot.slane %v3052, 2
    %v3215 = vsel %vm3070, %v3214, %v3213
    %v3216 = vrot.slane %v3054, 4
    %v3217 = vrot.slane %v3056, 3
    %v3218 = vsel %vm3067, %v3217, %v3216
    %v3219 = vrot.slane %v3058, 2
    %v3220 = vsel %vm3070, %v3219, %v3218
    %3221 = vrot.lane.b32.xlu0 %v3215, 80
    %v3222 = vpop.permute.xlu0 %3221
    %3223 = vrot.lane.b32.xlu0 %v3220, 80
    %v3224 = vpop.permute.xlu0 %3223
    %v3227 = vrot.slane %v3048, 5
    %v3228 = vrot.slane %v3050, 4
    %v3229 = vsel %vm3067, %v3228, %v3227
    %v3230 = vrot.slane %v3052, 3
    %v3231 = vsel %vm3070, %v3230, %v3229
    %v3232 = vrot.slane %v3054, 5
    %v3233 = vrot.slane %v3056, 4
    %v3234 = vsel %vm3067, %v3233, %v3232
    %v3235 = vrot.slane %v3058, 3
    %v3236 = vsel %vm3070, %v3235, %v3234
    %3237 = vrot.lane.b32.xlu0 %v3231, 88
    %v3238 = vpop.permute.xlu0 %3237
    %3239 = vrot.lane.b32.xlu0 %v3236, 88
    %v3240 = vpop.permute.xlu0 %3239
    %v3243 = vrot.slane %v3048, 6
    %v3244 = vrot.slane %v3050, 5
    %v3245 = vsel %vm3067, %v3244, %v3243
    %v3246 = vrot.slane %v3052, 4
    %v3247 = vsel %vm3070, %v3246, %v3245
    %v3248 = vrot.slane %v3054, 6
    %v3249 = vrot.slane %v3056, 5
    %v3250 = vsel %vm3067, %v3249, %v3248
    %v3251 = vrot.slane %v3058, 4
    %v3252 = vsel %vm3070, %v3251, %v3250
    %3253 = vrot.lane.b32.xlu0 %v3247, 96
    %v3254 = vpop.permute.xlu0 %3253
    %3255 = vrot.lane.b32.xlu0 %v3252, 96
    %v3256 = vpop.permute.xlu0 %3255
    %v3259 = vrot.slane %v3048, 7
    %v3260 = vrot.slane %v3050, 6
    %v3261 = vsel %vm3067, %v3260, %v3259
    %v3262 = vrot.slane %v3052, 5
    %v3263 = vsel %vm3070, %v3262, %v3261
    %v3264 = vrot.slane %v3054, 7
    %v3265 = vrot.slane %v3056, 6
    %v3266 = vsel %vm3067, %v3265, %v3264
    %v3267 = vrot.slane %v3058, 5
    %v3268 = vsel %vm3070, %v3267, %v3266
    %3269 = vrot.lane.b32.xlu0 %v3263, 104
    %v3270 = vpop.permute.xlu0 %3269
    %3271 = vrot.lane.b32.xlu0 %v3268, 104
    %v3272 = vpop.permute.xlu0 %3271
    %v3275 = vsel %vm2755, %v2727, %v3078
    %v3276 = vsel %vm2755, %v2729, %v3080
    %v3277 = vsel %vm53, %v3275, %v3094
    %v3278 = vsel %vm53, %v3276, %v3096
    %vm3279 = vcmask 195584
    %v3280 = vsel %vm3279, %v3277, %v3110
    %v3281 = vsel %vm3279, %v3278, %v3112
    %v3282 = vsel %vm268, %v3280, %v3126
    %v3283 = vsel %vm268, %v3281, %v3128
    %vm3284 = vcmask 326656
    %v3285 = vsel %vm3284, %v3282, %v3142
    %v3286 = vsel %vm3284, %v3283, %v3144
    %v3287 = vsel %vm273, %v3285, %v3162
    %v3288 = vsel %vm273, %v3286, %v3164
    %vm3289 = vcmask 457728
    %v3290 = vsel %vm3289, %v3287, %v3176
    %v3291 = vsel %vm3289, %v3288, %v3178
    %vm3292 = vcmask 523264
    %v3293 = vsel %vm3292, %v3290, %v3190
    %v3294 = vsel %vm3292, %v3291, %v3192
    %vm3295 = vcmask 588800
    %v3296 = vsel %vm3295, %v3293, %v3206
    %v3297 = vsel %vm3295, %v3294, %v3208
    %vm3298 = vcmask 654336
    %v3299 = vsel %vm3298, %v3296, %v3222
    %v3300 = vsel %vm3298, %v3297, %v3224
    %vm3301 = vcmask 719872
    %v3302 = vsel %vm3301, %v3299, %v3238
    %v3303 = vsel %vm3301, %v3300, %v3240
    %vm3304 = vcmask 785408
    %v3305 = vsel %vm3304, %v3302, %v3254
    %v3306 = vsel %vm3304, %v3303, %v3256
    %vm3307 = vcmask 850944
    %v3308 = vsel %vm3307, %v3305, %v3270
    %v3309 = vsel %vm3307, %v3306, %v3272
    %vm3310 = vcmask 911360
    %3311 = vst.msk [vmem:[%s2] sm:$0x7] %vm3310, %v3308
    %3312 = vst.msk [vmem:[%s2 + $0x4] sm:$0x7] %vm3310, %v3309
    // Predicated region
    $region14: #{tpu_custom_call.1} parent=1 // pred_check
      _
    $region15: #{tpu_custom_call.1} parent=1 // pred_check_branch
      %3314 = sbr.rel (0) target = $region17
    $region16: #{tpu_custom_call.1} parent=1 // pred_region
      _
    $region17: #{tpu_custom_call.1} parent=1 // pred_fallthru
      _
    // Predicated region
    $region18: #{tpu_custom_call.1} parent=1 // pred_check
      _
    $region19: #{tpu_custom_call.1} parent=1 // pred_check_branch
      %3316 = sbr.rel (0) target = $region21
    $region20: #{tpu_custom_call.1} parent=1 // pred_region
      _
    $region21: #{tpu_custom_call.1} parent=1 // pred_fallthru
      _
    %3317 = vsyncpa [#allocation3], 1

</llo_original>
